<compile_context>
chip_gen: v5e
topology: v5e:2x2
jax: 0.10.0
libtpu: 0.0.40
codegen_flags: <defaults>
</compile_context>

<pallas_src>
import math
from functools import partial

import jax
import jax.numpy as jnp
from jax.experimental import pallas as pl
from jax.experimental.pallas import tpu as pltpu


# ----------------------------------------------------------------------------
# In-kernel helpers
# ----------------------------------------------------------------------------
def _matmul_nt(x, w):
    """x @ w.T without materializing a transpose.

    x: (S, In) activations (cast to the weight dtype only if needed).
    w: (Out, In) bf16 weight in PyTorch layout.
    dot_general contracts the last dim of both operands; f32 accumulation.
    """
    if x.dtype != w.dtype:
        x = x.astype(w.dtype)
    return jax.lax.dot_general(
        x, w,
        dimension_numbers=(((1,), (1,)), ((), ())),
        preferred_element_type=jnp.float32)


def _layernorm_2d(z, w, b, eps=1e-5):
    """nn.LayerNorm([max_len, E]): joint mean/var over the whole (S, E) slab.

    One-pass statistics: sum and sum-of-squares, then derive mean / variance
    (biased, like PyTorch), instead of two dependent full-slab reductions.
    """
    n = float(z.size)
    s1 = jnp.sum(z)
    s2 = jnp.sum(z * z)
    mu = s1 / n
    var = s2 / n - mu * mu
    return (z - mu) * jax.lax.rsqrt(var + eps) * w + b


def _vmem_limit(nbytes):
    """Clamp an explicit scoped-VMEM request to a safe range."""
    return int(min(max(nbytes, 8 * 1024 * 1024), 48 * 1024 * 1024))


# ----------------------------------------------------------------------------
# Kernels
# ----------------------------------------------------------------------------
def encoder_kernel(x_ref, inw_ref, inb_ref, ow_ref, ob_ref, ln1w_ref, ln1b_ref,
                   w1_ref, b1_ref, w2_ref, b2_ref, ln2w_ref, ln2b_ref, o_ref,
                   *, num_heads, num_blocks):
    """All transformer encoder blocks for a single batch element.

    x_ref:    (1, S, E) f32
    inw_ref:  (NB, 3E, E) bf16   in_proj_weight (q,k,v stacked)
    inb_ref:  (NB, 1, 3E) f32
    ow_ref:   (NB, E, E)  bf16   out_proj weight        ob_ref: (NB, 1, E) f32
    ln*_ref:  (NB, S, E)  f32    LayerNorm([max_len, E]) affine (joint S,E norm)
    w1_ref:   (NB, 4E, E) bf16   FFN linear 1           b1_ref: (NB, 1, 4E) f32
    w2_ref:   (NB, E, 4E) bf16   FFN linear 2           b2_ref: (NB, 1, E)  f32
    o_ref:    (1, S, E) f32
    """
    x = x_ref[0]                       # (S, E) f32
    S, E = x.shape
    H = num_heads
    Dh = E // H
    scale = 1.0 / math.sqrt(Dh)

    for l in range(num_blocks):        # static unroll over layers
        # ---- QKV projection: one MXU matmul (bf16 in, f32 acc), no weight .T
        x_bf = x.astype(jnp.bfloat16)                            # cast once
        qkv = _matmul_nt(x_bf, inw_ref[l]) + inb_ref[l]          # (S, 3E) f32

        # Stack heads along a new LEADING axis -> (H, S, Dh).  Leading-axis
        # stacking keeps scores/context as single batched MXU matmuls with one
        # batched softmax reduction (no per-head matmul loop).
        def split_heads(t):            # (S, E) -> (H, S, Dh) bf16
            return jnp.stack([t[:, h * Dh:(h + 1) * Dh] for h in range(H)],
                             axis=0).astype(jnp.bfloat16)

        qh = split_heads(qkv[:, :E])
        kh = split_heads(qkv[:, E:2 * E])
        vh = split_heads(qkv[:, 2 * E:])

        s = jnp.einsum('hqd,hkd->hqk', qh, kh,
                       preferred_element_type=jnp.float32) * scale  # (H, S, S)
        s = s - jnp.max(s, axis=-1, keepdims=True)
        p = jnp.exp(s)
        p = p * pl.reciprocal(jnp.sum(p, axis=-1, keepdims=True), approx=True)

        ctx = jnp.einsum('hqk,hkd->hqd', p.astype(jnp.bfloat16), vh,
                         preferred_element_type=jnp.float32)         # (H, S, Dh)
        attn = jnp.concatenate([ctx[h] for h in range(H)], axis=-1)  # (S, E)
        attn = _matmul_nt(attn, ow_ref[l]) + ob_ref[l]

        x1 = x + attn

        # ---- LayerNorm over BOTH (S, E) dims jointly (nn.LayerNorm([S, E]))
        xn1 = _layernorm_2d(x1, ln1w_ref[l], ln1b_ref[l])

        # ---- FFN: Linear(E,4E) -> ReLU -> Dropout(eval identity) -> Linear(4E,E)
        h1 = _matmul_nt(xn1, w1_ref[l]) + b1_ref[l]
        h1 = jnp.maximum(h1, 0.0)
        # TODO(synk): Dropout(p=0.2) is stochastic in train mode; eval-mode identity here.
        ffn = _matmul_nt(h1, w2_ref[l]) + b2_ref[l]

        x = _layernorm_2d(xn1 + ffn, ln2w_ref[l], ln2b_ref[l])

    o_ref[0] = x


def vocab_logits_kernel(x_ref, w_ref, b_ref, logits_ref, m_ref, l_ref):
    """Vocab-tiled projection + online (flash-style) max / sum-exp.

    Grid = (B, NV); vocab axis is 'arbitrary'.  The running row max `m` and
    row sum-exp `l` live in constant-index output blocks (accumulators) so the
    second kernel can normalize per vocab tile without the whole row resident.
    Logits are written to HBM in bf16 (half the round-trip traffic); `l` is
    accumulated from the SAME bf16-rounded values so rows normalize to 1.
    """
    j = pl.program_id(1)

    @pl.when(j == 0)
    def _():
        m_ref[...] = jnp.full(m_ref.shape, -jnp.inf, dtype=m_ref.dtype)
        l_ref[...] = jnp.zeros(l_ref.shape, dtype=l_ref.dtype)

    z = jax.lax.dot_general(
        x_ref[0], w_ref[...],
        dimension_numbers=(((1,), (1,)), ((), ())),
        preferred_element_type=jnp.float32) + b_ref[...]          # (S, TV) f32

    zb = z.astype(jnp.bfloat16)
    logits_ref[0] = zb

    zf = zb.astype(jnp.float32)
    m_prev = m_ref[0]                                             # (S, 1)
    m_new = jnp.maximum(m_prev, jnp.max(zf, axis=-1, keepdims=True))
    l_ref[0] = (l_ref[0] * jnp.exp(m_prev - m_new)
                + jnp.sum(jnp.exp(zf - m_new), axis=-1, keepdims=True))
    m_ref[0] = m_new


def vocab_softmax_kernel(logits_ref, m_ref, l_ref, o_ref):
    """Normalize one vocab tile with precomputed row max / sum-exp.

    Exact division here (no approx reciprocal) for parity with torch Softmax.
    """
    z = logits_ref[0].astype(jnp.float32)                         # (S, TV)
    o_ref[0] = jnp.exp(z - m_ref[0]) / l_ref[0]


# ----------------------------------------------------------------------------
# Wrappers
# ----------------------------------------------------------------------------
_BLOCK_PARAM_ORDER = ("inw", "inb", "ow", "ob", "ln1w", "ln1b",
                      "w1", "b1", "w2", "b2", "ln2w", "ln2b")


def encoder_forward(x, blocks, num_heads):
    """One pallas_call running all encoder blocks (weights stacked on layer axis)."""
    B, S, E = x.shape
    params = [blocks[name] for name in _BLOCK_PARAM_ORDER]
    NB = params[0].shape[0]
    H = num_heads

    def const_spec(shape):
        nd = len(shape)
        # Constant-index weight blocks.  NOTE: on v7x, pipeline_mode=
        # pl.Buffered(1) here would avoid double-buffering the (never-changing)
        # weights; left off for lowering portability across jax versions.
        return pl.BlockSpec(shape, lambda b, _nd=nd: (0,) * _nd)

    in_specs = [pl.BlockSpec((1, S, E), lambda b: (b, 0, 0))]
    in_specs += [const_spec(p.shape) for p in params]

    # Explicit scoped-VMEM budget: double-buffered weights + activations +
    # attention / FFN intermediates (generous headroom, clamped).
    param_bytes = sum(int(p.size) * p.dtype.itemsize for p in params)
    act_bytes = S * E * 4
    inter_bytes = 4 * (10 * S * E + 3 * H * S * S + 2 * S * 4 * E)
    vmem = _vmem_limit(2 * param_bytes + 4 * act_bytes + 2 * inter_bytes)

    return pl.pallas_call(
        partial(encoder_kernel, num_heads=num_heads, num_blocks=NB),
        out_shape=jax.ShapeDtypeStruct((B, S, E), jnp.float32),
        grid=(B,),
        in_specs=in_specs,
        out_specs=pl.BlockSpec((1, S, E), lambda b: (b, 0, 0)),
        compiler_params=pltpu.CompilerParams(
            dimension_semantics=("parallel",),
            vmem_limit_bytes=vmem),
    )(x, *params)


def output_softmax_forward(x, w, b):
    """Linear(E, V) + Softmax(dim=2), vocab-tiled with fused online max/sum-exp."""
    B, S, E = x.shape
    V = w.shape[0]

    # Lane-dense vocab tile; pad V up to a tile multiple (no whole-weight fallback).
    TV = 512 if V >= 512 else ((V + 127) // 128) * 128
    Vp = ((V + TV - 1) // TV) * TV
    NV = Vp // TV
    if Vp != V:
        w = jnp.pad(w, ((0, Vp - V), (0, 0)))                       # zero weights
        b = jnp.pad(b, ((0, 0), (0, Vp - V)), constant_values=-1e30)  # kill pad logits

    x_bf = x.astype(jnp.bfloat16)        # cast ONCE, not per vocab tile

    blk_bytes = (2 * (S * E * 2) + 2 * (TV * E * 2) + 2 * (TV * 4)
                 + 2 * (S * TV * 2) + 8 * (S * 4)
                 + 6 * S * TV * 4)       # intermediates headroom
    vmem = _vmem_limit(blk_bytes)

    logits, m, l = pl.pallas_call(
        vocab_logits_kernel,
        out_shape=(jax.ShapeDtypeStruct((B, S, Vp), jnp.bfloat16),
                   jax.ShapeDtypeStruct((B, S, 1), jnp.float32),
                   jax.ShapeDtypeStruct((B, S, 1), jnp.float32)),
        grid=(B, NV),
        in_specs=[
            pl.BlockSpec((1, S, E), lambda i, j: (i, 0, 0)),
            pl.BlockSpec((TV, E), lambda i, j: (j, 0)),
            pl.BlockSpec((1, TV), lambda i, j: (0, j)),
        ],
        out_specs=(
            pl.BlockSpec((1, S, TV), lambda i, j: (i, 0, j)),
            pl.BlockSpec((1, S, 1), lambda i, j: (i, 0, 0)),
            pl.BlockSpec((1, S, 1), lambda i, j: (i, 0, 0)),
        ),
        compiler_params=pltpu.CompilerParams(
            dimension_semantics=("parallel", "arbitrary"),
            vmem_limit_bytes=vmem),
    )(x_bf, w, b)

    probs = pl.pallas_call(
        vocab_softmax_kernel,
        out_shape=jax.ShapeDtypeStruct((B, S, Vp), jnp.float32),
        grid=(B, NV),
        in_specs=[
            pl.BlockSpec((1, S, TV), lambda i, j: (i, 0, j)),
            pl.BlockSpec((1, S, 1), lambda i, j: (i, 0, 0)),
            pl.BlockSpec((1, S, 1), lambda i, j: (i, 0, 0)),
        ],
        out_specs=pl.BlockSpec((1, S, TV), lambda i, j: (i, 0, j)),
        compiler_params=pltpu.CompilerParams(
            dimension_semantics=("parallel", "parallel"),
            vmem_limit_bytes=vmem),
    )(logits, m, l)

    return probs[..., :V] if Vp != V else probs


# ----------------------------------------------------------------------------
# Parameter init (deterministic, synthetic).  Matmul weights stored bf16
# (halves weight DMA/VMEM, bf16-native MXU); biases / LayerNorm affines /
# embeddings stay f32 so elementwise math remains f32.  Per-block parameters
# are stacked along a leading layer axis for the single fused encoder kernel.
# ----------------------------------------------------------------------------
def init_params(key, num_blocks, sentence_length, embedding_dim, vocab_size):
    E, S, V, NB = embedding_dim, sentence_length, vocab_size, num_blocks
    keys = jax.random.split(key, 12)
    params = {}
    params["embedding"] = 0.02 * jax.random.normal(keys[0], (V, E), jnp.float32)
    params["pos_embedding"] = 0.02 * jax.random.normal(keys[1], (S, E), jnp.float32)
    params["out_w"] = (0.02 * jax.random.normal(keys[2], (V, E), jnp.float32)
                       ).astype(jnp.bfloat16)
    params["out_b"] = 0.01 * jax.random.normal(keys[3], (1, V), jnp.float32)

    params["blocks"] = {
        "inw": (0.02 * jax.random.normal(keys[4], (NB, 3 * E, E))
                ).astype(jnp.bfloat16),                       # in_proj_weight
        "inb": 0.01 * jax.random.normal(keys[5], (NB, 1, 3 * E), jnp.float32),
        "ow": (0.02 * jax.random.normal(keys[6], (NB, E, E))
               ).astype(jnp.bfloat16),                        # out_proj weight
        "ob": 0.01 * jax.random.normal(keys[7], (NB, 1, E), jnp.float32),
        "ln1w": jnp.ones((NB, S, E), jnp.float32),
        "ln1b": jnp.zeros((NB, S, E), jnp.float32),
        "w1": (0.02 * jax.random.normal(keys[8], (NB, 4 * E, E))
               ).astype(jnp.bfloat16),                        # FFN linear 1
        "b1": 0.01 * jax.random.normal(keys[9], (NB, 1, 4 * E), jnp.float32),
        "w2": (0.02 * jax.random.normal(keys[10], (NB, E, 4 * E))
               ).astype(jnp.bfloat16),                        # FFN linear 2
        "b2": 0.01 * jax.random.normal(keys[11], (NB, 1, E), jnp.float32),
        "ln2w": jnp.ones((NB, S, E), jnp.float32),
        "ln2b": jnp.zeros((NB, S, E), jnp.float32),
    }
    return params


def bert_forward(token_ids, params, num_heads):
    # token + positional embedding (gather glue in plain JAX)
    x = jnp.take(params["embedding"], token_ids, axis=0)                 # (B, S, E)
    x = x + params["pos_embedding"][None, : token_ids.shape[1], :]
    x = encoder_forward(x, params["blocks"], num_heads)                  # all blocks fused
    return output_softmax_forward(x, params["out_w"], params["out_b"])   # (B, S, V)


# ----------------------------------------------------------------------------
if __name__ == "__main__":
    # Small shapes consistent with the module's forward
    B, S, E, H, V, NB = 2, 8, 32, 4, 128, 2

    key = jax.random.PRNGKey(0)
    k_tok, k_param = jax.random.split(key)
    token_ids = jax.random.randint(k_tok, (B, S), 0, V, dtype=jnp.int32)
    params = init_params(k_param, NB, S, E, V)

    probs = jax.jit(bert_forward, static_argnums=2)(token_ids, params, H)
    probs = jax.block_until_ready(probs)

    assert probs.shape == (B, S, V)
    assert bool(jnp.all(jnp.isfinite(probs)))
    # Exact-division softmax over self-consistent bf16 logits -> rows sum to 1.
    assert bool(jnp.allclose(jnp.sum(probs, axis=2), 1.0, atol=1e-3))

    print("KERNEL_OK")
</pallas_src>

<mosaic_0001>
module attributes {stable_mosaic.version = 11 : i64} {
  func.func @encoder_kernel(%arg0: i32, %arg1: memref<1x8x32xf32, #tpu.memory_space<vmem>>, %arg2: memref<2x96x32xbf16, #tpu.memory_space<vmem>>, %arg3: memref<2x1x96xf32, #tpu.memory_space<vmem>>, %arg4: memref<2x32x32xbf16, #tpu.memory_space<vmem>>, %arg5: memref<2x1x32xf32, #tpu.memory_space<vmem>>, %arg6: memref<2x8x32xf32, #tpu.memory_space<vmem>>, %arg7: memref<2x8x32xf32, #tpu.memory_space<vmem>>, %arg8: memref<2x128x32xbf16, #tpu.memory_space<vmem>>, %arg9: memref<2x1x128xf32, #tpu.memory_space<vmem>>, %arg10: memref<2x32x128xbf16, #tpu.memory_space<vmem>>, %arg11: memref<2x1x32xf32, #tpu.memory_space<vmem>>, %arg12: memref<2x8x32xf32, #tpu.memory_space<vmem>>, %arg13: memref<2x8x32xf32, #tpu.memory_space<vmem>>, %arg14: memref<1x8x32xf32, #tpu.memory_space<vmem>>) attributes {dimension_semantics = [#tpu.dimension_semantics<parallel>], iteration_bounds = array<i64: 2>, scalar_prefetch = 0 : i64, scratch_operands = 0 : i64, tpu.core_type = #tpu.core_type<tc>, window_params = [{transform_indices = @transform_0, window_bounds = array<i64: 1, 8, 32>}, {pipeline_mode = #tpu.pipeline_mode<synchronous>, transform_indices = @transform_1, window_bounds = array<i64: 2, 96, 32>}, {pipeline_mode = #tpu.pipeline_mode<synchronous>, transform_indices = @transform_2, window_bounds = array<i64: 2, 1, 96>}, {pipeline_mode = #tpu.pipeline_mode<synchronous>, transform_indices = @transform_3, window_bounds = array<i64: 2, 32, 32>}, {pipeline_mode = #tpu.pipeline_mode<synchronous>, transform_indices = @transform_4, window_bounds = array<i64: 2, 1, 32>}, {pipeline_mode = #tpu.pipeline_mode<synchronous>, transform_indices = @transform_5, window_bounds = array<i64: 2, 8, 32>}, {pipeline_mode = #tpu.pipeline_mode<synchronous>, transform_indices = @transform_6, window_bounds = array<i64: 2, 8, 32>}, {pipeline_mode = #tpu.pipeline_mode<synchronous>, transform_indices = @transform_7, window_bounds = array<i64: 2, 128, 32>}, {pipeline_mode = #tpu.pipeline_mode<synchronous>, transform_indices = @transform_8, window_bounds = array<i64: 2, 1, 128>}, {pipeline_mode = #tpu.pipeline_mode<synchronous>, transform_indices = @transform_9, window_bounds = array<i64: 2, 32, 128>}, {pipeline_mode = #tpu.pipeline_mode<synchronous>, transform_indices = @transform_10, window_bounds = array<i64: 2, 1, 32>}, {pipeline_mode = #tpu.pipeline_mode<synchronous>, transform_indices = @transform_11, window_bounds = array<i64: 2, 8, 32>}, {pipeline_mode = #tpu.pipeline_mode<synchronous>, transform_indices = @transform_12, window_bounds = array<i64: 2, 8, 32>}, {transform_indices = @transform_13, window_bounds = array<i64: 1, 8, 32>}]} {
    %c0 = arith.constant 0 : index
    %c0_0 = arith.constant 0 : index
    %c0_1 = arith.constant 0 : index
    %0 = vector.load %arg1[%c0, %c0_0, %c0_1] : memref<1x8x32xf32, #tpu.memory_space<vmem>>, vector<1x8x32xf32>
    %1 = vector.shape_cast %0 : vector<1x8x32xf32> to vector<8x32xf32>
    %2 = arith.truncf %1 : vector<8x32xf32> to vector<8x32xbf16>
    %c0_2 = arith.constant 0 : index
    %c0_3 = arith.constant 0 : index
    %c0_4 = arith.constant 0 : index
    %3 = vector.load %arg2[%c0_2, %c0_3, %c0_4] : memref<2x96x32xbf16, #tpu.memory_space<vmem>>, vector<1x96x32xbf16>
    %4 = vector.shape_cast %3 : vector<1x96x32xbf16> to vector<96x32xbf16>
    %cst = arith.constant dense<0.000000e+00> : vector<8x96xf32>
    %5 = tpu.matmul %2, %4, %cst {dimension_numbers = #tpu.dot_dimension_numbers<[1], [1], [0], [0], [0, 0, 1, 0], [], []>} : vector<8x32xbf16>, vector<96x32xbf16>, vector<8x96xf32> -> vector<8x96xf32>
    %c0_5 = arith.constant 0 : index
    %c0_6 = arith.constant 0 : index
    %c0_7 = arith.constant 0 : index
    %6 = vector.load %arg3[%c0_5, %c0_6, %c0_7] : memref<2x1x96xf32, #tpu.memory_space<vmem>>, vector<1x1x96xf32>
    %7 = vector.shape_cast %6 : vector<1x1x96xf32> to vector<1x96xf32>
    %8 = vector.broadcast %7 : vector<1x96xf32> to vector<8x96xf32>
    %9 = arith.addf %5, %8 : vector<8x96xf32>
    %10 = vector.extract_strided_slice %9 {offsets = [0, 0], sizes = [8, 32], strides = [1, 1]} : vector<8x96xf32> to vector<8x32xf32>
    %11 = vector.extract_strided_slice %10 {offsets = [0, 0], sizes = [8, 8], strides = [1, 1]} : vector<8x32xf32> to vector<8x8xf32>
    %12 = vector.extract_strided_slice %10 {offsets = [0, 8], sizes = [8, 8], strides = [1, 1]} : vector<8x32xf32> to vector<8x8xf32>
    %13 = vector.extract_strided_slice %10 {offsets = [0, 16], sizes = [8, 8], strides = [1, 1]} : vector<8x32xf32> to vector<8x8xf32>
    %14 = vector.extract_strided_slice %10 {offsets = [0, 24], sizes = [8, 8], strides = [1, 1]} : vector<8x32xf32> to vector<8x8xf32>
    %15 = vector.shape_cast %11 : vector<8x8xf32> to vector<1x8x8xf32>
    %16 = vector.shape_cast %12 : vector<8x8xf32> to vector<1x8x8xf32>
    %17 = vector.shape_cast %13 : vector<8x8xf32> to vector<1x8x8xf32>
    %18 = vector.shape_cast %14 : vector<8x8xf32> to vector<1x8x8xf32>
    %19 = tpu.concatenate %15, %16, %17, %18 in 0 : vector<1x8x8xf32>, vector<1x8x8xf32>, vector<1x8x8xf32>, vector<1x8x8xf32> -> vector<4x8x8xf32>
    %20 = arith.truncf %19 : vector<4x8x8xf32> to vector<4x8x8xbf16>
    %21 = vector.extract_strided_slice %9 {offsets = [0, 32], sizes = [8, 32], strides = [1, 1]} : vector<8x96xf32> to vector<8x32xf32>
    %22 = vector.extract_strided_slice %21 {offsets = [0, 0], sizes = [8, 8], strides = [1, 1]} : vector<8x32xf32> to vector<8x8xf32>
    %23 = vector.extract_strided_slice %21 {offsets = [0, 8], sizes = [8, 8], strides = [1, 1]} : vector<8x32xf32> to vector<8x8xf32>
    %24 = vector.extract_strided_slice %21 {offsets = [0, 16], sizes = [8, 8], strides = [1, 1]} : vector<8x32xf32> to vector<8x8xf32>
    %25 = vector.extract_strided_slice %21 {offsets = [0, 24], sizes = [8, 8], strides = [1, 1]} : vector<8x32xf32> to vector<8x8xf32>
    %26 = vector.shape_cast %22 : vector<8x8xf32> to vector<1x8x8xf32>
    %27 = vector.shape_cast %23 : vector<8x8xf32> to vector<1x8x8xf32>
    %28 = vector.shape_cast %24 : vector<8x8xf32> to vector<1x8x8xf32>
    %29 = vector.shape_cast %25 : vector<8x8xf32> to vector<1x8x8xf32>
    %30 = tpu.concatenate %26, %27, %28, %29 in 0 : vector<1x8x8xf32>, vector<1x8x8xf32>, vector<1x8x8xf32>, vector<1x8x8xf32> -> vector<4x8x8xf32>
    %31 = arith.truncf %30 : vector<4x8x8xf32> to vector<4x8x8xbf16>
    %32 = vector.extract_strided_slice %9 {offsets = [0, 64], sizes = [8, 32], strides = [1, 1]} : vector<8x96xf32> to vector<8x32xf32>
    %33 = vector.extract_strided_slice %32 {offsets = [0, 0], sizes = [8, 8], strides = [1, 1]} : vector<8x32xf32> to vector<8x8xf32>
    %34 = vector.extract_strided_slice %32 {offsets = [0, 8], sizes = [8, 8], strides = [1, 1]} : vector<8x32xf32> to vector<8x8xf32>
    %35 = vector.extract_strided_slice %32 {offsets = [0, 16], sizes = [8, 8], strides = [1, 1]} : vector<8x32xf32> to vector<8x8xf32>
    %36 = vector.extract_strided_slice %32 {offsets = [0, 24], sizes = [8, 8], strides = [1, 1]} : vector<8x32xf32> to vector<8x8xf32>
    %37 = vector.shape_cast %33 : vector<8x8xf32> to vector<1x8x8xf32>
    %38 = vector.shape_cast %34 : vector<8x8xf32> to vector<1x8x8xf32>
    %39 = vector.shape_cast %35 : vector<8x8xf32> to vector<1x8x8xf32>
    %40 = vector.shape_cast %36 : vector<8x8xf32> to vector<1x8x8xf32>
    %41 = tpu.concatenate %37, %38, %39, %40 in 0 : vector<1x8x8xf32>, vector<1x8x8xf32>, vector<1x8x8xf32>, vector<1x8x8xf32> -> vector<4x8x8xf32>
    %42 = arith.truncf %41 : vector<4x8x8xf32> to vector<4x8x8xbf16>
    "tpu.trace_start"() <{level = 10 : i32, message = "hqd,hkd->hqk"}> : () -> ()
    %cst_8 = arith.constant dense<0.000000e+00> : vector<4x8x8xf32>
    %43 = tpu.matmul %20, %31, %cst_8 {dimension_numbers = #tpu.dot_dimension_numbers<[2], [2], [1], [1], [0, 0, 0, 1, 1, 1], [0], [0]>} : vector<4x8x8xbf16>, vector<4x8x8xbf16>, vector<4x8x8xf32> -> vector<4x8x8xf32>
    "tpu.trace_stop"() : () -> ()
    %cst_9 = arith.constant 0.353553385 : f32
    %44 = vector.broadcast %cst_9 : f32 to vector<4x8x8xf32>
    %45 = arith.mulf %43, %44 : vector<4x8x8xf32>
    %cst_10 = arith.constant dense<0xFF800000> : vector<4x8xf32>
    %46 = vector.multi_reduction <maximumf>, %45, %cst_10 [2] : vector<4x8x8xf32> to vector<4x8xf32>
    %47 = vector.shape_cast %46 : vector<4x8xf32> to vector<4x8x1xf32>
    %48 = vector.broadcast %47 : vector<4x8x1xf32> to vector<4x8x8xf32>
    %49 = arith.subf %45, %48 : vector<4x8x8xf32>
    %50 = math.exp %49 : vector<4x8x8xf32>
    %cst_11 = arith.constant dense<0.000000e+00> : vector<4x8xf32>
    %51 = vector.multi_reduction <add>, %50, %cst_11 [2] : vector<4x8x8xf32> to vector<4x8xf32>
    %52 = vector.shape_cast %51 : vector<4x8xf32> to vector<4x8x1xf32>
    %53 = tpu.reciprocal %52 {approx = true} : vector<4x8x1xf32> -> vector<4x8x1xf32>
    %54 = vector.broadcast %53 : vector<4x8x1xf32> to vector<4x8x8xf32>
    %55 = arith.mulf %50, %54 : vector<4x8x8xf32>
    %56 = arith.truncf %55 : vector<4x8x8xf32> to vector<4x8x8xbf16>
    "tpu.trace_start"() <{level = 10 : i32, message = "hqk,hkd->hqd"}> : () -> ()
    %cst_12 = arith.constant dense<0.000000e+00> : vector<4x8x8xf32>
    %57 = tpu.matmul %56, %42, %cst_12 {dimension_numbers = #tpu.dot_dimension_numbers<[2], [1], [1], [2], [0, 0, 0, 1, 1, 2], [0], [0]>} : vector<4x8x8xbf16>, vector<4x8x8xbf16>, vector<4x8x8xf32> -> vector<4x8x8xf32>
    "tpu.trace_stop"() : () -> ()
    %58 = vector.extract_strided_slice %57 {offsets = [0, 0, 0], sizes = [1, 8, 8], strides = [1, 1, 1]} : vector<4x8x8xf32> to vector<1x8x8xf32>
    %59 = vector.shape_cast %58 : vector<1x8x8xf32> to vector<8x8xf32>
    %60 = vector.extract_strided_slice %57 {offsets = [1, 0, 0], sizes = [1, 8, 8], strides = [1, 1, 1]} : vector<4x8x8xf32> to vector<1x8x8xf32>
    %61 = vector.shape_cast %60 : vector<1x8x8xf32> to vector<8x8xf32>
    %62 = vector.extract_strided_slice %57 {offsets = [2, 0, 0], sizes = [1, 8, 8], strides = [1, 1, 1]} : vector<4x8x8xf32> to vector<1x8x8xf32>
    %63 = vector.shape_cast %62 : vector<1x8x8xf32> to vector<8x8xf32>
    %64 = vector.extract_strided_slice %57 {offsets = [3, 0, 0], sizes = [1, 8, 8], strides = [1, 1, 1]} : vector<4x8x8xf32> to vector<1x8x8xf32>
    %65 = vector.shape_cast %64 : vector<1x8x8xf32> to vector<8x8xf32>
    %66 = tpu.concatenate %59, %61, %63, %65 in 1 : vector<8x8xf32>, vector<8x8xf32>, vector<8x8xf32>, vector<8x8xf32> -> vector<8x32xf32>
    %c0_13 = arith.constant 0 : index
    %c0_14 = arith.constant 0 : index
    %c0_15 = arith.constant 0 : index
    %67 = vector.load %arg4[%c0_13, %c0_14, %c0_15] : memref<2x32x32xbf16, #tpu.memory_space<vmem>>, vector<1x32x32xbf16>
    %68 = vector.shape_cast %67 : vector<1x32x32xbf16> to vector<32x32xbf16>
    %69 = arith.truncf %66 : vector<8x32xf32> to vector<8x32xbf16>
    %cst_16 = arith.constant dense<0.000000e+00> : vector<8x32xf32>
    %70 = tpu.matmul %69, %68, %cst_16 {dimension_numbers = #tpu.dot_dimension_numbers<[1], [1], [0], [0], [0, 0, 1, 0], [], []>} : vector<8x32xbf16>, vector<32x32xbf16>, vector<8x32xf32> -> vector<8x32xf32>
    %c0_17 = arith.constant 0 : index
    %c0_18 = arith.constant 0 : index
    %c0_19 = arith.constant 0 : index
    %71 = vector.load %arg5[%c0_17, %c0_18, %c0_19] : memref<2x1x32xf32, #tpu.memory_space<vmem>>, vector<1x1x32xf32>
    %72 = vector.shape_cast %71 : vector<1x1x32xf32> to vector<1x32xf32>
    %73 = vector.broadcast %72 : vector<1x32xf32> to vector<8x32xf32>
    %74 = arith.addf %70, %73 : vector<8x32xf32>
    %75 = arith.addf %1, %74 : vector<8x32xf32>
    %c0_20 = arith.constant 0 : index
    %c0_21 = arith.constant 0 : index
    %c0_22 = arith.constant 0 : index
    %76 = vector.load %arg6[%c0_20, %c0_21, %c0_22] : memref<2x8x32xf32, #tpu.memory_space<vmem>>, vector<1x8x32xf32>
    %77 = vector.shape_cast %76 : vector<1x8x32xf32> to vector<8x32xf32>
    %c0_23 = arith.constant 0 : index
    %c0_24 = arith.constant 0 : index
    %c0_25 = arith.constant 0 : index
    %78 = vector.load %arg7[%c0_23, %c0_24, %c0_25] : memref<2x8x32xf32, #tpu.memory_space<vmem>>, vector<1x8x32xf32>
    %79 = vector.shape_cast %78 : vector<1x8x32xf32> to vector<8x32xf32>
    %80 = vector.shape_cast %75 : vector<8x32xf32> to vector<1x8x32xf32>
    %cst_26 = arith.constant dense<0.000000e+00> : vector<1xf32>
    %81 = vector.multi_reduction <add>, %80, %cst_26 [1, 2] : vector<1x8x32xf32> to vector<1xf32>
    %82 = vector.shape_cast %81 : vector<1xf32> to vector<1x1x1xf32>
    %83 = vector.extract %82[0, 0, 0] : f32 from vector<1x1x1xf32>
    %84 = arith.mulf %75, %75 : vector<8x32xf32>
    %85 = vector.shape_cast %84 : vector<8x32xf32> to vector<1x8x32xf32>
    %cst_27 = arith.constant dense<0.000000e+00> : vector<1xf32>
    %86 = vector.multi_reduction <add>, %85, %cst_27 [1, 2] : vector<1x8x32xf32> to vector<1xf32>
    %87 = vector.shape_cast %86 : vector<1xf32> to vector<1x1x1xf32>
    %88 = vector.extract %87[0, 0, 0] : f32 from vector<1x1x1xf32>
    %cst_28 = arith.constant 2.560000e+02 : f32
    %89 = arith.divf %83, %cst_28 : f32
    %cst_29 = arith.constant 2.560000e+02 : f32
    %90 = arith.divf %88, %cst_29 : f32
    %91 = arith.mulf %89, %89 : f32
    %92 = arith.subf %90, %91 : f32
    %93 = vector.broadcast %89 : f32 to vector<8x32xf32>
    %94 = arith.subf %75, %93 : vector<8x32xf32>
    %cst_30 = arith.constant 9.99999974E-6 : f32
    %95 = arith.addf %92, %cst_30 : f32
    %96 = math.rsqrt %95 : f32
    %97 = vector.broadcast %96 : f32 to vector<8x32xf32>
    %98 = arith.mulf %94, %97 : vector<8x32xf32>
    %99 = arith.mulf %98, %77 : vector<8x32xf32>
    %100 = arith.addf %99, %79 : vector<8x32xf32>
    %c0_31 = arith.constant 0 : index
    %c0_32 = arith.constant 0 : index
    %c0_33 = arith.constant 0 : index
    %101 = vector.load %arg8[%c0_31, %c0_32, %c0_33] : memref<2x128x32xbf16, #tpu.memory_space<vmem>>, vector<1x128x32xbf16>
    %102 = vector.shape_cast %101 : vector<1x128x32xbf16> to vector<128x32xbf16>
    %103 = arith.truncf %100 : vector<8x32xf32> to vector<8x32xbf16>
    %cst_34 = arith.constant dense<0.000000e+00> : vector<8x128xf32>
    %104 = tpu.matmul %103, %102, %cst_34 {dimension_numbers = #tpu.dot_dimension_numbers<[1], [1], [0], [0], [0, 0, 1, 0], [], []>} : vector<8x32xbf16>, vector<128x32xbf16>, vector<8x128xf32> -> vector<8x128xf32>
    %c0_35 = arith.constant 0 : index
    %c0_36 = arith.constant 0 : index
    %c0_37 = arith.constant 0 : index
    %105 = vector.load %arg9[%c0_35, %c0_36, %c0_37] : memref<2x1x128xf32, #tpu.memory_space<vmem>>, vector<1x1x128xf32>
    %106 = vector.shape_cast %105 : vector<1x1x128xf32> to vector<1x128xf32>
    %107 = vector.broadcast %106 : vector<1x128xf32> to vector<8x128xf32>
    %108 = arith.addf %104, %107 : vector<8x128xf32>
    %cst_38 = arith.constant 0.000000e+00 : f32
    %109 = vector.broadcast %cst_38 : f32 to vector<8x128xf32>
    %110 = arith.maximumf %108, %109 : vector<8x128xf32>
    %c0_39 = arith.constant 0 : index
    %c0_40 = arith.constant 0 : index
    %c0_41 = arith.constant 0 : index
    %111 = vector.load %arg10[%c0_39, %c0_40, %c0_41] : memref<2x32x128xbf16, #tpu.memory_space<vmem>>, vector<1x32x128xbf16>
    %112 = vector.shape_cast %111 : vector<1x32x128xbf16> to vector<32x128xbf16>
    %113 = arith.truncf %110 : vector<8x128xf32> to vector<8x128xbf16>
    %cst_42 = arith.constant dense<0.000000e+00> : vector<8x32xf32>
    %114 = tpu.matmul %113, %112, %cst_42 {dimension_numbers = #tpu.dot_dimension_numbers<[1], [1], [0], [0], [0, 0, 1, 0], [], []>} : vector<8x128xbf16>, vector<32x128xbf16>, vector<8x32xf32> -> vector<8x32xf32>
    %c0_43 = arith.constant 0 : index
    %c0_44 = arith.constant 0 : index
    %c0_45 = arith.constant 0 : index
    %115 = vector.load %arg11[%c0_43, %c0_44, %c0_45] : memref<2x1x32xf32, #tpu.memory_space<vmem>>, vector<1x1x32xf32>
    %116 = vector.shape_cast %115 : vector<1x1x32xf32> to vector<1x32xf32>
    %117 = vector.broadcast %116 : vector<1x32xf32> to vector<8x32xf32>
    %118 = arith.addf %114, %117 : vector<8x32xf32>
    %119 = arith.addf %100, %118 : vector<8x32xf32>
    %c0_46 = arith.constant 0 : index
    %c0_47 = arith.constant 0 : index
    %c0_48 = arith.constant 0 : index
    %120 = vector.load %arg12[%c0_46, %c0_47, %c0_48] : memref<2x8x32xf32, #tpu.memory_space<vmem>>, vector<1x8x32xf32>
    %121 = vector.shape_cast %120 : vector<1x8x32xf32> to vector<8x32xf32>
    %c0_49 = arith.constant 0 : index
    %c0_50 = arith.constant 0 : index
    %c0_51 = arith.constant 0 : index
    %122 = vector.load %arg13[%c0_49, %c0_50, %c0_51] : memref<2x8x32xf32, #tpu.memory_space<vmem>>, vector<1x8x32xf32>
    %123 = vector.shape_cast %122 : vector<1x8x32xf32> to vector<8x32xf32>
    %124 = vector.shape_cast %119 : vector<8x32xf32> to vector<1x8x32xf32>
    %cst_52 = arith.constant dense<0.000000e+00> : vector<1xf32>
    %125 = vector.multi_reduction <add>, %124, %cst_52 [1, 2] : vector<1x8x32xf32> to vector<1xf32>
    %126 = vector.shape_cast %125 : vector<1xf32> to vector<1x1x1xf32>
    %127 = vector.extract %126[0, 0, 0] : f32 from vector<1x1x1xf32>
    %128 = arith.mulf %119, %119 : vector<8x32xf32>
    %129 = vector.shape_cast %128 : vector<8x32xf32> to vector<1x8x32xf32>
    %cst_53 = arith.constant dense<0.000000e+00> : vector<1xf32>
    %130 = vector.multi_reduction <add>, %129, %cst_53 [1, 2] : vector<1x8x32xf32> to vector<1xf32>
    %131 = vector.shape_cast %130 : vector<1xf32> to vector<1x1x1xf32>
    %132 = vector.extract %131[0, 0, 0] : f32 from vector<1x1x1xf32>
    %cst_54 = arith.constant 2.560000e+02 : f32
    %133 = arith.divf %127, %cst_54 : f32
    %cst_55 = arith.constant 2.560000e+02 : f32
    %134 = arith.divf %132, %cst_55 : f32
    %135 = arith.mulf %133, %133 : f32
    %136 = arith.subf %134, %135 : f32
    %137 = vector.broadcast %133 : f32 to vector<8x32xf32>
    %138 = arith.subf %119, %137 : vector<8x32xf32>
    %cst_56 = arith.constant 9.99999974E-6 : f32
    %139 = arith.addf %136, %cst_56 : f32
    %140 = math.rsqrt %139 : f32
    %141 = vector.broadcast %140 : f32 to vector<8x32xf32>
    %142 = arith.mulf %138, %141 : vector<8x32xf32>
    %143 = arith.mulf %142, %121 : vector<8x32xf32>
    %144 = arith.addf %143, %123 : vector<8x32xf32>
    %145 = arith.truncf %144 : vector<8x32xf32> to vector<8x32xbf16>
    %c1 = arith.constant 1 : index
    %c0_57 = arith.constant 0 : index
    %c0_58 = arith.constant 0 : index
    %146 = vector.load %arg2[%c1, %c0_57, %c0_58] : memref<2x96x32xbf16, #tpu.memory_space<vmem>>, vector<1x96x32xbf16>
    %147 = vector.shape_cast %146 : vector<1x96x32xbf16> to vector<96x32xbf16>
    %cst_59 = arith.constant dense<0.000000e+00> : vector<8x96xf32>
    %148 = tpu.matmul %145, %147, %cst_59 {dimension_numbers = #tpu.dot_dimension_numbers<[1], [1], [0], [0], [0, 0, 1, 0], [], []>} : vector<8x32xbf16>, vector<96x32xbf16>, vector<8x96xf32> -> vector<8x96xf32>
    %c1_60 = arith.constant 1 : index
    %c0_61 = arith.constant 0 : index
    %c0_62 = arith.constant 0 : index
    %149 = vector.load %arg3[%c1_60, %c0_61, %c0_62] : memref<2x1x96xf32, #tpu.memory_space<vmem>>, vector<1x1x96xf32>
    %150 = vector.shape_cast %149 : vector<1x1x96xf32> to vector<1x96xf32>
    %151 = vector.broadcast %150 : vector<1x96xf32> to vector<8x96xf32>
    %152 = arith.addf %148, %151 : vector<8x96xf32>
    %153 = vector.extract_strided_slice %152 {offsets = [0, 0], sizes = [8, 32], strides = [1, 1]} : vector<8x96xf32> to vector<8x32xf32>
    %154 = vector.extract_strided_slice %153 {offsets = [0, 0], sizes = [8, 8], strides = [1, 1]} : vector<8x32xf32> to vector<8x8xf32>
    %155 = vector.extract_strided_slice %153 {offsets = [0, 8], sizes = [8, 8], strides = [1, 1]} : vector<8x32xf32> to vector<8x8xf32>
    %156 = vector.extract_strided_slice %153 {offsets = [0, 16], sizes = [8, 8], strides = [1, 1]} : vector<8x32xf32> to vector<8x8xf32>
    %157 = vector.extract_strided_slice %153 {offsets = [0, 24], sizes = [8, 8], strides = [1, 1]} : vector<8x32xf32> to vector<8x8xf32>
    %158 = vector.shape_cast %154 : vector<8x8xf32> to vector<1x8x8xf32>
    %159 = vector.shape_cast %155 : vector<8x8xf32> to vector<1x8x8xf32>
    %160 = vector.shape_cast %156 : vector<8x8xf32> to vector<1x8x8xf32>
    %161 = vector.shape_cast %157 : vector<8x8xf32> to vector<1x8x8xf32>
    %162 = tpu.concatenate %158, %159, %160, %161 in 0 : vector<1x8x8xf32>, vector<1x8x8xf32>, vector<1x8x8xf32>, vector<1x8x8xf32> -> vector<4x8x8xf32>
    %163 = arith.truncf %162 : vector<4x8x8xf32> to vector<4x8x8xbf16>
    %164 = vector.extract_strided_slice %152 {offsets = [0, 32], sizes = [8, 32], strides = [1, 1]} : vector<8x96xf32> to vector<8x32xf32>
    %165 = vector.extract_strided_slice %164 {offsets = [0, 0], sizes = [8, 8], strides = [1, 1]} : vector<8x32xf32> to vector<8x8xf32>
    %166 = vector.extract_strided_slice %164 {offsets = [0, 8], sizes = [8, 8], strides = [1, 1]} : vector<8x32xf32> to vector<8x8xf32>
    %167 = vector.extract_strided_slice %164 {offsets = [0, 16], sizes = [8, 8], strides = [1, 1]} : vector<8x32xf32> to vector<8x8xf32>
    %168 = vector.extract_strided_slice %164 {offsets = [0, 24], sizes = [8, 8], strides = [1, 1]} : vector<8x32xf32> to vector<8x8xf32>
    %169 = vector.shape_cast %165 : vector<8x8xf32> to vector<1x8x8xf32>
    %170 = vector.shape_cast %166 : vector<8x8xf32> to vector<1x8x8xf32>
    %171 = vector.shape_cast %167 : vector<8x8xf32> to vector<1x8x8xf32>
    %172 = vector.shape_cast %168 : vector<8x8xf32> to vector<1x8x8xf32>
    %173 = tpu.concatenate %169, %170, %171, %172 in 0 : vector<1x8x8xf32>, vector<1x8x8xf32>, vector<1x8x8xf32>, vector<1x8x8xf32> -> vector<4x8x8xf32>
    %174 = arith.truncf %173 : vector<4x8x8xf32> to vector<4x8x8xbf16>
    %175 = vector.extract_strided_slice %152 {offsets = [0, 64], sizes = [8, 32], strides = [1, 1]} : vector<8x96xf32> to vector<8x32xf32>
    %176 = vector.extract_strided_slice %175 {offsets = [0, 0], sizes = [8, 8], strides = [1, 1]} : vector<8x32xf32> to vector<8x8xf32>
    %177 = vector.extract_strided_slice %175 {offsets = [0, 8], sizes = [8, 8], strides = [1, 1]} : vector<8x32xf32> to vector<8x8xf32>
    %178 = vector.extract_strided_slice %175 {offsets = [0, 16], sizes = [8, 8], strides = [1, 1]} : vector<8x32xf32> to vector<8x8xf32>
    %179 = vector.extract_strided_slice %175 {offsets = [0, 24], sizes = [8, 8], strides = [1, 1]} : vector<8x32xf32> to vector<8x8xf32>
    %180 = vector.shape_cast %176 : vector<8x8xf32> to vector<1x8x8xf32>
    %181 = vector.shape_cast %177 : vector<8x8xf32> to vector<1x8x8xf32>
    %182 = vector.shape_cast %178 : vector<8x8xf32> to vector<1x8x8xf32>
    %183 = vector.shape_cast %179 : vector<8x8xf32> to vector<1x8x8xf32>
    %184 = tpu.concatenate %180, %181, %182, %183 in 0 : vector<1x8x8xf32>, vector<1x8x8xf32>, vector<1x8x8xf32>, vector<1x8x8xf32> -> vector<4x8x8xf32>
    %185 = arith.truncf %184 : vector<4x8x8xf32> to vector<4x8x8xbf16>
    "tpu.trace_start"() <{level = 10 : i32, message = "hqd,hkd->hqk"}> : () -> ()
    %cst_63 = arith.constant dense<0.000000e+00> : vector<4x8x8xf32>
    %186 = tpu.matmul %163, %174, %cst_63 {dimension_numbers = #tpu.dot_dimension_numbers<[2], [2], [1], [1], [0, 0, 0, 1, 1, 1], [0], [0]>} : vector<4x8x8xbf16>, vector<4x8x8xbf16>, vector<4x8x8xf32> -> vector<4x8x8xf32>
    "tpu.trace_stop"() : () -> ()
    %cst_64 = arith.constant 0.353553385 : f32
    %187 = vector.broadcast %cst_64 : f32 to vector<4x8x8xf32>
    %188 = arith.mulf %186, %187 : vector<4x8x8xf32>
    %cst_65 = arith.constant dense<0xFF800000> : vector<4x8xf32>
    %189 = vector.multi_reduction <maximumf>, %188, %cst_65 [2] : vector<4x8x8xf32> to vector<4x8xf32>
    %190 = vector.shape_cast %189 : vector<4x8xf32> to vector<4x8x1xf32>
    %191 = vector.broadcast %190 : vector<4x8x1xf32> to vector<4x8x8xf32>
    %192 = arith.subf %188, %191 : vector<4x8x8xf32>
    %193 = math.exp %192 : vector<4x8x8xf32>
    %cst_66 = arith.constant dense<0.000000e+00> : vector<4x8xf32>
    %194 = vector.multi_reduction <add>, %193, %cst_66 [2] : vector<4x8x8xf32> to vector<4x8xf32>
    %195 = vector.shape_cast %194 : vector<4x8xf32> to vector<4x8x1xf32>
    %196 = tpu.reciprocal %195 {approx = true} : vector<4x8x1xf32> -> vector<4x8x1xf32>
    %197 = vector.broadcast %196 : vector<4x8x1xf32> to vector<4x8x8xf32>
    %198 = arith.mulf %193, %197 : vector<4x8x8xf32>
    %199 = arith.truncf %198 : vector<4x8x8xf32> to vector<4x8x8xbf16>
    "tpu.trace_start"() <{level = 10 : i32, message = "hqk,hkd->hqd"}> : () -> ()
    %cst_67 = arith.constant dense<0.000000e+00> : vector<4x8x8xf32>
    %200 = tpu.matmul %199, %185, %cst_67 {dimension_numbers = #tpu.dot_dimension_numbers<[2], [1], [1], [2], [0, 0, 0, 1, 1, 2], [0], [0]>} : vector<4x8x8xbf16>, vector<4x8x8xbf16>, vector<4x8x8xf32> -> vector<4x8x8xf32>
    "tpu.trace_stop"() : () -> ()
    %201 = vector.extract_strided_slice %200 {offsets = [0, 0, 0], sizes = [1, 8, 8], strides = [1, 1, 1]} : vector<4x8x8xf32> to vector<1x8x8xf32>
    %202 = vector.shape_cast %201 : vector<1x8x8xf32> to vector<8x8xf32>
    %203 = vector.extract_strided_slice %200 {offsets = [1, 0, 0], sizes = [1, 8, 8], strides = [1, 1, 1]} : vector<4x8x8xf32> to vector<1x8x8xf32>
    %204 = vector.shape_cast %203 : vector<1x8x8xf32> to vector<8x8xf32>
    %205 = vector.extract_strided_slice %200 {offsets = [2, 0, 0], sizes = [1, 8, 8], strides = [1, 1, 1]} : vector<4x8x8xf32> to vector<1x8x8xf32>
    %206 = vector.shape_cast %205 : vector<1x8x8xf32> to vector<8x8xf32>
    %207 = vector.extract_strided_slice %200 {offsets = [3, 0, 0], sizes = [1, 8, 8], strides = [1, 1, 1]} : vector<4x8x8xf32> to vector<1x8x8xf32>
    %208 = vector.shape_cast %207 : vector<1x8x8xf32> to vector<8x8xf32>
    %209 = tpu.concatenate %202, %204, %206, %208 in 1 : vector<8x8xf32>, vector<8x8xf32>, vector<8x8xf32>, vector<8x8xf32> -> vector<8x32xf32>
    %c1_68 = arith.constant 1 : index
    %c0_69 = arith.constant 0 : index
    %c0_70 = arith.constant 0 : index
    %210 = vector.load %arg4[%c1_68, %c0_69, %c0_70] : memref<2x32x32xbf16, #tpu.memory_space<vmem>>, vector<1x32x32xbf16>
    %211 = vector.shape_cast %210 : vector<1x32x32xbf16> to vector<32x32xbf16>
    %212 = arith.truncf %209 : vector<8x32xf32> to vector<8x32xbf16>
    %cst_71 = arith.constant dense<0.000000e+00> : vector<8x32xf32>
    %213 = tpu.matmul %212, %211, %cst_71 {dimension_numbers = #tpu.dot_dimension_numbers<[1], [1], [0], [0], [0, 0, 1, 0], [], []>} : vector<8x32xbf16>, vector<32x32xbf16>, vector<8x32xf32> -> vector<8x32xf32>
    %c1_72 = arith.constant 1 : index
    %c0_73 = arith.constant 0 : index
    %c0_74 = arith.constant 0 : index
    %214 = vector.load %arg5[%c1_72, %c0_73, %c0_74] : memref<2x1x32xf32, #tpu.memory_space<vmem>>, vector<1x1x32xf32>
    %215 = vector.shape_cast %214 : vector<1x1x32xf32> to vector<1x32xf32>
    %216 = vector.broadcast %215 : vector<1x32xf32> to vector<8x32xf32>
    %217 = arith.addf %213, %216 : vector<8x32xf32>
    %218 = arith.addf %144, %217 : vector<8x32xf32>
    %c1_75 = arith.constant 1 : index
    %c0_76 = arith.constant 0 : index
    %c0_77 = arith.constant 0 : index
    %219 = vector.load %arg6[%c1_75, %c0_76, %c0_77] : memref<2x8x32xf32, #tpu.memory_space<vmem>>, vector<1x8x32xf32>
    %220 = vector.shape_cast %219 : vector<1x8x32xf32> to vector<8x32xf32>
    %c1_78 = arith.constant 1 : index
    %c0_79 = arith.constant 0 : index
    %c0_80 = arith.constant 0 : index
    %221 = vector.load %arg7[%c1_78, %c0_79, %c0_80] : memref<2x8x32xf32, #tpu.memory_space<vmem>>, vector<1x8x32xf32>
    %222 = vector.shape_cast %221 : vector<1x8x32xf32> to vector<8x32xf32>
    %223 = vector.shape_cast %218 : vector<8x32xf32> to vector<1x8x32xf32>
    %cst_81 = arith.constant dense<0.000000e+00> : vector<1xf32>
    %224 = vector.multi_reduction <add>, %223, %cst_81 [1, 2] : vector<1x8x32xf32> to vector<1xf32>
    %225 = vector.shape_cast %224 : vector<1xf32> to vector<1x1x1xf32>
    %226 = vector.extract %225[0, 0, 0] : f32 from vector<1x1x1xf32>
    %227 = arith.mulf %218, %218 : vector<8x32xf32>
    %228 = vector.shape_cast %227 : vector<8x32xf32> to vector<1x8x32xf32>
    %cst_82 = arith.constant dense<0.000000e+00> : vector<1xf32>
    %229 = vector.multi_reduction <add>, %228, %cst_82 [1, 2] : vector<1x8x32xf32> to vector<1xf32>
    %230 = vector.shape_cast %229 : vector<1xf32> to vector<1x1x1xf32>
    %231 = vector.extract %230[0, 0, 0] : f32 from vector<1x1x1xf32>
    %cst_83 = arith.constant 2.560000e+02 : f32
    %232 = arith.divf %226, %cst_83 : f32
    %cst_84 = arith.constant 2.560000e+02 : f32
    %233 = arith.divf %231, %cst_84 : f32
    %234 = arith.mulf %232, %232 : f32
    %235 = arith.subf %233, %234 : f32
    %236 = vector.broadcast %232 : f32 to vector<8x32xf32>
    %237 = arith.subf %218, %236 : vector<8x32xf32>
    %cst_85 = arith.constant 9.99999974E-6 : f32
    %238 = arith.addf %235, %cst_85 : f32
    %239 = math.rsqrt %238 : f32
    %240 = vector.broadcast %239 : f32 to vector<8x32xf32>
    %241 = arith.mulf %237, %240 : vector<8x32xf32>
    %242 = arith.mulf %241, %220 : vector<8x32xf32>
    %243 = arith.addf %242, %222 : vector<8x32xf32>
    %c1_86 = arith.constant 1 : index
    %c0_87 = arith.constant 0 : index
    %c0_88 = arith.constant 0 : index
    %244 = vector.load %arg8[%c1_86, %c0_87, %c0_88] : memref<2x128x32xbf16, #tpu.memory_space<vmem>>, vector<1x128x32xbf16>
    %245 = vector.shape_cast %244 : vector<1x128x32xbf16> to vector<128x32xbf16>
    %246 = arith.truncf %243 : vector<8x32xf32> to vector<8x32xbf16>
    %cst_89 = arith.constant dense<0.000000e+00> : vector<8x128xf32>
    %247 = tpu.matmul %246, %245, %cst_89 {dimension_numbers = #tpu.dot_dimension_numbers<[1], [1], [0], [0], [0, 0, 1, 0], [], []>} : vector<8x32xbf16>, vector<128x32xbf16>, vector<8x128xf32> -> vector<8x128xf32>
    %c1_90 = arith.constant 1 : index
    %c0_91 = arith.constant 0 : index
    %c0_92 = arith.constant 0 : index
    %248 = vector.load %arg9[%c1_90, %c0_91, %c0_92] : memref<2x1x128xf32, #tpu.memory_space<vmem>>, vector<1x1x128xf32>
    %249 = vector.shape_cast %248 : vector<1x1x128xf32> to vector<1x128xf32>
    %250 = vector.broadcast %249 : vector<1x128xf32> to vector<8x128xf32>
    %251 = arith.addf %247, %250 : vector<8x128xf32>
    %cst_93 = arith.constant 0.000000e+00 : f32
    %252 = vector.broadcast %cst_93 : f32 to vector<8x128xf32>
    %253 = arith.maximumf %251, %252 : vector<8x128xf32>
    %c1_94 = arith.constant 1 : index
    %c0_95 = arith.constant 0 : index
    %c0_96 = arith.constant 0 : index
    %254 = vector.load %arg10[%c1_94, %c0_95, %c0_96] : memref<2x32x128xbf16, #tpu.memory_space<vmem>>, vector<1x32x128xbf16>
    %255 = vector.shape_cast %254 : vector<1x32x128xbf16> to vector<32x128xbf16>
    %256 = arith.truncf %253 : vector<8x128xf32> to vector<8x128xbf16>
    %cst_97 = arith.constant dense<0.000000e+00> : vector<8x32xf32>
    %257 = tpu.matmul %256, %255, %cst_97 {dimension_numbers = #tpu.dot_dimension_numbers<[1], [1], [0], [0], [0, 0, 1, 0], [], []>} : vector<8x128xbf16>, vector<32x128xbf16>, vector<8x32xf32> -> vector<8x32xf32>
    %c1_98 = arith.constant 1 : index
    %c0_99 = arith.constant 0 : index
    %c0_100 = arith.constant 0 : index
    %258 = vector.load %arg11[%c1_98, %c0_99, %c0_100] : memref<2x1x32xf32, #tpu.memory_space<vmem>>, vector<1x1x32xf32>
    %259 = vector.shape_cast %258 : vector<1x1x32xf32> to vector<1x32xf32>
    %260 = vector.broadcast %259 : vector<1x32xf32> to vector<8x32xf32>
    %261 = arith.addf %257, %260 : vector<8x32xf32>
    %262 = arith.addf %243, %261 : vector<8x32xf32>
    %c1_101 = arith.constant 1 : index
    %c0_102 = arith.constant 0 : index
    %c0_103 = arith.constant 0 : index
    %263 = vector.load %arg12[%c1_101, %c0_102, %c0_103] : memref<2x8x32xf32, #tpu.memory_space<vmem>>, vector<1x8x32xf32>
    %264 = vector.shape_cast %263 : vector<1x8x32xf32> to vector<8x32xf32>
    %c1_104 = arith.constant 1 : index
    %c0_105 = arith.constant 0 : index
    %c0_106 = arith.constant 0 : index
    %265 = vector.load %arg13[%c1_104, %c0_105, %c0_106] : memref<2x8x32xf32, #tpu.memory_space<vmem>>, vector<1x8x32xf32>
    %266 = vector.shape_cast %265 : vector<1x8x32xf32> to vector<8x32xf32>
    %267 = vector.shape_cast %262 : vector<8x32xf32> to vector<1x8x32xf32>
    %cst_107 = arith.constant dense<0.000000e+00> : vector<1xf32>
    %268 = vector.multi_reduction <add>, %267, %cst_107 [1, 2] : vector<1x8x32xf32> to vector<1xf32>
    %269 = vector.shape_cast %268 : vector<1xf32> to vector<1x1x1xf32>
    %270 = vector.extract %269[0, 0, 0] : f32 from vector<1x1x1xf32>
    %271 = arith.mulf %262, %262 : vector<8x32xf32>
    %272 = vector.shape_cast %271 : vector<8x32xf32> to vector<1x8x32xf32>
    %cst_108 = arith.constant dense<0.000000e+00> : vector<1xf32>
    %273 = vector.multi_reduction <add>, %272, %cst_108 [1, 2] : vector<1x8x32xf32> to vector<1xf32>
    %274 = vector.shape_cast %273 : vector<1xf32> to vector<1x1x1xf32>
    %275 = vector.extract %274[0, 0, 0] : f32 from vector<1x1x1xf32>
    %cst_109 = arith.constant 2.560000e+02 : f32
    %276 = arith.divf %270, %cst_109 : f32
    %cst_110 = arith.constant 2.560000e+02 : f32
    %277 = arith.divf %275, %cst_110 : f32
    %278 = arith.mulf %276, %276 : f32
    %279 = arith.subf %277, %278 : f32
    %280 = vector.broadcast %276 : f32 to vector<8x32xf32>
    %281 = arith.subf %262, %280 : vector<8x32xf32>
    %cst_111 = arith.constant 9.99999974E-6 : f32
    %282 = arith.addf %279, %cst_111 : f32
    %283 = math.rsqrt %282 : f32
    %284 = vector.broadcast %283 : f32 to vector<8x32xf32>
    %285 = arith.mulf %281, %284 : vector<8x32xf32>
    %286 = arith.mulf %285, %264 : vector<8x32xf32>
    %287 = arith.addf %286, %266 : vector<8x32xf32>
    %c0_112 = arith.constant 0 : index
    %c0_113 = arith.constant 0 : index
    %c0_114 = arith.constant 0 : index
    %288 = vector.load %arg14[%c0_112, %c0_113, %c0_114] : memref<1x8x32xf32, #tpu.memory_space<vmem>>, vector<1x8x32xf32>
    %289 = vector.shape_cast %288 : vector<1x8x32xf32> to vector<8x32xf32>
    %290 = vector.shape_cast %287 : vector<8x32xf32> to vector<1x8x32xf32>
    tpu.vector_store %arg14[%c0_112, %c0_113, %c0_114], %290 {strides = array<i32>} : memref<1x8x32xf32, #tpu.memory_space<vmem>>, vector<1x8x32xf32>,
    return
  }
  func.func @transform_0(%arg0: i32) -> (i32, i32, i32) {
    %c0_i32 = arith.constant 0 : i32
    %c0_i32_0 = arith.constant 0 : i32
    %c0_i32_1 = arith.constant 0 : i32
    return %arg0, %c0_i32, %c0_i32_0 : i32, i32, i32
  }
  func.func @transform_1(%arg0: i32) -> (i32, i32, i32) {
    %c0_i32 = arith.constant 0 : i32
    %c0_i32_0 = arith.constant 0 : i32
    %c0_i32_1 = arith.constant 0 : i32
    %c0_i32_2 = arith.constant 0 : i32
    return %c0_i32, %c0_i32_0, %c0_i32_1 : i32, i32, i32
  }
  func.func @transform_2(%arg0: i32) -> (i32, i32, i32) {
    %c0_i32 = arith.constant 0 : i32
    %c0_i32_0 = arith.constant 0 : i32
    %c0_i32_1 = arith.constant 0 : i32
    %c0_i32_2 = arith.constant 0 : i32
    return %c0_i32, %c0_i32_0, %c0_i32_1 : i32, i32, i32
  }
  func.func @transform_3(%arg0: i32) -> (i32, i32, i32) {
    %c0_i32 = arith.constant 0 : i32
    %c0_i32_0 = arith.constant 0 : i32
    %c0_i32_1 = arith.constant 0 : i32
    %c0_i32_2 = arith.constant 0 : i32
    return %c0_i32, %c0_i32_0, %c0_i32_1 : i32, i32, i32
  }
  func.func @transform_4(%arg0: i32) -> (i32, i32, i32) {
    %c0_i32 = arith.constant 0 : i32
    %c0_i32_0 = arith.constant 0 : i32
    %c0_i32_1 = arith.constant 0 : i32
    %c0_i32_2 = arith.constant 0 : i32
    return %c0_i32, %c0_i32_0, %c0_i32_1 : i32, i32, i32
  }
  func.func @transform_5(%arg0: i32) -> (i32, i32, i32) {
    %c0_i32 = arith.constant 0 : i32
    %c0_i32_0 = arith.constant 0 : i32
    %c0_i32_1 = arith.constant 0 : i32
    %c0_i32_2 = arith.constant 0 : i32
    return %c0_i32, %c0_i32_0, %c0_i32_1 : i32, i32, i32
  }
  func.func @transform_6(%arg0: i32) -> (i32, i32, i32) {
    %c0_i32 = arith.constant 0 : i32
    %c0_i32_0 = arith.constant 0 : i32
    %c0_i32_1 = arith.constant 0 : i32
    %c0_i32_2 = arith.constant 0 : i32
    return %c0_i32, %c0_i32_0, %c0_i32_1 : i32, i32, i32
  }
  func.func @transform_7(%arg0: i32) -> (i32, i32, i32) {
    %c0_i32 = arith.constant 0 : i32
    %c0_i32_0 = arith.constant 0 : i32
    %c0_i32_1 = arith.constant 0 : i32
    %c0_i32_2 = arith.constant 0 : i32
    return %c0_i32, %c0_i32_0, %c0_i32_1 : i32, i32, i32
  }
  func.func @transform_8(%arg0: i32) -> (i32, i32, i32) {
    %c0_i32 = arith.constant 0 : i32
    %c0_i32_0 = arith.constant 0 : i32
    %c0_i32_1 = arith.constant 0 : i32
    %c0_i32_2 = arith.constant 0 : i32
    return %c0_i32, %c0_i32_0, %c0_i32_1 : i32, i32, i32
  }
  func.func @transform_9(%arg0: i32) -> (i32, i32, i32) {
    %c0_i32 = arith.constant 0 : i32
    %c0_i32_0 = arith.constant 0 : i32
    %c0_i32_1 = arith.constant 0 : i32
    %c0_i32_2 = arith.constant 0 : i32
    return %c0_i32, %c0_i32_0, %c0_i32_1 : i32, i32, i32
  }
  func.func @transform_10(%arg0: i32) -> (i32, i32, i32) {
    %c0_i32 = arith.constant 0 : i32
    %c0_i32_0 = arith.constant 0 : i32
    %c0_i32_1 = arith.constant 0 : i32
    %c0_i32_2 = arith.constant 0 : i32
    return %c0_i32, %c0_i32_0, %c0_i32_1 : i32, i32, i32
  }
  func.func @transform_11(%arg0: i32) -> (i32, i32, i32) {
    %c0_i32 = arith.constant 0 : i32
    %c0_i32_0 = arith.constant 0 : i32
    %c0_i32_1 = arith.constant 0 : i32
    %c0_i32_2 = arith.constant 0 : i32
    return %c0_i32, %c0_i32_0, %c0_i32_1 : i32, i32, i32
  }
  func.func @transform_12(%arg0: i32) -> (i32, i32, i32) {
    %c0_i32 = arith.constant 0 : i32
    %c0_i32_0 = arith.constant 0 : i32
    %c0_i32_1 = arith.constant 0 : i32
    %c0_i32_2 = arith.constant 0 : i32
    return %c0_i32, %c0_i32_0, %c0_i32_1 : i32, i32, i32
  }
  func.func @transform_13(%arg0: i32) -> (i32, i32, i32) {
    %c0_i32 = arith.constant 0 : i32
    %c0_i32_0 = arith.constant 0 : i32
    %c0_i32_1 = arith.constant 0 : i32
    return %arg0, %c0_i32, %c0_i32_0 : i32, i32, i32
  }
}

module attributes {stable_mosaic.version = 11 : i64} {
  func.func @vocab_logits_kernel(%arg0: i32, %arg1: i32, %arg2: memref<1x8x32xbf16, #tpu.memory_space<vmem>>, %arg3: memref<128x32xbf16, #tpu.memory_space<vmem>>, %arg4: memref<1x128xf32, #tpu.memory_space<vmem>>, %arg5: memref<1x8x128xbf16, #tpu.memory_space<vmem>>, %arg6: memref<1x8x1xf32, #tpu.memory_space<vmem>>, %arg7: memref<1x8x1xf32, #tpu.memory_space<vmem>>) attributes {dimension_semantics = [#tpu.dimension_semantics<parallel>, #tpu.dimension_semantics<arbitrary>], iteration_bounds = array<i64: 2, 1>, scalar_prefetch = 0 : i64, scratch_operands = 0 : i64, tpu.core_type = #tpu.core_type<tc>, window_params = [{transform_indices = @transform_0, window_bounds = array<i64: 1, 8, 32>}, {transform_indices = @transform_1, window_bounds = array<i64: 128, 32>}, {transform_indices = @transform_2, window_bounds = array<i64: 1, 128>}, {transform_indices = @transform_3, window_bounds = array<i64: 1, 8, 128>}, {transform_indices = @transform_4, window_bounds = array<i64: 1, 8, 1>}, {transform_indices = @transform_5, window_bounds = array<i64: 1, 8, 1>}]} {
    %c0_i32 = arith.constant 0 : i32
    %0 = arith.cmpi eq, %arg1, %c0_i32 : i32
    %1 = arith.extui %0 : i1 to i32
    %c0_i32_0 = arith.constant 0 : i32
    %2 = arith.cmpi ne, %1, %c0_i32_0 : i32
    scf.if %2 {
      %cst_24 = arith.constant 0xFF800000 : f32
      %37 = vector.broadcast %cst_24 : f32 to vector<1x8x1xf32>
      %c0_25 = arith.constant 0 : index
      %c0_26 = arith.constant 0 : index
      %c0_27 = arith.constant 0 : index
      %38 = vector.load %arg6[%c0_25, %c0_26, %c0_27] : memref<1x8x1xf32, #tpu.memory_space<vmem>>, vector<1x8x1xf32>
      tpu.vector_store %arg6[%c0_25, %c0_26, %c0_27], %37 {strides = array<i32>} : memref<1x8x1xf32, #tpu.memory_space<vmem>>, vector<1x8x1xf32>,
      %cst_28 = arith.constant 0.000000e+00 : f32
      %39 = vector.broadcast %cst_28 : f32 to vector<1x8x1xf32>
      %c0_29 = arith.constant 0 : index
      %c0_30 = arith.constant 0 : index
      %c0_31 = arith.constant 0 : index
      %40 = vector.load %arg7[%c0_29, %c0_30, %c0_31] : memref<1x8x1xf32, #tpu.memory_space<vmem>>, vector<1x8x1xf32>
      tpu.vector_store %arg7[%c0_29, %c0_30, %c0_31], %39 {strides = array<i32>} : memref<1x8x1xf32, #tpu.memory_space<vmem>>, vector<1x8x1xf32>,
    } else {
    }
    %c0 = arith.constant 0 : index
    %c0_1 = arith.constant 0 : index
    %c0_2 = arith.constant 0 : index
    %3 = vector.load %arg2[%c0, %c0_1, %c0_2] : memref<1x8x32xbf16, #tpu.memory_space<vmem>>, vector<1x8x32xbf16>
    %4 = vector.shape_cast %3 : vector<1x8x32xbf16> to vector<8x32xbf16>
    %c0_3 = arith.constant 0 : index
    %c0_4 = arith.constant 0 : index
    %5 = vector.load %arg3[%c0_3, %c0_4] : memref<128x32xbf16, #tpu.memory_space<vmem>>, vector<128x32xbf16>
    %cst = arith.constant dense<0.000000e+00> : vector<8x128xf32>
    %6 = tpu.matmul %4, %5, %cst {dimension_numbers = #tpu.dot_dimension_numbers<[1], [1], [0], [0], [0, 0, 1, 0], [], []>} : vector<8x32xbf16>, vector<128x32xbf16>, vector<8x128xf32> -> vector<8x128xf32>
    %c0_5 = arith.constant 0 : index
    %c0_6 = arith.constant 0 : index
    %7 = vector.load %arg4[%c0_5, %c0_6] : memref<1x128xf32, #tpu.memory_space<vmem>>, vector<1x128xf32>
    %8 = vector.broadcast %7 : vector<1x128xf32> to vector<8x128xf32>
    %9 = arith.addf %6, %8 : vector<8x128xf32>
    %10 = arith.truncf %9 : vector<8x128xf32> to vector<8x128xbf16>
    %c0_7 = arith.constant 0 : index
    %c0_8 = arith.constant 0 : index
    %c0_9 = arith.constant 0 : index
    %11 = vector.load %arg5[%c0_7, %c0_8, %c0_9] : memref<1x8x128xbf16, #tpu.memory_space<vmem>>, vector<1x8x128xbf16>
    %12 = vector.shape_cast %11 : vector<1x8x128xbf16> to vector<8x128xbf16>
    %13 = vector.shape_cast %10 : vector<8x128xbf16> to vector<1x8x128xbf16>
    tpu.vector_store %arg5[%c0_7, %c0_8, %c0_9], %13 {strides = array<i32>} : memref<1x8x128xbf16, #tpu.memory_space<vmem>>, vector<1x8x128xbf16>,
    %14 = arith.extf %10 : vector<8x128xbf16> to vector<8x128xf32>
    %c0_10 = arith.constant 0 : index
    %c0_11 = arith.constant 0 : index
    %c0_12 = arith.constant 0 : index
    %15 = vector.load %arg6[%c0_10, %c0_11, %c0_12] : memref<1x8x1xf32, #tpu.memory_space<vmem>>, vector<1x8x1xf32>
    %16 = vector.shape_cast %15 : vector<1x8x1xf32> to vector<8x1xf32>
    %cst_13 = arith.constant dense<0xFF800000> : vector<8xf32>
    %17 = vector.multi_reduction <maximumf>, %14, %cst_13 [1] : vector<8x128xf32> to vector<8xf32>
    %18 = vector.shape_cast %17 : vector<8xf32> to vector<8x1xf32>
    %19 = arith.maximumf %16, %18 : vector<8x1xf32>
    %c0_14 = arith.constant 0 : index
    %c0_15 = arith.constant 0 : index
    %c0_16 = arith.constant 0 : index
    %20 = vector.load %arg7[%c0_14, %c0_15, %c0_16] : memref<1x8x1xf32, #tpu.memory_space<vmem>>, vector<1x8x1xf32>
    %21 = vector.shape_cast %20 : vector<1x8x1xf32> to vector<8x1xf32>
    %22 = arith.subf %16, %19 : vector<8x1xf32>
    %23 = math.exp %22 : vector<8x1xf32>
    %24 = arith.mulf %21, %23 : vector<8x1xf32>
    %25 = vector.broadcast %19 : vector<8x1xf32> to vector<8x128xf32>
    %26 = arith.subf %14, %25 : vector<8x128xf32>
    %27 = math.exp %26 : vector<8x128xf32>
    %cst_17 = arith.constant dense<0.000000e+00> : vector<8xf32>
    %28 = vector.multi_reduction <add>, %27, %cst_17 [1] : vector<8x128xf32> to vector<8xf32>
    %29 = vector.shape_cast %28 : vector<8xf32> to vector<8x1xf32>
    %30 = arith.addf %24, %29 : vector<8x1xf32>
    %c0_18 = arith.constant 0 : index
    %c0_19 = arith.constant 0 : index
    %c0_20 = arith.constant 0 : index
    %31 = vector.load %arg7[%c0_18, %c0_19, %c0_20] : memref<1x8x1xf32, #tpu.memory_space<vmem>>, vector<1x8x1xf32>
    %32 = vector.shape_cast %31 : vector<1x8x1xf32> to vector<8x1xf32>
    %33 = vector.shape_cast %30 : vector<8x1xf32> to vector<1x8x1xf32>
    tpu.vector_store %arg7[%c0_18, %c0_19, %c0_20], %33 {strides = array<i32>} : memref<1x8x1xf32, #tpu.memory_space<vmem>>, vector<1x8x1xf32>,
    %c0_21 = arith.constant 0 : index
    %c0_22 = arith.constant 0 : index
    %c0_23 = arith.constant 0 : index
    %34 = vector.load %arg6[%c0_21, %c0_22, %c0_23] : memref<1x8x1xf32, #tpu.memory_space<vmem>>, vector<1x8x1xf32>
    %35 = vector.shape_cast %34 : vector<1x8x1xf32> to vector<8x1xf32>
    %36 = vector.shape_cast %19 : vector<8x1xf32> to vector<1x8x1xf32>
    tpu.vector_store %arg6[%c0_21, %c0_22, %c0_23], %36 {strides = array<i32>} : memref<1x8x1xf32, #tpu.memory_space<vmem>>, vector<1x8x1xf32>,
    return
  }
  func.func @transform_0(%arg0: i32, %arg1: i32) -> (i32, i32, i32) {
    %c0_i32 = arith.constant 0 : i32
    %c0_i32_0 = arith.constant 0 : i32
    %c0_i32_1 = arith.constant 0 : i32
    return %arg0, %c0_i32, %c0_i32_0 : i32, i32, i32
  }
  func.func @transform_1(%arg0: i32, %arg1: i32) -> (i32, i32) {
    %c0_i32 = arith.constant 0 : i32
    %c0_i32_0 = arith.constant 0 : i32
    return %arg1, %c0_i32 : i32, i32
  }
  func.func @transform_2(%arg0: i32, %arg1: i32) -> (i32, i32) {
    %c0_i32 = arith.constant 0 : i32
    %c0_i32_0 = arith.constant 0 : i32
    return %c0_i32, %arg1 : i32, i32
  }
  func.func @transform_3(%arg0: i32, %arg1: i32) -> (i32, i32, i32) {
    %c0_i32 = arith.constant 0 : i32
    %c0_i32_0 = arith.constant 0 : i32
    return %arg0, %c0_i32, %arg1 : i32, i32, i32
  }
  func.func @transform_4(%arg0: i32, %arg1: i32) -> (i32, i32, i32) {
    %c0_i32 = arith.constant 0 : i32
    %c0_i32_0 = arith.constant 0 : i32
    %c0_i32_1 = arith.constant 0 : i32
    return %arg0, %c0_i32, %c0_i32_0 : i32, i32, i32
  }
  func.func @transform_5(%arg0: i32, %arg1: i32) -> (i32, i32, i32) {
    %c0_i32 = arith.constant 0 : i32
    %c0_i32_0 = arith.constant 0 : i32
    %c0_i32_1 = arith.constant 0 : i32
    return %arg0, %c0_i32, %c0_i32_0 : i32, i32, i32
  }
}

module attributes {stable_mosaic.version = 11 : i64} {
  func.func @vocab_softmax_kernel(%arg0: i32, %arg1: i32, %arg2: memref<1x8x128xbf16, #tpu.memory_space<vmem>>, %arg3: memref<1x8x1xf32, #tpu.memory_space<vmem>>, %arg4: memref<1x8x1xf32, #tpu.memory_space<vmem>>, %arg5: memref<1x8x128xf32, #tpu.memory_space<vmem>>) attributes {dimension_semantics = [#tpu.dimension_semantics<parallel>, #tpu.dimension_semantics<parallel>], iteration_bounds = array<i64: 2, 1>, scalar_prefetch = 0 : i64, scratch_operands = 0 : i64, tpu.core_type = #tpu.core_type<tc>, window_params = [{transform_indices = @transform_0, window_bounds = array<i64: 1, 8, 128>}, {transform_indices = @transform_1, window_bounds = array<i64: 1, 8, 1>}, {transform_indices = @transform_2, window_bounds = array<i64: 1, 8, 1>}, {transform_indices = @transform_3, window_bounds = array<i64: 1, 8, 128>}]} {
    %c0 = arith.constant 0 : index
    %c0_0 = arith.constant 0 : index
    %c0_1 = arith.constant 0 : index
    %0 = vector.load %arg2[%c0, %c0_0, %c0_1] : memref<1x8x128xbf16, #tpu.memory_space<vmem>>, vector<1x8x128xbf16>
    %1 = vector.shape_cast %0 : vector<1x8x128xbf16> to vector<8x128xbf16>
    %2 = arith.extf %1 : vector<8x128xbf16> to vector<8x128xf32>
    %c0_2 = arith.constant 0 : index
    %c0_3 = arith.constant 0 : index
    %c0_4 = arith.constant 0 : index
    %3 = vector.load %arg3[%c0_2, %c0_3, %c0_4] : memref<1x8x1xf32, #tpu.memory_space<vmem>>, vector<1x8x1xf32>
    %4 = vector.shape_cast %3 : vector<1x8x1xf32> to vector<8x1xf32>
    %5 = vector.broadcast %4 : vector<8x1xf32> to vector<8x128xf32>
    %6 = arith.subf %2, %5 : vector<8x128xf32>
    %7 = math.exp %6 : vector<8x128xf32>
    %c0_5 = arith.constant 0 : index
    %c0_6 = arith.constant 0 : index
    %c0_7 = arith.constant 0 : index
    %8 = vector.load %arg4[%c0_5, %c0_6, %c0_7] : memref<1x8x1xf32, #tpu.memory_space<vmem>>, vector<1x8x1xf32>
    %9 = vector.shape_cast %8 : vector<1x8x1xf32> to vector<8x1xf32>
    %10 = vector.broadcast %9 : vector<8x1xf32> to vector<8x128xf32>
    %11 = arith.divf %7, %10 : vector<8x128xf32>
    %c0_8 = arith.constant 0 : index
    %c0_9 = arith.constant 0 : index
    %c0_10 = arith.constant 0 : index
    %12 = vector.load %arg5[%c0_8, %c0_9, %c0_10] : memref<1x8x128xf32, #tpu.memory_space<vmem>>, vector<1x8x128xf32>
    %13 = vector.shape_cast %12 : vector<1x8x128xf32> to vector<8x128xf32>
    %14 = vector.shape_cast %11 : vector<8x128xf32> to vector<1x8x128xf32>
    tpu.vector_store %arg5[%c0_8, %c0_9, %c0_10], %14 {strides = array<i32>} : memref<1x8x128xf32, #tpu.memory_space<vmem>>, vector<1x8x128xf32>,
    return
  }
  func.func @transform_0(%arg0: i32, %arg1: i32) -> (i32, i32, i32) {
    %c0_i32 = arith.constant 0 : i32
    %c0_i32_0 = arith.constant 0 : i32
    return %arg0, %c0_i32, %arg1 : i32, i32, i32
  }
  func.func @transform_1(%arg0: i32, %arg1: i32) -> (i32, i32, i32) {
    %c0_i32 = arith.constant 0 : i32
    %c0_i32_0 = arith.constant 0 : i32
    %c0_i32_1 = arith.constant 0 : i32
    return %arg0, %c0_i32, %c0_i32_0 : i32, i32, i32
  }
  func.func @transform_2(%arg0: i32, %arg1: i32) -> (i32, i32, i32) {
    %c0_i32 = arith.constant 0 : i32
    %c0_i32_0 = arith.constant 0 : i32
    %c0_i32_1 = arith.constant 0 : i32
    return %arg0, %c0_i32, %c0_i32_0 : i32, i32, i32
  }
  func.func @transform_3(%arg0: i32, %arg1: i32) -> (i32, i32, i32) {
    %c0_i32 = arith.constant 0 : i32
    %c0_i32_0 = arith.constant 0 : i32
    return %arg0, %c0_i32, %arg1 : i32, i32, i32
  }
}

</mosaic_0001>

<llo_original>
// kernel: bert_forward.5
$region0: #{bert_forward.5}
  #allocation0 [shape = 'u32[]', space=smem, size = 0x4, offset = 0x4, fixed_abs, tag = 'smem constant byte address 0x4 - core index']
  #allocation1 [shape = 'u32[72,128]{1,0:T(1,128)}', space=vmem, size = 0x9000, scoped, tag = 'internal scratch']
  %s0 = inlined_call_operand.vmem [shape: bf16[2,8,128], index: 0, kind: input, shape index: {}]
  %s1 = inlined_call_operand.vmem [shape: f32[2,8,1], index: 1, kind: input, shape index: {}]
  %s2 = inlined_call_operand.vmem [shape: f32[2,8,1], index: 2, kind: input, shape index: {}]
  %s3 = inlined_call_operand.hbm [shape: f32[2,8,128], index: 3, kind: output, shape index: {}]
  %s4 = sld [smem:[#allocation0]]
  $region45: #{bert_forward.5} parent=0
    _
  %s6 = ssub.s32 1, %s4
  %s7 = scalar_select 0, %s6, %s4
  $region1: #{bert_forward.5} parent=0
    #allocation2 [shape = 'u8[8192]{0}', space=vmem, size = 0x2000, scoped, tag = 'output window, operand 0']
    #allocation3 [shape = 's32[2]{0}', space=sflag, size = 0x8, scoped, tag = 'scoped memory for bert_forward.5']
    %8 = vsyncpa [#allocation3], 0
    %s9 = scalar_lea.sflag [#allocation3], 1
    %10 = vsyncpa %s9, 0
    loop: start=0, step=1, limit=4
    $region2: #{bert_forward.5} parent=1 // loop_pre_header
      _
    $region3: #{bert_forward.5} parent=1 // loop_header
      %s12 = sphi 0, %s16
      %p13 = scmp.ge.s32.totalorder %s12, 4
      %s19 = sphi 0, %s31
      %s20 = sphi 0, %s27
      %s21 = sphi 0, %s19
      %s22 = sphi 0, %s20
      %s23 = sphi 0, %s21
      %s24 = sphi 0, %s22
      %s36 = sphi 0, %s38
      %s39 = sphi 0, %s36
      %s40 = sphi 0, %s39
      %s56 = sphi 0, %s40
      %s62 = sphi 0, %s64
      %s65 = sphi 0, %s62
      %s66 = sphi 0, %s65
      %s82 = sphi 0, %s66
      %s88 = sphi 0, %s90
      %s91 = sphi 0, %s88
      %s92 = sphi 0, %s91
      %s108 = sphi 0, %s92
      %s116 = sphi 0, %s118
      %s119 = sphi 0, %s116
      %s120 = sphi 0, %s119
      %s136 = sphi 0, %s120
    $region4: #{bert_forward.5} parent=1 // loop_header_branch
      %15 = sbr.rel (%p13) target = $region8
    $region5: #{bert_forward.5} parent=1 // loop_body
      %s17 = ssub.s32 %s12, 1
      %s18 = ssub.s32 %s12, 2
      %s25 = sadd.s32 1, %s20
      %p26 = scmp.ge.s32.totalorder %s25, 1
      %s27 = scalar_select %p26, 0, %s25
      %s28 = sadd.s32 1, %s19
      %s29 = scalar_select %p26, %s28, %s19
      %p30 = scmp.ge.s32.totalorder %s29, 2
      %s31 = scalar_select %p30, 0, %s29
      %s32 = ssub.s32 %s19, %s31
      %s33 = ssub.s32 %s20, %s27
      %s34 = sor.u32 %s32, %s33
      %p35 = scmp.eq.s32.totalorder %s34, 0
      %s37 = sadd.s32 %s36, 1
      %s38 = scalar_select %p35, %s36, %s37
      %p41 = pneg %p35
      %p42 = scmp.eq.s32.totalorder %s12, 1
      %p43 = por %p41, %p42
      %p44 = scmp.ne.s32.totalorder %s36, %s39
      %p45 = scmp.eq.s32.totalorder %s12, 0
      %p46 = por %p44, %p45
      %p47 = scmp.ne.s32.totalorder %s36, %s39
      %p48 = scmp.eq.s32.totalorder %s17, 1
      %p49 = por %p47, %p48
      %p50 = scmp.ne.s32.totalorder %s39, %s40
      %p51 = scmp.eq.s32.totalorder %s17, 0
      %p52 = por %p50, %p51
      %p53 = scmp.ne.s32.totalorder %s39, %s40
      %p54 = scmp.eq.s32.totalorder %s18, 1
      %p55 = por %p53, %p54
      %p57 = scmp.ne.s32.totalorder %s40, %s56
      %p58 = scmp.eq.s32.totalorder %s18, 0
      %p59 = por %p57, %p58
      %s60 = ssub.s32 %s19, %s31
      %p61 = scmp.eq.s32.totalorder %s60, 0
      %s63 = sadd.s32 %s62, 1
      %s64 = scalar_select %p61, %s62, %s63
      %p67 = pneg %p61
      %p68 = scmp.eq.s32.totalorder %s12, 1
      %p69 = por %p67, %p68
      %p70 = scmp.ne.s32.totalorder %s62, %s65
      %p71 = scmp.eq.s32.totalorder %s12, 0
      %p72 = por %p70, %p71
      %p73 = scmp.ne.s32.totalorder %s62, %s65
      %p74 = scmp.eq.s32.totalorder %s17, 1
      %p75 = por %p73, %p74
      %p76 = scmp.ne.s32.totalorder %s65, %s66
      %p77 = scmp.eq.s32.totalorder %s17, 0
      %p78 = por %p76, %p77
      %p79 = scmp.ne.s32.totalorder %s65, %s66
      %p80 = scmp.eq.s32.totalorder %s18, 1
      %p81 = por %p79, %p80
      %p83 = scmp.ne.s32.totalorder %s66, %s82
      %p84 = scmp.eq.s32.totalorder %s18, 0
      %p85 = por %p83, %p84
      %s86 = ssub.s32 %s19, %s31
      %p87 = scmp.eq.s32.totalorder %s86, 0
      %s89 = sadd.s32 %s88, 1
      %s90 = scalar_select %p87, %s88, %s89
      %p93 = pneg %p87
      %p94 = scmp.eq.s32.totalorder %s12, 1
      %p95 = por %p93, %p94
      %p96 = scmp.ne.s32.totalorder %s88, %s91
      %p97 = scmp.eq.s32.totalorder %s12, 0
      %p98 = por %p96, %p97
      %p99 = scmp.ne.s32.totalorder %s88, %s91
      %p100 = scmp.eq.s32.totalorder %s17, 1
      %p101 = por %p99, %p100
      %p102 = scmp.ne.s32.totalorder %s91, %s92
      %p103 = scmp.eq.s32.totalorder %s17, 0
      %p104 = por %p102, %p103
      %p105 = scmp.ne.s32.totalorder %s91, %s92
      %p106 = scmp.eq.s32.totalorder %s18, 1
      %p107 = por %p105, %p106
      %p109 = scmp.ne.s32.totalorder %s92, %s108
      %p110 = scmp.eq.s32.totalorder %s18, 0
      %p111 = por %p109, %p110
      %s112 = ssub.s32 %s19, %s31
      %s113 = ssub.s32 %s20, %s27
      %s114 = sor.u32 %s112, %s113
      %p115 = scmp.eq.s32.totalorder %s114, 0
      %s117 = sadd.s32 %s116, 1
      %s118 = scalar_select %p115, %s116, %s117
      %p121 = pneg %p115
      %p122 = scmp.eq.s32.totalorder %s12, 1
      %p123 = por %p121, %p122
      %p124 = scmp.ne.s32.totalorder %s116, %s119
      %p125 = scmp.eq.s32.totalorder %s12, 0
      %p126 = por %p124, %p125
      %p127 = scmp.ne.s32.totalorder %s116, %s119
      %p128 = scmp.eq.s32.totalorder %s17, 1
      %p129 = por %p127, %p128
      %p130 = scmp.ne.s32.totalorder %s119, %s120
      %p131 = scmp.eq.s32.totalorder %s17, 0
      %p132 = por %p130, %p131
      %p133 = scmp.ne.s32.totalorder %s119, %s120
      %p134 = scmp.eq.s32.totalorder %s18, 1
      %p135 = por %p133, %p134
      %p137 = scmp.ne.s32.totalorder %s120, %s136
      %p138 = scmp.eq.s32.totalorder %s18, 0
      %p139 = por %p137, %p138
      %p140 = scmp.le.s32.totalorder 1, %s12
      %p141 = scmp.lt.s32.totalorder %s12, 3
      %p142 = pnand %p140, %p141
      %p143 = pneg %p142
      // Predicated region
      $region9: #{bert_forward.5} parent=5 // pred_check
        _
      $region10: #{bert_forward.5} parent=5 // pred_check_branch
        %145 = sbr.rel (%p142) target = $region12
      $region11: #{bert_forward.5} parent=5 // pred_region
        %s146 = ssub.s32 %s12, 1
      $region12: #{bert_forward.5} parent=5 // pred_fallthru
        _
      %p147 = scmp.lt.s32.totalorder %s12, 2
      // Predicated region
      $region13: #{bert_forward.5} parent=5 // pred_check
        %p148 = pneg %p147
      $region14: #{bert_forward.5} parent=5 // pred_check_branch
        %150 = sbr.rel (%p148) target = $region16
      $region15: #{bert_forward.5} parent=5 // pred_region
        // Predicated region
        $region17: #{bert_forward.5} parent=15 // pred_check
          %p151 = pneg %p46
        $region18: #{bert_forward.5} parent=15 // pred_check_branch
          %153 = sbr.rel (%p151) target = $region20
        $region19: #{bert_forward.5} parent=15 // pred_region
          %p154 = scmp.lt.s32.totalorder %s19, 1
          %s155 = scalar_select %p154, %s19, 1
          %p156 = scmp.lt.s32.totalorder %s20, 0
          %s157 = scalar_select %p156, %s20, 0
          %s158 = sadd.s32 %s157, %s155
          %s159 = smul.addr %s158, 4
          %s160 = scalar_lea.vmem %s0, %s159
        $region20: #{bert_forward.5} parent=15 // pred_fallthru
          _
        // Predicated region
        $region21: #{bert_forward.5} parent=15 // pred_check
          %p161 = pneg %p72
        $region22: #{bert_forward.5} parent=15 // pred_check_branch
          %163 = sbr.rel (%p161) target = $region24
        $region23: #{bert_forward.5} parent=15 // pred_region
          %p164 = scmp.lt.s32.totalorder %s19, 1
          %s165 = scalar_select %p164, %s19, 1
          %s166 = smul.addr %s165, 8
          %s167 = scalar_lea.vmem %s1, %s166
        $region24: #{bert_forward.5} parent=15 // pred_fallthru
          _
        // Predicated region
        $region25: #{bert_forward.5} parent=15 // pred_check
          %p168 = pneg %p98
        $region26: #{bert_forward.5} parent=15 // pred_check_branch
          %170 = sbr.rel (%p168) target = $region28
        $region27: #{bert_forward.5} parent=15 // pred_region
          %p171 = scmp.lt.s32.totalorder %s19, 1
          %s172 = scalar_select %p171, %s19, 1
          %s173 = smul.addr %s172, 8
          %s174 = scalar_lea.vmem %s2, %s173
        $region28: #{bert_forward.5} parent=15 // pred_fallthru
          _
      $region16: #{bert_forward.5} parent=5 // pred_fallthru
        _
      %p175 = scmp.le.s32.totalorder 1, %s12
      %p176 = scmp.lt.s32.totalorder %s12, 3
      %p177 = pnand %p175, %p176
      %p178 = pneg %p177
      // Predicated region
      $region29: #{bert_forward.5} parent=5 // pred_check
        _
      $region30: #{bert_forward.5} parent=5 // pred_check_branch
        %180 = sbr.rel (%p177) target = $region32
      $region31: #{bert_forward.5} parent=5 // pred_region
        %s181 = ssub.s32 %s12, 1
        %p182 = scmp.lt.s32.totalorder %s21, 1
        %s183 = scalar_select %p182, %s21, 1
        %p184 = scmp.lt.s32.totalorder %s22, 0
        %s185 = scalar_select %p184, %s22, 0
        %s186 = sadd.s32 %s185, %s183
        %s187 = smul.addr %s186, 4
        %s188 = scalar_lea.vmem %s0, %s187
        %p189 = pneg %p52
        %p190 = pneg %p49
        %p191 = scmp.lt.s32.totalorder %s21, 1
        %s192 = scalar_select %p191, %s21, 1
        %s193 = smul.addr %s192, 8
        %s194 = scalar_lea.vmem %s1, %s193
        %p195 = pneg %p78
        %p196 = pneg %p75
        %p197 = scmp.lt.s32.totalorder %s21, 1
        %s198 = scalar_select %p197, %s21, 1
        %s199 = smul.addr %s198, 8
        %s200 = scalar_lea.vmem %s2, %s199
        %p201 = pneg %p104
        %p202 = pneg %p101
        %p203 = pneg %p132
        %p204 = pneg %p129
        %s205 = sand.u32 %s119, 1
        %s206 = scalar_lea.sflag [#allocation3], %s205
        %s207 = sand.u32 %s119, 1
        %s208 = smul.addr %s207, 8
        %s209 = scalar_lea.vmem [#allocation2], %s208
        %p210 = scmp.lt.s32.totalorder %s21, 1
        %s211 = scalar_select %p210, %s21, 1
        %p212 = scmp.lt.s32.totalorder %s22, 0
        %s213 = scalar_select %p212, %s22, 0
        %s214 = sadd.s32 %s213, %s211
        %s215 = smul.addr %s214, 4
        %s216 = scalar_lea.vmem %s0, %s215
        %p217 = scmp.lt.s32.totalorder %s21, 1
        %s218 = scalar_select %p217, %s21, 1
        %s219 = smul.addr %s218, 8
        %s220 = scalar_lea.vmem %s1, %s219
        %p221 = scmp.lt.s32.totalorder %s21, 1
        %s222 = scalar_select %p221, %s21, 1
        %s223 = smul.addr %s222, 8
        %s224 = scalar_lea.vmem %s2, %s223
        %v225 = vld [vmem:[%s216] sm:$0xf]
        %v226 = vunpack.c.l.bf16 %v225
        %v227 = vld [vmem:[%s220] sm:$0xff]
        %229 = vset.pattern.permute.xlu0 0
        %230 = vperm.xlu0 %229, %v227
        %v231 = vpop.permute.xlu0 %230
        %v233 = vsub.f32 %v226, %v231
        %v234 = vmul.f32 %v233, 1.442695
        %v235 = vpow.pop %v234
        %v236 = vld [vmem:[%s224] sm:$0xff]
        %238 = vset.pattern.permute.xlu0 0
        %239 = vperm.xlu0 %238, %v236
        %v240 = vpop.permute.xlu0 %239
        %v242 = vrcp.pop %v240
        %v243 = vmul.f32 %v240, %v242
        %v244 = vsub.f32 1.0, %v243
        %v245 = vmul.f32 %v242, %v244
        %v246 = vadd.f32 %v242, %v245
        %vm247 = vweird.f32 %v240
        %vm248 = vweird.f32 %v242
        %vm249 = vmor %vm247, %vm248
        %v250 = vsel %vm249, %v242, %v246
        %v251 = vand.u32 2147483647, %v240
        %vm252 = vcmp.eq.f32.partialorder %v251, 8.507059e+37
        %v253 = vand.u32 %v240, 2147483648
        %v254 = vor.u32 1.1754944e-38, %v253
        %v255 = vsel %vm252, %v254, %v250
        %v256 = vmul.f32 %v235, %v255
        %257 = vst [vmem:[%s209] sm:$0xff] %v256
        %s258 = sand.u32 %s119, 1
        %s259 = scalar_lea.sflag [#allocation3], %s258
        %s260 = sand.u32 %s119, 1
        %s261 = smul.addr %s260, 8
        %s262 = scalar_lea.vmem [#allocation2], %s261
        // Predicated region
        $region33: #{bert_forward.5} parent=31 // pred_check
          %p263 = pneg %p129
        $region34: #{bert_forward.5} parent=31 // pred_check_branch
          %265 = sbr.rel (%p263) target = $region36
        $region35: #{bert_forward.5} parent=31 // pred_region
          %267 = vsyncadd %s259, 0
          %s268 = sadd.s32 %s22, %s21
          %s269 = smul.addr %s268, 8
          %s270 = scalar_lea.hbm %s3, %s269
          %s272 = sshll.u32 %s262, 4
          %s273 = int_to_ptr.vmem [resolvable:$true] %s272
          %s274 = sshll.u32 %s270, 4
          %s275 = int_to_ptr.hbm [resolvable:$true] %s274
          %277 = dma.vmem_to_hbm [thread:$0]  %s273, 128, %s275, %s259
        $region36: #{bert_forward.5} parent=31 // pred_fallthru
          _
      $region32: #{bert_forward.5} parent=5 // pred_fallthru
        _
      %p278 = scmp.le.s32.totalorder 2, %s12
      // Predicated region
      $region37: #{bert_forward.5} parent=5 // pred_check
        %p279 = pneg %p278
      $region38: #{bert_forward.5} parent=5 // pred_check_branch
        %281 = sbr.rel (%p279) target = $region40
      $region39: #{bert_forward.5} parent=5 // pred_region
        %s282 = ssub.s32 %s12, 2
        // Predicated region
        $region41: #{bert_forward.5} parent=39 // pred_check
          %p283 = pneg %p135
        $region42: #{bert_forward.5} parent=39 // pred_check_branch
          %285 = sbr.rel (%p283) target = $region44
        $region43: #{bert_forward.5} parent=39 // pred_region
          %s286 = sand.u32 %s120, 1
          %s287 = scalar_lea.sflag [#allocation3], %s286
          %s288 = sand.u32 %s120, 1
          %s289 = smul.addr %s288, 8
          %s290 = scalar_lea.vmem [#allocation2], %s289
          %292 = dma.done %s287, 128
        $region44: #{bert_forward.5} parent=39 // pred_fallthru
          _
      $region40: #{bert_forward.5} parent=5 // pred_fallthru
        _
    $region6: #{bert_forward.5} parent=1 // loop_footer
      %s16 = sadd.s32 1, %s12
    $region7: #{bert_forward.5} parent=1 // loop_footer_branch
      %11 = sbr.rel target = $region3
    $region8: #{bert_forward.5} parent=1 // loop_exit
      _
    %293 = vsyncpa [#allocation3], 1
    %s294 = scalar_lea.sflag [#allocation3], 1
    %295 = vsyncpa %s294, 1

// kernel: bert_forward.4
$region0: #{bert_forward.4}
  #allocation0 [shape = 'u32[]', space=smem, size = 0x4, offset = 0x4, fixed_abs, tag = 'smem constant byte address 0x4 - core index']
  #allocation1 [shape = 'u32[72,128]{1,0:T(1,128)}', space=vmem, size = 0x9000, scoped, tag = 'internal scratch']
  %s0 = inlined_call_operand.vmem [shape: bf16[2,8,32], index: 0, kind: input, shape index: {}]
  %s1 = inlined_call_operand.vmem [shape: bf16[128,32], index: 1, kind: input, shape index: {}]
  %s2 = inlined_call_operand.vmem [shape: f32[1,128], index: 2, kind: input, shape index: {}]
  %s3 = inlined_call_operand.vmem [shape: bf16[2,8,128], index: 3, kind: output, shape index: {0}]
  %s4 = inlined_call_operand.vmem [shape: f32[2,8,1], index: 4, kind: output, shape index: {1}]
  %s5 = inlined_call_operand.vmem [shape: f32[2,8,1], index: 5, kind: output, shape index: {2}]
  %6 = xla_tuple %s3, %s4, %s5
  %s7 = sld [smem:[#allocation0]]
  $region65: #{bert_forward.4} parent=0
    _
  %s9 = ssub.s32 1, %s7
  %s10 = scalar_select 0, %s9, %s7
  loop: start=0, step=1, limit=4
  $region2: #{bert_forward.4} parent=0 // loop_pre_header
    _
  $region3: #{bert_forward.4} parent=0 // loop_header
    %s12 = sphi 0, %s16
    %p13 = scmp.ge.s32.totalorder %s12, 4
    %s19 = sphi 0, %s31
    %s20 = sphi 0, %s27
    %s21 = sphi 0, %s19
    %s22 = sphi 0, %s20
    %s23 = sphi 0, %s21
    %s24 = sphi 0, %s22
    %s34 = sphi 0, %s36
    %s37 = sphi 0, %s34
    %s38 = sphi 0, %s37
    %s54 = sphi 0, %s38
    %s60 = sphi 0, %s62
    %s63 = sphi 0, %s60
    %s64 = sphi 0, %s63
    %s80 = sphi 0, %s64
    %s86 = sphi 0, %s88
    %s89 = sphi 0, %s86
    %s90 = sphi 0, %s89
    %s106 = sphi 0, %s90
    %s114 = sphi 0, %s116
    %s117 = sphi 0, %s114
    %s118 = sphi 0, %s117
    %s134 = sphi 0, %s118
    %s140 = sphi 0, %s142
    %s143 = sphi 0, %s140
    %s144 = sphi 0, %s143
    %s160 = sphi 0, %s144
    %s166 = sphi 0, %s168
    %s169 = sphi 0, %s166
    %s170 = sphi 0, %s169
    %s186 = sphi 0, %s170
  $region4: #{bert_forward.4} parent=0 // loop_header_branch
    %15 = sbr.rel (%p13) target = $region8
  $region5: #{bert_forward.4} parent=0 // loop_body
    %s17 = ssub.s32 %s12, 1
    %s18 = ssub.s32 %s12, 2
    %s25 = sadd.s32 1, %s20
    %p26 = scmp.ge.s32.totalorder %s25, 1
    %s27 = scalar_select %p26, 0, %s25
    %s28 = sadd.s32 1, %s19
    %s29 = scalar_select %p26, %s28, %s19
    %p30 = scmp.ge.s32.totalorder %s29, 2
    %s31 = scalar_select %p30, 0, %s29
    %s32 = ssub.s32 %s19, %s31
    %p33 = scmp.eq.s32.totalorder %s32, 0
    %s35 = sadd.s32 %s34, 1
    %s36 = scalar_select %p33, %s34, %s35
    %p39 = pneg %p33
    %p40 = scmp.eq.s32.totalorder %s12, 1
    %p41 = por %p39, %p40
    %p42 = scmp.ne.s32.totalorder %s34, %s37
    %p43 = scmp.eq.s32.totalorder %s12, 0
    %p44 = por %p42, %p43
    %p45 = scmp.ne.s32.totalorder %s34, %s37
    %p46 = scmp.eq.s32.totalorder %s17, 1
    %p47 = por %p45, %p46
    %p48 = scmp.ne.s32.totalorder %s37, %s38
    %p49 = scmp.eq.s32.totalorder %s17, 0
    %p50 = por %p48, %p49
    %p51 = scmp.ne.s32.totalorder %s37, %s38
    %p52 = scmp.eq.s32.totalorder %s18, 1
    %p53 = por %p51, %p52
    %p55 = scmp.ne.s32.totalorder %s38, %s54
    %p56 = scmp.eq.s32.totalorder %s18, 0
    %p57 = por %p55, %p56
    %s58 = ssub.s32 %s20, %s27
    %p59 = scmp.eq.s32.totalorder %s58, 0
    %s61 = sadd.s32 %s60, 1
    %s62 = scalar_select %p59, %s60, %s61
    %p65 = pneg %p59
    %p66 = scmp.eq.s32.totalorder %s12, 1
    %p67 = por %p65, %p66
    %p68 = scmp.ne.s32.totalorder %s60, %s63
    %p69 = scmp.eq.s32.totalorder %s12, 0
    %p70 = por %p68, %p69
    %p71 = scmp.ne.s32.totalorder %s60, %s63
    %p72 = scmp.eq.s32.totalorder %s17, 1
    %p73 = por %p71, %p72
    %p74 = scmp.ne.s32.totalorder %s63, %s64
    %p75 = scmp.eq.s32.totalorder %s17, 0
    %p76 = por %p74, %p75
    %p77 = scmp.ne.s32.totalorder %s63, %s64
    %p78 = scmp.eq.s32.totalorder %s18, 1
    %p79 = por %p77, %p78
    %p81 = scmp.ne.s32.totalorder %s64, %s80
    %p82 = scmp.eq.s32.totalorder %s18, 0
    %p83 = por %p81, %p82
    %s84 = ssub.s32 %s20, %s27
    %p85 = scmp.eq.s32.totalorder %s84, 0
    %s87 = sadd.s32 %s86, 1
    %s88 = scalar_select %p85, %s86, %s87
    %p91 = pneg %p85
    %p92 = scmp.eq.s32.totalorder %s12, 1
    %p93 = por %p91, %p92
    %p94 = scmp.ne.s32.totalorder %s86, %s89
    %p95 = scmp.eq.s32.totalorder %s12, 0
    %p96 = por %p94, %p95
    %p97 = scmp.ne.s32.totalorder %s86, %s89
    %p98 = scmp.eq.s32.totalorder %s17, 1
    %p99 = por %p97, %p98
    %p100 = scmp.ne.s32.totalorder %s89, %s90
    %p101 = scmp.eq.s32.totalorder %s17, 0
    %p102 = por %p100, %p101
    %p103 = scmp.ne.s32.totalorder %s89, %s90
    %p104 = scmp.eq.s32.totalorder %s18, 1
    %p105 = por %p103, %p104
    %p107 = scmp.ne.s32.totalorder %s90, %s106
    %p108 = scmp.eq.s32.totalorder %s18, 0
    %p109 = por %p107, %p108
    %s110 = ssub.s32 %s19, %s31
    %s111 = ssub.s32 %s20, %s27
    %s112 = sor.u32 %s110, %s111
    %p113 = scmp.eq.s32.totalorder %s112, 0
    %s115 = sadd.s32 %s114, 1
    %s116 = scalar_select %p113, %s114, %s115
    %p119 = pneg %p113
    %p120 = scmp.eq.s32.totalorder %s12, 1
    %p121 = por %p119, %p120
    %p122 = scmp.ne.s32.totalorder %s114, %s117
    %p123 = scmp.eq.s32.totalorder %s12, 0
    %p124 = por %p122, %p123
    %p125 = scmp.ne.s32.totalorder %s114, %s117
    %p126 = scmp.eq.s32.totalorder %s17, 1
    %p127 = por %p125, %p126
    %p128 = scmp.ne.s32.totalorder %s117, %s118
    %p129 = scmp.eq.s32.totalorder %s17, 0
    %p130 = por %p128, %p129
    %p131 = scmp.ne.s32.totalorder %s117, %s118
    %p132 = scmp.eq.s32.totalorder %s18, 1
    %p133 = por %p131, %p132
    %p135 = scmp.ne.s32.totalorder %s118, %s134
    %p136 = scmp.eq.s32.totalorder %s18, 0
    %p137 = por %p135, %p136
    %s138 = ssub.s32 %s19, %s31
    %p139 = scmp.eq.s32.totalorder %s138, 0
    %s141 = sadd.s32 %s140, 1
    %s142 = scalar_select %p139, %s140, %s141
    %p145 = pneg %p139
    %p146 = scmp.eq.s32.totalorder %s12, 1
    %p147 = por %p145, %p146
    %p148 = scmp.ne.s32.totalorder %s140, %s143
    %p149 = scmp.eq.s32.totalorder %s12, 0
    %p150 = por %p148, %p149
    %p151 = scmp.ne.s32.totalorder %s140, %s143
    %p152 = scmp.eq.s32.totalorder %s17, 1
    %p153 = por %p151, %p152
    %p154 = scmp.ne.s32.totalorder %s143, %s144
    %p155 = scmp.eq.s32.totalorder %s17, 0
    %p156 = por %p154, %p155
    %p157 = scmp.ne.s32.totalorder %s143, %s144
    %p158 = scmp.eq.s32.totalorder %s18, 1
    %p159 = por %p157, %p158
    %p161 = scmp.ne.s32.totalorder %s144, %s160
    %p162 = scmp.eq.s32.totalorder %s18, 0
    %p163 = por %p161, %p162
    %s164 = ssub.s32 %s19, %s31
    %p165 = scmp.eq.s32.totalorder %s164, 0
    %s167 = sadd.s32 %s166, 1
    %s168 = scalar_select %p165, %s166, %s167
    %p171 = pneg %p165
    %p172 = scmp.eq.s32.totalorder %s12, 1
    %p173 = por %p171, %p172
    %p174 = scmp.ne.s32.totalorder %s166, %s169
    %p175 = scmp.eq.s32.totalorder %s12, 0
    %p176 = por %p174, %p175
    %p177 = scmp.ne.s32.totalorder %s166, %s169
    %p178 = scmp.eq.s32.totalorder %s17, 1
    %p179 = por %p177, %p178
    %p180 = scmp.ne.s32.totalorder %s169, %s170
    %p181 = scmp.eq.s32.totalorder %s17, 0
    %p182 = por %p180, %p181
    %p183 = scmp.ne.s32.totalorder %s169, %s170
    %p184 = scmp.eq.s32.totalorder %s18, 1
    %p185 = por %p183, %p184
    %p187 = scmp.ne.s32.totalorder %s170, %s186
    %p188 = scmp.eq.s32.totalorder %s18, 0
    %p189 = por %p187, %p188
    %p190 = scmp.le.s32.totalorder 1, %s12
    %p191 = scmp.lt.s32.totalorder %s12, 3
    %p192 = pnand %p190, %p191
    %p193 = pneg %p192
    // Predicated region
    $region9: #{bert_forward.4} parent=5 // pred_check
      _
    $region10: #{bert_forward.4} parent=5 // pred_check_branch
      %195 = sbr.rel (%p192) target = $region12
    $region11: #{bert_forward.4} parent=5 // pred_region
      %s196 = ssub.s32 %s12, 1
      // Predicated region
      $region13: #{bert_forward.4} parent=11 // pred_check
        %p197 = pneg %p76
      $region14: #{bert_forward.4} parent=11 // pred_check_branch
        %199 = sbr.rel (%p197) target = $region16
      $region15: #{bert_forward.4} parent=11 // pred_region
        %s200 = smul.u32 16, %s22
        %p201 = scmp.lt.s32.totalorder %s200, 15
        %s202 = scalar_select %p201, %s200, 15
        %s203 = smul.addr %s202, 4
        %s204 = scalar_lea.vmem %s1, %s203
        %s205 = smul.u32 16, %s22
      $region16: #{bert_forward.4} parent=11 // pred_fallthru
        _
      // Predicated region
      $region17: #{bert_forward.4} parent=11 // pred_check
        %p206 = pneg %p102
      $region18: #{bert_forward.4} parent=11 // pred_check_branch
        %208 = sbr.rel (%p206) target = $region20
      $region19: #{bert_forward.4} parent=11 // pred_region
        %p209 = scmp.lt.s32.totalorder %s22, 0
        %s210 = scalar_select %p209, %s22, 0
        %s211 = scalar_lea.vmem %s2, %s210
      $region20: #{bert_forward.4} parent=11 // pred_fallthru
        _
    $region12: #{bert_forward.4} parent=5 // pred_fallthru
      _
    %p212 = scmp.lt.s32.totalorder %s12, 2
    // Predicated region
    $region21: #{bert_forward.4} parent=5 // pred_check
      %p213 = pneg %p212
    $region22: #{bert_forward.4} parent=5 // pred_check_branch
      %215 = sbr.rel (%p213) target = $region24
    $region23: #{bert_forward.4} parent=5 // pred_region
      // Predicated region
      $region25: #{bert_forward.4} parent=23 // pred_check
        %p216 = pneg %p44
      $region26: #{bert_forward.4} parent=23 // pred_check_branch
        %218 = sbr.rel (%p216) target = $region28
      $region27: #{bert_forward.4} parent=23 // pred_region
        %p219 = scmp.lt.s32.totalorder %s19, 1
        %s220 = scalar_select %p219, %s19, 1
        %s221 = smul.addr %s220, 4
        %s222 = scalar_lea.vmem %s0, %s221
      $region28: #{bert_forward.4} parent=23 // pred_fallthru
        _
    $region24: #{bert_forward.4} parent=5 // pred_fallthru
      _
    %p223 = scmp.le.s32.totalorder 1, %s12
    %p224 = scmp.lt.s32.totalorder %s12, 3
    %p225 = pnand %p223, %p224
    %p226 = pneg %p225
    // Predicated region
    $region29: #{bert_forward.4} parent=5 // pred_check
      _
    $region30: #{bert_forward.4} parent=5 // pred_check_branch
      %228 = sbr.rel (%p225) target = $region32
    $region31: #{bert_forward.4} parent=5 // pred_region
      %s229 = ssub.s32 %s12, 1
      %p230 = scmp.lt.s32.totalorder %s21, 1
      %s231 = scalar_select %p230, %s21, 1
      %s232 = smul.addr %s231, 4
      %s233 = scalar_lea.vmem %s0, %s232
      %p234 = pneg %p50
      %p235 = pneg %p47
      %s236 = smul.u32 16, %s22
      %p237 = scmp.lt.s32.totalorder %s236, 15
      %s238 = scalar_select %p237, %s236, 15
      %s239 = smul.addr %s238, 4
      %s240 = scalar_lea.vmem %s1, %s239
      %p241 = pneg %p76
      %p242 = pneg %p73
      %p243 = scmp.lt.s32.totalorder %s22, 0
      %s244 = scalar_select %p243, %s22, 0
      %s245 = scalar_lea.vmem %s2, %s244
      %p246 = pneg %p102
      %p247 = pneg %p99
      %p248 = pneg %p130
      %p249 = pneg %p127
      %p250 = scmp.lt.s32.totalorder %s21, 1
      %s251 = scalar_select %p250, %s21, 1
      %p252 = scmp.lt.s32.totalorder %s22, 0
      %s253 = scalar_select %p252, %s22, 0
      %s254 = sadd.s32 %s253, %s251
      %s255 = smul.addr %s254, 4
      %s256 = scalar_lea.vmem %s3, %s255
      %p257 = pneg %p156
      %p258 = pneg %p153
      %p259 = scmp.lt.s32.totalorder %s21, 1
      %s260 = scalar_select %p259, %s21, 1
      %s261 = smul.addr %s260, 8
      %s262 = scalar_lea.vmem %s4, %s261
      %p263 = pneg %p182
      %p264 = pneg %p179
      %p265 = scmp.lt.s32.totalorder %s21, 1
      %s266 = scalar_select %p265, %s21, 1
      %s267 = smul.addr %s266, 8
      %s268 = scalar_lea.vmem %s5, %s267
      %p269 = scmp.lt.s32.totalorder %s21, 1
      %s270 = scalar_select %p269, %s21, 1
      %s271 = smul.addr %s270, 4
      %s272 = scalar_lea.vmem %s0, %s271
      %s273 = smul.u32 16, %s22
      %p274 = scmp.lt.s32.totalorder %s273, 15
      %s275 = scalar_select %p274, %s273, 15
      %s276 = smul.addr %s275, 4
      %s277 = scalar_lea.vmem %s1, %s276
      %s278 = smul.u32 16, %s22
      %p279 = scmp.lt.s32.totalorder %s22, 0
      %s280 = scalar_select %p279, %s22, 0
      %s281 = scalar_lea.vmem %s2, %s280
      %p282 = scmp.lt.s32.totalorder %s21, 1
      %s283 = scalar_select %p282, %s21, 1
      %p284 = scmp.lt.s32.totalorder %s22, 0
      %s285 = scalar_select %p284, %s22, 0
      %s286 = sadd.s32 %s285, %s283
      %s287 = smul.addr %s286, 4
      %s288 = scalar_lea.vmem %s3, %s287
      %p289 = scmp.lt.s32.totalorder %s21, 1
      %s290 = scalar_select %p289, %s21, 1
      %s291 = smul.addr %s290, 8
      %s292 = scalar_lea.vmem %s4, %s291
      %p293 = scmp.lt.s32.totalorder %s21, 1
      %s294 = scalar_select %p293, %s21, 1
      %s295 = smul.addr %s294, 8
      %s296 = scalar_lea.vmem %s5, %s295
      %p297 = scmp.eq.s32.totalorder %s22, 0
      // Predicated region
      $region33: #{bert_forward.4} parent=31 // pred_check
        %p298 = pneg %p297
      $region34: #{bert_forward.4} parent=31 // pred_check_branch
        %300 = sbr.rel (%p298) target = $region36
      $region35: #{bert_forward.4} parent=31 // pred_region
        %vm301 = vcmask 7168
        %302 = vst.msk [vmem:[%s292] sm:$0xff] %vm301, -inf
        %303 = vst.msk [vmem:[%s296] sm:$0xff] %vm301, 0.0
      $region36: #{bert_forward.4} parent=31 // pred_fallthru
        _
      %v304 = vld [vmem:[%s272] sm:$0xf]
      %v305 = vld [vmem:[%s277] sm:$0xf]
      %v306 = vld [vmem:[%s277 + $0x4] sm:$0xf]
      %v307 = vld [vmem:[%s277 + $0x8] sm:$0xf]
      %v308 = vld [vmem:[%s277 + $0xc] sm:$0xf]
      %v309 = vld [vmem:[%s277 + $0x10] sm:$0xf]
      %v310 = vld [vmem:[%s277 + $0x14] sm:$0xf]
      %v311 = vld [vmem:[%s277 + $0x18] sm:$0xf]
      %v312 = vld [vmem:[%s277 + $0x1c] sm:$0xf]
      %v313 = vld [vmem:[%s277 + $0x20] sm:$0xf]
      %v314 = vld [vmem:[%s277 + $0x24] sm:$0xf]
      %v315 = vld [vmem:[%s277 + $0x28] sm:$0xf]
      %v316 = vld [vmem:[%s277 + $0x2c] sm:$0xf]
      %v317 = vld [vmem:[%s277 + $0x30] sm:$0xf]
      %v318 = vld [vmem:[%s277 + $0x34] sm:$0xf]
      %v319 = vld [vmem:[%s277 + $0x38] sm:$0xf]
      %v320 = vld [vmem:[%s277 + $0x3c] sm:$0xf]
      %v321 = vld [vmem:[%s281] sm:$0x1]
      %v323 = vperm.slane %v321, 0
      %v341 = vunpack.c.l.b16 %v305
      %v342 = vunpack.c.l.b16 %v306
      %v343 = vunpack.c.l.b16 %v307
      %v344 = vunpack.c.l.b16 %v308
      %v345 = vunpack.c.l.b16 %v309
      %v346 = vunpack.c.l.b16 %v310
      %v347 = vunpack.c.l.b16 %v311
      %v348 = vunpack.c.l.b16 %v312
      %v349 = vunpack.c.l.b16 %v313
      %v350 = vunpack.c.l.b16 %v314
      %v351 = vunpack.c.l.b16 %v315
      %v352 = vunpack.c.l.b16 %v316
      %v353 = vunpack.c.l.b16 %v317
      %v354 = vunpack.c.l.b16 %v318
      %v355 = vunpack.c.l.b16 %v319
      %v356 = vunpack.c.l.b16 %v320
      %v357 = vpack.c.b16 %v342, %v341
      %v358 = vpack.c.b16 %v344, %v343
      %v359 = vpack.c.b16 %v346, %v345
      %v360 = vpack.c.b16 %v348, %v347
      %v361 = vpack.c.b16 %v350, %v349
      %v362 = vpack.c.b16 %v352, %v351
      %v363 = vpack.c.b16 %v354, %v353
      %v364 = vpack.c.b16 %v356, %v355
      %vm365 = vcmask 261120
      %v367 = vsel %vm365, %v304, 0
      %v370 = vsel %vm365, %v357, 0
      %v373 = vsel %vm365, %v358, 0
      %v376 = vsel %vm365, %v359, 0
      %v379 = vsel %vm365, %v360, 0
      %v382 = vsel %vm365, %v361, 0
      %v385 = vsel %vm365, %v362, 0
      %v388 = vsel %vm365, %v363, 0
      %v391 = vsel %vm365, %v364, 0
      %393 = vmatpush.bf16.xpose.msra.mxu0 %v391
      %394 = vmatpush.bf16.xpose.msra.mxu0 %v388
      %395 = vmatpush.bf16.xpose.msra.mxu0 %v385
      %396 = vmatpush.bf16.xpose.msra.mxu0 %v382
      %397 = vmatpush.bf16.xpose.msra.mxu0 %v379
      %398 = vmatpush.bf16.xpose.msra.mxu0 %v376
      %399 = vmatpush.bf16.xpose.msra.mxu0 %v373
      %400 = vmatpush.bf16.xpose.msra.mxu0 %v370
      %401 = vmatmul.bf16.gmra.mxu0 %v367
      %v402 = vpop.f32.mrf.mxu0
      %v403 = vadd.f32 %v323, %v402
      %v404 = vpop.f32.mrf.mxu0
      %405 = vdwg.mxu0
      %v406 = vpack.c.bf16 %v403, %v403
      %407 = vst [vmem:[%s288] sm:$0xf] %v406
      %v408 = vunpack.c.l.bf16 %v406
      %v409 = vld [vmem:[%s292] sm:$0xff]
      %410 = vmax.xlane.f32.xlu0 %v408
      %v411 = vpop.xlane.xlu0 %410
      %v412 = vmax.f32 %v409, %v411
      %v413 = vld [vmem:[%s296] sm:$0xff]
      %v414 = vsub.f32 %v409, %v412
      %v415 = vmul.f32 %v414, 1.442695
      %v416 = vpow.pop %v415
      %v417 = vmul.f32 %v413, %v416
      %419 = vset.pattern.permute.xlu0 0
      %420 = vperm.xlu0 %419, %v412
      %v421 = vpop.permute.xlu0 %420
      %v423 = vsub.f32 %v408, %v421
      %v424 = vmul.f32 %v423, 1.442695
      %v425 = vpow.pop %v424
      %426 = vadd.xlane.f32.xlu0 %v425
      %v427 = vpop.xlane.xlu0 %426
      %v428 = vadd.f32 %v417, %v427
      %vm429 = vcmask 7168
      %430 = vst.msk [vmem:[%s296] sm:$0xff] %vm429, %v428
      %431 = vst.msk [vmem:[%s292] sm:$0xff] %vm429, %v412
      %p432 = scmp.lt.s32.totalorder %s21, 1
      %s433 = scalar_select %p432, %s21, 1
      %p434 = scmp.lt.s32.totalorder %s22, 0
      %s435 = scalar_select %p434, %s22, 0
      %s436 = sadd.s32 %s435, %s433
      %s437 = smul.addr %s436, 4
      %s438 = scalar_lea.vmem %s3, %s437
      %p439 = scmp.lt.s32.totalorder %s21, 1
      %s440 = scalar_select %p439, %s21, 1
      %s441 = smul.addr %s440, 8
      %s442 = scalar_lea.vmem %s4, %s441
      %p443 = scmp.lt.s32.totalorder %s21, 1
      %s444 = scalar_select %p443, %s21, 1
      %s445 = smul.addr %s444, 8
      %s446 = scalar_lea.vmem %s5, %s445
      // Predicated region
      $region37: #{bert_forward.4} parent=31 // pred_check
        %p447 = pneg %p127
      $region38: #{bert_forward.4} parent=31 // pred_check_branch
        %449 = sbr.rel (%p447) target = $region40
      $region39: #{bert_forward.4} parent=31 // pred_region
        _
      $region40: #{bert_forward.4} parent=31 // pred_fallthru
        _
      // Predicated region
      $region41: #{bert_forward.4} parent=31 // pred_check
        %p450 = pneg %p153
      $region42: #{bert_forward.4} parent=31 // pred_check_branch
        %452 = sbr.rel (%p450) target = $region44
      $region43: #{bert_forward.4} parent=31 // pred_region
        _
      $region44: #{bert_forward.4} parent=31 // pred_fallthru
        _
      // Predicated region
      $region45: #{bert_forward.4} parent=31 // pred_check
        %p453 = pneg %p179
      $region46: #{bert_forward.4} parent=31 // pred_check_branch
        %455 = sbr.rel (%p453) target = $region48
      $region47: #{bert_forward.4} parent=31 // pred_region
        _
      $region48: #{bert_forward.4} parent=31 // pred_fallthru
        _
    $region32: #{bert_forward.4} parent=5 // pred_fallthru
      _
    %p456 = scmp.le.s32.totalorder 2, %s12
    // Predicated region
    $region49: #{bert_forward.4} parent=5 // pred_check
      %p457 = pneg %p456
    $region50: #{bert_forward.4} parent=5 // pred_check_branch
      %459 = sbr.rel (%p457) target = $region52
    $region51: #{bert_forward.4} parent=5 // pred_region
      %s460 = ssub.s32 %s12, 2
      // Predicated region
      $region53: #{bert_forward.4} parent=51 // pred_check
        %p461 = pneg %p133
      $region54: #{bert_forward.4} parent=51 // pred_check_branch
        %463 = sbr.rel (%p461) target = $region56
      $region55: #{bert_forward.4} parent=51 // pred_region
        %p464 = scmp.lt.s32.totalorder %s23, 1
        %s465 = scalar_select %p464, %s23, 1
        %p466 = scmp.lt.s32.totalorder %s24, 0
        %s467 = scalar_select %p466, %s24, 0
        %s468 = sadd.s32 %s467, %s465
        %s469 = smul.addr %s468, 4
        %s470 = scalar_lea.vmem %s3, %s469
      $region56: #{bert_forward.4} parent=51 // pred_fallthru
        _
      // Predicated region
      $region57: #{bert_forward.4} parent=51 // pred_check
        %p471 = pneg %p159
      $region58: #{bert_forward.4} parent=51 // pred_check_branch
        %473 = sbr.rel (%p471) target = $region60
      $region59: #{bert_forward.4} parent=51 // pred_region
        %p474 = scmp.lt.s32.totalorder %s23, 1
        %s475 = scalar_select %p474, %s23, 1
        %s476 = smul.addr %s475, 8
        %s477 = scalar_lea.vmem %s4, %s476
      $region60: #{bert_forward.4} parent=51 // pred_fallthru
        _
      // Predicated region
      $region61: #{bert_forward.4} parent=51 // pred_check
        %p478 = pneg %p185
      $region62: #{bert_forward.4} parent=51 // pred_check_branch
        %480 = sbr.rel (%p478) target = $region64
      $region63: #{bert_forward.4} parent=51 // pred_region
        %p481 = scmp.lt.s32.totalorder %s23, 1
        %s482 = scalar_select %p481, %s23, 1
        %s483 = smul.addr %s482, 8
        %s484 = scalar_lea.vmem %s5, %s483
      $region64: #{bert_forward.4} parent=51 // pred_fallthru
        _
    $region52: #{bert_forward.4} parent=5 // pred_fallthru
      _
  $region6: #{bert_forward.4} parent=0 // loop_footer
    %s16 = sadd.s32 1, %s12
  $region7: #{bert_forward.4} parent=0 // loop_footer_branch
    %11 = sbr.rel target = $region3
  $region8: #{bert_forward.4} parent=0 // loop_exit
    _

// kernel: bert_forward.3
$region0: #{bert_forward.3}
  #allocation0 [shape = 'u32[]', space=smem, size = 0x4, offset = 0x4, fixed_abs, tag = 'smem constant byte address 0x4 - core index']
  #allocation1 [shape = 'u32[72,128]{1,0:T(1,128)}', space=vmem, size = 0x9000, scoped, tag = 'internal scratch']
  %s0 = inlined_call_operand.vmem [shape: f32[2,8,32], index: 0, kind: input, shape index: {}]
  %s1 = inlined_call_operand.vmem [shape: bf16[2,96,32], index: 1, kind: input, shape index: {}]
  %s2 = inlined_call_operand.vmem [shape: f32[2,1,96], index: 2, kind: input, shape index: {}]
  %s3 = inlined_call_operand.vmem [shape: bf16[2,32,32], index: 3, kind: input, shape index: {}]
  %s4 = inlined_call_operand.vmem [shape: f32[2,1,32], index: 4, kind: input, shape index: {}]
  %s5 = inlined_call_operand.vmem [shape: f32[2,8,32], index: 5, kind: input, shape index: {}]
  %s6 = inlined_call_operand.vmem [shape: f32[2,8,32], index: 6, kind: input, shape index: {}]
  %s7 = inlined_call_operand.vmem [shape: bf16[2,128,32], index: 7, kind: input, shape index: {}]
  %s8 = inlined_call_operand.vmem [shape: f32[2,1,128], index: 8, kind: input, shape index: {}]
  %s9 = inlined_call_operand.vmem [shape: bf16[2,32,128], index: 9, kind: input, shape index: {}]
  %s10 = inlined_call_operand.vmem [shape: f32[2,1,32], index: 10, kind: input, shape index: {}]
  %s11 = inlined_call_operand.vmem [shape: f32[2,8,32], index: 11, kind: input, shape index: {}]
  %s12 = inlined_call_operand.vmem [shape: f32[2,8,32], index: 12, kind: input, shape index: {}]
  %s13 = inlined_call_operand.vmem [shape: f32[2,8,32], index: 13, kind: output, shape index: {}]
  %s14 = sld [smem:[#allocation0]]
  $region85: #{bert_forward.3} parent=0
    _
  %s16 = ssub.s32 1, %s14
  %s17 = scalar_select 0, %s16, %s14
  loop: start=0, step=1, limit=4
  $region2: #{bert_forward.3} parent=0 // loop_pre_header
    _
  $region3: #{bert_forward.3} parent=0 // loop_header
    %s19 = sphi 0, %s23
    %p20 = scmp.ge.s32.totalorder %s19, 4
    %s29 = sphi 0, %s31
    %s32 = sphi 0, %s29
    %s33 = sphi 0, %s32
    %s49 = sphi 0, %s33
    %s53 = sphi 0, %s53
    %s55 = sphi 0, %s53
    %s56 = sphi 0, %s55
    %s70 = sphi 0, %s56
    %s74 = sphi 0, %s74
    %s76 = sphi 0, %s74
    %s77 = sphi 0, %s76
    %s91 = sphi 0, %s77
    %s95 = sphi 0, %s95
    %s97 = sphi 0, %s95
    %s98 = sphi 0, %s97
    %s112 = sphi 0, %s98
    %s116 = sphi 0, %s116
    %s118 = sphi 0, %s116
    %s119 = sphi 0, %s118
    %s133 = sphi 0, %s119
    %s137 = sphi 0, %s137
    %s139 = sphi 0, %s137
    %s140 = sphi 0, %s139
    %s154 = sphi 0, %s140
    %s158 = sphi 0, %s158
    %s160 = sphi 0, %s158
    %s161 = sphi 0, %s160
    %s175 = sphi 0, %s161
    %s179 = sphi 0, %s179
    %s181 = sphi 0, %s179
    %s182 = sphi 0, %s181
    %s196 = sphi 0, %s182
    %s200 = sphi 0, %s200
    %s202 = sphi 0, %s200
    %s203 = sphi 0, %s202
    %s217 = sphi 0, %s203
    %s221 = sphi 0, %s221
    %s223 = sphi 0, %s221
    %s224 = sphi 0, %s223
    %s238 = sphi 0, %s224
    %s242 = sphi 0, %s242
    %s244 = sphi 0, %s242
    %s245 = sphi 0, %s244
    %s259 = sphi 0, %s245
    %s263 = sphi 0, %s263
    %s265 = sphi 0, %s263
    %s266 = sphi 0, %s265
    %s280 = sphi 0, %s266
    %s284 = sphi 0, %s284
    %s286 = sphi 0, %s284
    %s287 = sphi 0, %s286
    %s301 = sphi 0, %s287
    %s307 = sphi 0, %s309
    %s310 = sphi 0, %s307
    %s311 = sphi 0, %s310
    %s327 = sphi 0, %s311
  $region4: #{bert_forward.3} parent=0 // loop_header_branch
    %22 = sbr.rel (%p20) target = $region8
  $region5: #{bert_forward.3} parent=0 // loop_body
    %s24 = ssub.s32 %s19, 1
    %s25 = ssub.s32 %s19, 2
    %s26 = sadd.s32 %s19, 1
    %s27 = ssub.s32 %s19, %s26
    %p28 = scmp.eq.s32.totalorder %s27, 0
    %s30 = sadd.s32 %s29, 1
    %s31 = scalar_select %p28, %s29, %s30
    %p34 = pneg %p28
    %p35 = scmp.eq.s32.totalorder %s19, 1
    %p36 = por %p34, %p35
    %p37 = scmp.ne.s32.totalorder %s29, %s32
    %p38 = scmp.eq.s32.totalorder %s19, 0
    %p39 = por %p37, %p38
    %p40 = scmp.ne.s32.totalorder %s29, %s32
    %p41 = scmp.eq.s32.totalorder %s24, 1
    %p42 = por %p40, %p41
    %p43 = scmp.ne.s32.totalorder %s32, %s33
    %p44 = scmp.eq.s32.totalorder %s24, 0
    %p45 = por %p43, %p44
    %p46 = scmp.ne.s32.totalorder %s32, %s33
    %p47 = scmp.eq.s32.totalorder %s25, 1
    %p48 = por %p46, %p47
    %p50 = scmp.ne.s32.totalorder %s33, %s49
    %p51 = scmp.eq.s32.totalorder %s25, 0
    %p52 = por %p50, %p51
    %s54 = sadd.s32 %s53, 1
    %p57 = scmp.eq.s32.totalorder %s19, 1
    %p58 = scmp.ne.s32.totalorder %s53, %s55
    %p59 = scmp.eq.s32.totalorder %s19, 0
    %p60 = por %p58, %p59
    %p61 = scmp.ne.s32.totalorder %s53, %s55
    %p62 = scmp.eq.s32.totalorder %s24, 1
    %p63 = por %p61, %p62
    %p64 = scmp.ne.s32.totalorder %s55, %s56
    %p65 = scmp.eq.s32.totalorder %s24, 0
    %p66 = por %p64, %p65
    %p67 = scmp.ne.s32.totalorder %s55, %s56
    %p68 = scmp.eq.s32.totalorder %s25, 1
    %p69 = por %p67, %p68
    %p71 = scmp.ne.s32.totalorder %s56, %s70
    %p72 = scmp.eq.s32.totalorder %s25, 0
    %p73 = por %p71, %p72
    %s75 = sadd.s32 %s74, 1
    %p78 = scmp.eq.s32.totalorder %s19, 1
    %p79 = scmp.ne.s32.totalorder %s74, %s76
    %p80 = scmp.eq.s32.totalorder %s19, 0
    %p81 = por %p79, %p80
    %p82 = scmp.ne.s32.totalorder %s74, %s76
    %p83 = scmp.eq.s32.totalorder %s24, 1
    %p84 = por %p82, %p83
    %p85 = scmp.ne.s32.totalorder %s76, %s77
    %p86 = scmp.eq.s32.totalorder %s24, 0
    %p87 = por %p85, %p86
    %p88 = scmp.ne.s32.totalorder %s76, %s77
    %p89 = scmp.eq.s32.totalorder %s25, 1
    %p90 = por %p88, %p89
    %p92 = scmp.ne.s32.totalorder %s77, %s91
    %p93 = scmp.eq.s32.totalorder %s25, 0
    %p94 = por %p92, %p93
    %s96 = sadd.s32 %s95, 1
    %p99 = scmp.eq.s32.totalorder %s19, 1
    %p100 = scmp.ne.s32.totalorder %s95, %s97
    %p101 = scmp.eq.s32.totalorder %s19, 0
    %p102 = por %p100, %p101
    %p103 = scmp.ne.s32.totalorder %s95, %s97
    %p104 = scmp.eq.s32.totalorder %s24, 1
    %p105 = por %p103, %p104
    %p106 = scmp.ne.s32.totalorder %s97, %s98
    %p107 = scmp.eq.s32.totalorder %s24, 0
    %p108 = por %p106, %p107
    %p109 = scmp.ne.s32.totalorder %s97, %s98
    %p110 = scmp.eq.s32.totalorder %s25, 1
    %p111 = por %p109, %p110
    %p113 = scmp.ne.s32.totalorder %s98, %s112
    %p114 = scmp.eq.s32.totalorder %s25, 0
    %p115 = por %p113, %p114
    %s117 = sadd.s32 %s116, 1
    %p120 = scmp.eq.s32.totalorder %s19, 1
    %p121 = scmp.ne.s32.totalorder %s116, %s118
    %p122 = scmp.eq.s32.totalorder %s19, 0
    %p123 = por %p121, %p122
    %p124 = scmp.ne.s32.totalorder %s116, %s118
    %p125 = scmp.eq.s32.totalorder %s24, 1
    %p126 = por %p124, %p125
    %p127 = scmp.ne.s32.totalorder %s118, %s119
    %p128 = scmp.eq.s32.totalorder %s24, 0
    %p129 = por %p127, %p128
    %p130 = scmp.ne.s32.totalorder %s118, %s119
    %p131 = scmp.eq.s32.totalorder %s25, 1
    %p132 = por %p130, %p131
    %p134 = scmp.ne.s32.totalorder %s119, %s133
    %p135 = scmp.eq.s32.totalorder %s25, 0
    %p136 = por %p134, %p135
    %s138 = sadd.s32 %s137, 1
    %p141 = scmp.eq.s32.totalorder %s19, 1
    %p142 = scmp.ne.s32.totalorder %s137, %s139
    %p143 = scmp.eq.s32.totalorder %s19, 0
    %p144 = por %p142, %p143
    %p145 = scmp.ne.s32.totalorder %s137, %s139
    %p146 = scmp.eq.s32.totalorder %s24, 1
    %p147 = por %p145, %p146
    %p148 = scmp.ne.s32.totalorder %s139, %s140
    %p149 = scmp.eq.s32.totalorder %s24, 0
    %p150 = por %p148, %p149
    %p151 = scmp.ne.s32.totalorder %s139, %s140
    %p152 = scmp.eq.s32.totalorder %s25, 1
    %p153 = por %p151, %p152
    %p155 = scmp.ne.s32.totalorder %s140, %s154
    %p156 = scmp.eq.s32.totalorder %s25, 0
    %p157 = por %p155, %p156
    %s159 = sadd.s32 %s158, 1
    %p162 = scmp.eq.s32.totalorder %s19, 1
    %p163 = scmp.ne.s32.totalorder %s158, %s160
    %p164 = scmp.eq.s32.totalorder %s19, 0
    %p165 = por %p163, %p164
    %p166 = scmp.ne.s32.totalorder %s158, %s160
    %p167 = scmp.eq.s32.totalorder %s24, 1
    %p168 = por %p166, %p167
    %p169 = scmp.ne.s32.totalorder %s160, %s161
    %p170 = scmp.eq.s32.totalorder %s24, 0
    %p171 = por %p169, %p170
    %p172 = scmp.ne.s32.totalorder %s160, %s161
    %p173 = scmp.eq.s32.totalorder %s25, 1
    %p174 = por %p172, %p173
    %p176 = scmp.ne.s32.totalorder %s161, %s175
    %p177 = scmp.eq.s32.totalorder %s25, 0
    %p178 = por %p176, %p177
    %s180 = sadd.s32 %s179, 1
    %p183 = scmp.eq.s32.totalorder %s19, 1
    %p184 = scmp.ne.s32.totalorder %s179, %s181
    %p185 = scmp.eq.s32.totalorder %s19, 0
    %p186 = por %p184, %p185
    %p187 = scmp.ne.s32.totalorder %s179, %s181
    %p188 = scmp.eq.s32.totalorder %s24, 1
    %p189 = por %p187, %p188
    %p190 = scmp.ne.s32.totalorder %s181, %s182
    %p191 = scmp.eq.s32.totalorder %s24, 0
    %p192 = por %p190, %p191
    %p193 = scmp.ne.s32.totalorder %s181, %s182
    %p194 = scmp.eq.s32.totalorder %s25, 1
    %p195 = por %p193, %p194
    %p197 = scmp.ne.s32.totalorder %s182, %s196
    %p198 = scmp.eq.s32.totalorder %s25, 0
    %p199 = por %p197, %p198
    %s201 = sadd.s32 %s200, 1
    %p204 = scmp.eq.s32.totalorder %s19, 1
    %p205 = scmp.ne.s32.totalorder %s200, %s202
    %p206 = scmp.eq.s32.totalorder %s19, 0
    %p207 = por %p205, %p206
    %p208 = scmp.ne.s32.totalorder %s200, %s202
    %p209 = scmp.eq.s32.totalorder %s24, 1
    %p210 = por %p208, %p209
    %p211 = scmp.ne.s32.totalorder %s202, %s203
    %p212 = scmp.eq.s32.totalorder %s24, 0
    %p213 = por %p211, %p212
    %p214 = scmp.ne.s32.totalorder %s202, %s203
    %p215 = scmp.eq.s32.totalorder %s25, 1
    %p216 = por %p214, %p215
    %p218 = scmp.ne.s32.totalorder %s203, %s217
    %p219 = scmp.eq.s32.totalorder %s25, 0
    %p220 = por %p218, %p219
    %s222 = sadd.s32 %s221, 1
    %p225 = scmp.eq.s32.totalorder %s19, 1
    %p226 = scmp.ne.s32.totalorder %s221, %s223
    %p227 = scmp.eq.s32.totalorder %s19, 0
    %p228 = por %p226, %p227
    %p229 = scmp.ne.s32.totalorder %s221, %s223
    %p230 = scmp.eq.s32.totalorder %s24, 1
    %p231 = por %p229, %p230
    %p232 = scmp.ne.s32.totalorder %s223, %s224
    %p233 = scmp.eq.s32.totalorder %s24, 0
    %p234 = por %p232, %p233
    %p235 = scmp.ne.s32.totalorder %s223, %s224
    %p236 = scmp.eq.s32.totalorder %s25, 1
    %p237 = por %p235, %p236
    %p239 = scmp.ne.s32.totalorder %s224, %s238
    %p240 = scmp.eq.s32.totalorder %s25, 0
    %p241 = por %p239, %p240
    %s243 = sadd.s32 %s242, 1
    %p246 = scmp.eq.s32.totalorder %s19, 1
    %p247 = scmp.ne.s32.totalorder %s242, %s244
    %p248 = scmp.eq.s32.totalorder %s19, 0
    %p249 = por %p247, %p248
    %p250 = scmp.ne.s32.totalorder %s242, %s244
    %p251 = scmp.eq.s32.totalorder %s24, 1
    %p252 = por %p250, %p251
    %p253 = scmp.ne.s32.totalorder %s244, %s245
    %p254 = scmp.eq.s32.totalorder %s24, 0
    %p255 = por %p253, %p254
    %p256 = scmp.ne.s32.totalorder %s244, %s245
    %p257 = scmp.eq.s32.totalorder %s25, 1
    %p258 = por %p256, %p257
    %p260 = scmp.ne.s32.totalorder %s245, %s259
    %p261 = scmp.eq.s32.totalorder %s25, 0
    %p262 = por %p260, %p261
    %s264 = sadd.s32 %s263, 1
    %p267 = scmp.eq.s32.totalorder %s19, 1
    %p268 = scmp.ne.s32.totalorder %s263, %s265
    %p269 = scmp.eq.s32.totalorder %s19, 0
    %p270 = por %p268, %p269
    %p271 = scmp.ne.s32.totalorder %s263, %s265
    %p272 = scmp.eq.s32.totalorder %s24, 1
    %p273 = por %p271, %p272
    %p274 = scmp.ne.s32.totalorder %s265, %s266
    %p275 = scmp.eq.s32.totalorder %s24, 0
    %p276 = por %p274, %p275
    %p277 = scmp.ne.s32.totalorder %s265, %s266
    %p278 = scmp.eq.s32.totalorder %s25, 1
    %p279 = por %p277, %p278
    %p281 = scmp.ne.s32.totalorder %s266, %s280
    %p282 = scmp.eq.s32.totalorder %s25, 0
    %p283 = por %p281, %p282
    %s285 = sadd.s32 %s284, 1
    %p288 = scmp.eq.s32.totalorder %s19, 1
    %p289 = scmp.ne.s32.totalorder %s284, %s286
    %p290 = scmp.eq.s32.totalorder %s19, 0
    %p291 = por %p289, %p290
    %p292 = scmp.ne.s32.totalorder %s284, %s286
    %p293 = scmp.eq.s32.totalorder %s24, 1
    %p294 = por %p292, %p293
    %p295 = scmp.ne.s32.totalorder %s286, %s287
    %p296 = scmp.eq.s32.totalorder %s24, 0
    %p297 = por %p295, %p296
    %p298 = scmp.ne.s32.totalorder %s286, %s287
    %p299 = scmp.eq.s32.totalorder %s25, 1
    %p300 = por %p298, %p299
    %p302 = scmp.ne.s32.totalorder %s287, %s301
    %p303 = scmp.eq.s32.totalorder %s25, 0
    %p304 = por %p302, %p303
    %s305 = ssub.s32 %s19, %s26
    %p306 = scmp.eq.s32.totalorder %s305, 0
    %s308 = sadd.s32 %s307, 1
    %s309 = scalar_select %p306, %s307, %s308
    %p312 = pneg %p306
    %p313 = scmp.eq.s32.totalorder %s19, 1
    %p314 = por %p312, %p313
    %p315 = scmp.ne.s32.totalorder %s307, %s310
    %p316 = scmp.eq.s32.totalorder %s19, 0
    %p317 = por %p315, %p316
    %p318 = scmp.ne.s32.totalorder %s307, %s310
    %p319 = scmp.eq.s32.totalorder %s24, 1
    %p320 = por %p318, %p319
    %p321 = scmp.ne.s32.totalorder %s310, %s311
    %p322 = scmp.eq.s32.totalorder %s24, 0
    %p323 = por %p321, %p322
    %p324 = scmp.ne.s32.totalorder %s310, %s311
    %p325 = scmp.eq.s32.totalorder %s25, 1
    %p326 = por %p324, %p325
    %p328 = scmp.ne.s32.totalorder %s311, %s327
    %p329 = scmp.eq.s32.totalorder %s25, 0
    %p330 = por %p328, %p329
    %p331 = scmp.le.s32.totalorder 1, %s19
    %p332 = scmp.lt.s32.totalorder %s19, 3
    %p333 = pnand %p331, %p332
    %p334 = pneg %p333
    // Predicated region
    $region9: #{bert_forward.3} parent=5 // pred_check
      _
    $region10: #{bert_forward.3} parent=5 // pred_check_branch
      %336 = sbr.rel (%p333) target = $region12
    $region11: #{bert_forward.3} parent=5 // pred_region
      %s337 = ssub.s32 %s19, 1
      // Predicated region
      $region13: #{bert_forward.3} parent=11 // pred_check
        %p338 = pneg %p66
      $region14: #{bert_forward.3} parent=11 // pred_check_branch
        %340 = sbr.rel (%p338) target = $region16
      $region15: #{bert_forward.3} parent=11 // pred_region
        _
      $region16: #{bert_forward.3} parent=11 // pred_fallthru
        _
      // Predicated region
      $region17: #{bert_forward.3} parent=11 // pred_check
        %p341 = pneg %p87
      $region18: #{bert_forward.3} parent=11 // pred_check_branch
        %343 = sbr.rel (%p341) target = $region20
      $region19: #{bert_forward.3} parent=11 // pred_region
        _
      $region20: #{bert_forward.3} parent=11 // pred_fallthru
        _
      // Predicated region
      $region21: #{bert_forward.3} parent=11 // pred_check
        %p344 = pneg %p108
      $region22: #{bert_forward.3} parent=11 // pred_check_branch
        %346 = sbr.rel (%p344) target = $region24
      $region23: #{bert_forward.3} parent=11 // pred_region
        _
      $region24: #{bert_forward.3} parent=11 // pred_fallthru
        _
      // Predicated region
      $region25: #{bert_forward.3} parent=11 // pred_check
        %p347 = pneg %p129
      $region26: #{bert_forward.3} parent=11 // pred_check_branch
        %349 = sbr.rel (%p347) target = $region28
      $region27: #{bert_forward.3} parent=11 // pred_region
        _
      $region28: #{bert_forward.3} parent=11 // pred_fallthru
        _
      // Predicated region
      $region29: #{bert_forward.3} parent=11 // pred_check
        %p350 = pneg %p150
      $region30: #{bert_forward.3} parent=11 // pred_check_branch
        %352 = sbr.rel (%p350) target = $region32
      $region31: #{bert_forward.3} parent=11 // pred_region
        _
      $region32: #{bert_forward.3} parent=11 // pred_fallthru
        _
      // Predicated region
      $region33: #{bert_forward.3} parent=11 // pred_check
        %p353 = pneg %p171
      $region34: #{bert_forward.3} parent=11 // pred_check_branch
        %355 = sbr.rel (%p353) target = $region36
      $region35: #{bert_forward.3} parent=11 // pred_region
        _
      $region36: #{bert_forward.3} parent=11 // pred_fallthru
        _
      // Predicated region
      $region37: #{bert_forward.3} parent=11 // pred_check
        %p356 = pneg %p192
      $region38: #{bert_forward.3} parent=11 // pred_check_branch
        %358 = sbr.rel (%p356) target = $region40
      $region39: #{bert_forward.3} parent=11 // pred_region
        _
      $region40: #{bert_forward.3} parent=11 // pred_fallthru
        _
      // Predicated region
      $region41: #{bert_forward.3} parent=11 // pred_check
        %p359 = pneg %p213
      $region42: #{bert_forward.3} parent=11 // pred_check_branch
        %361 = sbr.rel (%p359) target = $region44
      $region43: #{bert_forward.3} parent=11 // pred_region
        _
      $region44: #{bert_forward.3} parent=11 // pred_fallthru
        _
      // Predicated region
      $region45: #{bert_forward.3} parent=11 // pred_check
        %p362 = pneg %p234
      $region46: #{bert_forward.3} parent=11 // pred_check_branch
        %364 = sbr.rel (%p362) target = $region48
      $region47: #{bert_forward.3} parent=11 // pred_region
        _
      $region48: #{bert_forward.3} parent=11 // pred_fallthru
        _
      // Predicated region
      $region49: #{bert_forward.3} parent=11 // pred_check
        %p365 = pneg %p255
      $region50: #{bert_forward.3} parent=11 // pred_check_branch
        %367 = sbr.rel (%p365) target = $region52
      $region51: #{bert_forward.3} parent=11 // pred_region
        _
      $region52: #{bert_forward.3} parent=11 // pred_fallthru
        _
      // Predicated region
      $region53: #{bert_forward.3} parent=11 // pred_check
        %p368 = pneg %p276
      $region54: #{bert_forward.3} parent=11 // pred_check_branch
        %370 = sbr.rel (%p368) target = $region56
      $region55: #{bert_forward.3} parent=11 // pred_region
        _
      $region56: #{bert_forward.3} parent=11 // pred_fallthru
        _
      // Predicated region
      $region57: #{bert_forward.3} parent=11 // pred_check
        %p371 = pneg %p297
      $region58: #{bert_forward.3} parent=11 // pred_check_branch
        %373 = sbr.rel (%p371) target = $region60
      $region59: #{bert_forward.3} parent=11 // pred_region
        _
      $region60: #{bert_forward.3} parent=11 // pred_fallthru
        _
    $region12: #{bert_forward.3} parent=5 // pred_fallthru
      _
    %p374 = scmp.lt.s32.totalorder %s19, 2
    // Predicated region
    $region61: #{bert_forward.3} parent=5 // pred_check
      %p375 = pneg %p374
    $region62: #{bert_forward.3} parent=5 // pred_check_branch
      %377 = sbr.rel (%p375) target = $region64
    $region63: #{bert_forward.3} parent=5 // pred_region
      // Predicated region
      $region65: #{bert_forward.3} parent=63 // pred_check
        %p378 = pneg %p39
      $region66: #{bert_forward.3} parent=63 // pred_check_branch
        %380 = sbr.rel (%p378) target = $region68
      $region67: #{bert_forward.3} parent=63 // pred_region
        %p381 = scmp.lt.s32.totalorder %s19, 1
        %s382 = scalar_select %p381, %s19, 1
        %s383 = smul.addr %s382, 8
        %s384 = scalar_lea.vmem %s0, %s383
      $region68: #{bert_forward.3} parent=63 // pred_fallthru
        _
    $region64: #{bert_forward.3} parent=5 // pred_fallthru
      _
    %p385 = scmp.le.s32.totalorder 1, %s19
    %p386 = scmp.lt.s32.totalorder %s19, 3
    %p387 = pnand %p385, %p386
    %p388 = pneg %p387
    // Predicated region
    $region69: #{bert_forward.3} parent=5 // pred_check
      _
    $region70: #{bert_forward.3} parent=5 // pred_check_branch
      %390 = sbr.rel (%p387) target = $region72
    $region71: #{bert_forward.3} parent=5 // pred_region
      %s391 = ssub.s32 %s19, 1
      %p392 = scmp.lt.s32.totalorder %s24, 1
      %s393 = scalar_select %p392, %s24, 1
      %s394 = smul.addr %s393, 8
      %s395 = scalar_lea.vmem %s0, %s394
      %p396 = pneg %p45
      %p397 = pneg %p42
      %p398 = pneg %p66
      %p399 = pneg %p63
      %p400 = pneg %p87
      %p401 = pneg %p84
      %p402 = pneg %p108
      %p403 = pneg %p105
      %p404 = pneg %p129
      %p405 = pneg %p126
      %p406 = pneg %p150
      %p407 = pneg %p147
      %p408 = pneg %p171
      %p409 = pneg %p168
      %p410 = pneg %p192
      %p411 = pneg %p189
      %p412 = pneg %p213
      %p413 = pneg %p210
      %p414 = pneg %p234
      %p415 = pneg %p231
      %p416 = pneg %p255
      %p417 = pneg %p252
      %p418 = pneg %p276
      %p419 = pneg %p273
      %p420 = pneg %p297
      %p421 = pneg %p294
      %p422 = pneg %p323
      %p423 = pneg %p320
      %p424 = scmp.lt.s32.totalorder %s24, 1
      %s425 = scalar_select %p424, %s24, 1
      %s426 = smul.addr %s425, 8
      %s427 = scalar_lea.vmem %s13, %s426
      %p428 = scmp.lt.s32.totalorder %s24, 1
      %s429 = scalar_select %p428, %s24, 1
      %s430 = smul.addr %s429, 8
      %s431 = scalar_lea.vmem %s0, %s430
      %p432 = scmp.lt.s32.totalorder %s24, 1
      %s433 = scalar_select %p432, %s24, 1
      %s434 = smul.addr %s433, 8
      %s435 = scalar_lea.vmem %s13, %s434
      %v437 = vld [vmem:[%s431] sm:$0xff]
      %v438 = vpack.c.bf16 %v437, %v437
      %v439 = vld [vmem:[%s1] sm:$0xf]
      %v440 = vld [vmem:[%s1 + $0x4] sm:$0xf]
      %v441 = vld [vmem:[%s1 + $0x8] sm:$0xf]
      %v442 = vld [vmem:[%s1 + $0xc] sm:$0xf]
      %v443 = vld [vmem:[%s1 + $0x10] sm:$0xf]
      %v444 = vld [vmem:[%s1 + $0x14] sm:$0xf]
      %v445 = vld [vmem:[%s1 + $0x18] sm:$0xf]
      %v446 = vld [vmem:[%s1 + $0x1c] sm:$0xf]
      %v447 = vld [vmem:[%s1 + $0x20] sm:$0xf]
      %v448 = vld [vmem:[%s1 + $0x24] sm:$0xf]
      %v449 = vld [vmem:[%s1 + $0x28] sm:$0xf]
      %v450 = vld [vmem:[%s1 + $0x2c] sm:$0xf]
      %v451 = vld [vmem:[%s2] sm:$0x1]
      %v453 = vperm.slane %v451, 0
      %v467 = vunpack.c.l.b16 %v439
      %v468 = vunpack.c.l.b16 %v440
      %v469 = vunpack.c.l.b16 %v441
      %v470 = vunpack.c.l.b16 %v442
      %v471 = vunpack.c.l.b16 %v443
      %v472 = vunpack.c.l.b16 %v444
      %v473 = vunpack.c.l.b16 %v445
      %v474 = vunpack.c.l.b16 %v446
      %v475 = vunpack.c.l.b16 %v447
      %v476 = vunpack.c.l.b16 %v448
      %v477 = vunpack.c.l.b16 %v449
      %v478 = vunpack.c.l.b16 %v450
      %v479 = vpack.c.b16 %v468, %v467
      %v480 = vpack.c.b16 %v470, %v469
      %v481 = vpack.c.b16 %v472, %v471
      %v482 = vpack.c.b16 %v474, %v473
      %v483 = vpack.c.b16 %v476, %v475
      %v484 = vpack.c.b16 %v478, %v477
      %vm485 = vcmask 261120
      %v487 = vsel %vm485, %v438, 0
      %v490 = vsel %vm485, %v479, 0
      %v493 = vsel %vm485, %v480, 0
      %v496 = vsel %vm485, %v481, 0
      %v499 = vsel %vm485, %v482, 0
      %v502 = vsel %vm485, %v483, 0
      %v505 = vsel %vm485, %v484, 0
      %507 = vmatpush.bf16.xpose.msra.mxu0 0
      %508 = vmatpush.bf16.xpose.msra.mxu0 0
      %509 = vmatpush.bf16.xpose.msra.mxu0 %v505
      %510 = vmatpush.bf16.xpose.msra.mxu0 %v502
      %511 = vmatpush.bf16.xpose.msra.mxu0 %v499
      %512 = vmatpush.bf16.xpose.msra.mxu0 %v496
      %513 = vmatpush.bf16.xpose.msra.mxu0 %v493
      %514 = vmatpush.bf16.xpose.msra.mxu0 %v490
      %515 = vmatmul.bf16.gmra.mxu0 %v487
      %v516 = vpop.f32.mrf.mxu0
      %v517 = vadd.f32 %v453, %v516
      %v518 = vpop.f32.mrf.mxu0
      %519 = vdwg.mxu0
      %521 = vrot.lane.b32.xlu0 %v517, 120
      %v522 = vpop.permute.xlu0 %521
      %524 = vrot.lane.b32.xlu0 %v517, 112
      %v525 = vpop.permute.xlu0 %524
      %527 = vrot.lane.b32.xlu0 %v517, 104
      %v528 = vpop.permute.xlu0 %527
      %v530 = vpack.c.bf16 %v517, %v517
      %v531 = vpack.c.bf16 %v522, %v522
      %v532 = vpack.c.bf16 %v525, %v525
      %v533 = vpack.c.bf16 %v528, %v528
      %v535 = vunpack.c.l.b16 %v530
      %v536 = vpack.c.b16 %v535, %v535
      %537 = vrot.lane.b32.xlu0 %v536, 96
      %v538 = vpop.permute.xlu0 %537
      %vm539 = vcmask 64512
      %v541 = vsel %vm539, %v530, 0
      %v544 = vsel %vm539, %v538, 0
      %546 = vmatpush.bf16.xpose.msra.mxu0 0
      %547 = vmatpush.bf16.xpose.msra.mxu0 0
      %548 = vmatpush.bf16.xpose.msra.mxu0 0
      %549 = vmatpush.bf16.xpose.msra.mxu0 0
      %550 = vmatpush.bf16.xpose.msra.mxu0 0
      %551 = vmatpush.bf16.xpose.msra.mxu0 0
      %552 = vmatpush.bf16.xpose.msra.mxu0 0
      %553 = vmatpush.bf16.xpose.msra.mxu0 %v544
      %554 = vmatmul.bf16.gmra.mxu0 %v541
      %v555 = vpop.f32.mrf.mxu0
      %v556 = vadd.f32 0.0, %v555
      %v557 = vpop.f32.mrf.mxu0
      %558 = vdwg.mxu0
      %v560 = vunpack.c.l.b16 %v531
      %v561 = vpack.c.b16 %v560, %v560
      %562 = vrot.lane.b32.xlu0 %v561, 96
      %v563 = vpop.permute.xlu0 %562
      %v565 = vsel %vm539, %v531, 0
      %v568 = vsel %vm539, %v563, 0
      %570 = vmatpush.bf16.xpose.msra.mxu0 0
      %571 = vmatpush.bf16.xpose.msra.mxu0 0
      %572 = vmatpush.bf16.xpose.msra.mxu0 0
      %573 = vmatpush.bf16.xpose.msra.mxu0 0
      %574 = vmatpush.bf16.xpose.msra.mxu0 0
      %575 = vmatpush.bf16.xpose.msra.mxu0 0
      %576 = vmatpush.bf16.xpose.msra.mxu0 0
      %577 = vmatpush.bf16.xpose.msra.mxu0 %v568
      %578 = vmatmul.bf16.gmra.mxu0 %v565
      %v579 = vpop.f32.mrf.mxu0
      %v580 = vadd.f32 0.0, %v579
      %v581 = vpop.f32.mrf.mxu0
      %582 = vdwg.mxu0
      %v584 = vunpack.c.l.b16 %v532
      %v585 = vpack.c.b16 %v584, %v584
      %586 = vrot.lane.b32.xlu0 %v585, 96
      %v587 = vpop.permute.xlu0 %586
      %v589 = vsel %vm539, %v532, 0
      %v592 = vsel %vm539, %v587, 0
      %594 = vmatpush.bf16.xpose.msra.mxu0 0
      %595 = vmatpush.bf16.xpose.msra.mxu0 0
      %596 = vmatpush.bf16.xpose.msra.mxu0 0
      %597 = vmatpush.bf16.xpose.msra.mxu0 0
      %598 = vmatpush.bf16.xpose.msra.mxu0 0
      %599 = vmatpush.bf16.xpose.msra.mxu0 0
      %600 = vmatpush.bf16.xpose.msra.mxu0 0
      %601 = vmatpush.bf16.xpose.msra.mxu0 %v592
      %602 = vmatmul.bf16.gmra.mxu0 %v589
      %v603 = vpop.f32.mrf.mxu0
      %v604 = vadd.f32 0.0, %v603
      %v605 = vpop.f32.mrf.mxu0
      %606 = vdwg.mxu0
      %v608 = vunpack.c.l.b16 %v533
      %v609 = vpack.c.b16 %v608, %v608
      %610 = vrot.lane.b32.xlu0 %v609, 96
      %v611 = vpop.permute.xlu0 %610
      %v613 = vsel %vm539, %v533, 0
      %v616 = vsel %vm539, %v611, 0
      %618 = vmatpush.bf16.xpose.msra.mxu0 0
      %619 = vmatpush.bf16.xpose.msra.mxu0 0
      %620 = vmatpush.bf16.xpose.msra.mxu0 0
      %621 = vmatpush.bf16.xpose.msra.mxu0 0
      %622 = vmatpush.bf16.xpose.msra.mxu0 0
      %623 = vmatpush.bf16.xpose.msra.mxu0 0
      %624 = vmatpush.bf16.xpose.msra.mxu0 0
      %625 = vmatpush.bf16.xpose.msra.mxu0 %v616
      %626 = vmatmul.bf16.gmra.mxu0 %v613
      %v627 = vpop.f32.mrf.mxu0
      %v628 = vadd.f32 0.0, %v627
      %v629 = vpop.f32.mrf.mxu0
      %630 = vdwg.mxu0
      %v631 = vmul.f32 %v556, 0.35355338
      %v632 = vmul.f32 %v580, 0.35355338
      %v633 = vmul.f32 %v604, 0.35355338
      %v634 = vmul.f32 %v628, 0.35355338
      %v635 = vsel %vm539, %v631, -inf
      %636 = vmax.xlane.f32.xlu0 %v635
      %v637 = vpop.xlane.xlu0 %636
      %v638 = vsel %vm539, %v632, -inf
      %639 = vmax.xlane.f32.xlu0 %v638
      %v640 = vpop.xlane.xlu0 %639
      %v641 = vsel %vm539, %v633, -inf
      %642 = vmax.xlane.f32.xlu0 %v641
      %v643 = vpop.xlane.xlu0 %642
      %v644 = vsel %vm539, %v634, -inf
      %645 = vmax.xlane.f32.xlu0 %v644
      %v646 = vpop.xlane.xlu0 %645
      %v647 = vsub.f32 %v631, %v637
      %v648 = vsub.f32 %v632, %v640
      %v649 = vsub.f32 %v633, %v643
      %v650 = vsub.f32 %v634, %v646
      %v651 = vmul.f32 %v647, 1.442695
      %v652 = vpow.pop %v651
      %v653 = vmul.f32 %v648, 1.442695
      %v654 = vpow.pop %v653
      %v655 = vmul.f32 %v649, 1.442695
      %v656 = vpow.pop %v655
      %v657 = vmul.f32 %v650, 1.442695
      %v658 = vpow.pop %v657
      %v659 = vsel %vm539, %v652, 0.0
      %660 = vadd.xlane.f32.xlu0 %v659
      %v661 = vpop.xlane.xlu0 %660
      %v662 = vsel %vm539, %v654, 0.0
      %663 = vadd.xlane.f32.xlu0 %v662
      %v664 = vpop.xlane.xlu0 %663
      %v665 = vsel %vm539, %v656, 0.0
      %666 = vadd.xlane.f32.xlu0 %v665
      %v667 = vpop.xlane.xlu0 %666
      %v668 = vsel %vm539, %v658, 0.0
      %669 = vadd.xlane.f32.xlu0 %v668
      %v670 = vpop.xlane.xlu0 %669
      %v671 = vrcp.pop %v661
      %v672 = vrcp.pop %v664
      %v673 = vrcp.pop %v667
      %v674 = vrcp.pop %v670
      %v675 = vmul.f32 %v652, %v671
      %v676 = vmul.f32 %v654, %v672
      %v677 = vmul.f32 %v656, %v673
      %v678 = vmul.f32 %v658, %v674
      %v679 = vpack.c.bf16 %v675, %v675
      %v680 = vpack.c.bf16 %v676, %v676
      %v681 = vpack.c.bf16 %v677, %v677
      %v682 = vpack.c.bf16 %v678, %v678
      %683 = vrot.lane.b32.xlu0 %v536, 64
      %v684 = vpop.permute.xlu0 %683
      %v686 = vsel %vm539, %v679, 0
      %vm688 = vcmask 1043456
      %v690 = vsel %vm688, %v684, 0
      %692 = vmatpush.bf16.msra.mxu0 0
      %693 = vmatpush.bf16.msra.mxu0 0
      %694 = vmatpush.bf16.msra.mxu0 0
      %695 = vmatpush.bf16.msra.mxu0 0
      %696 = vmatpush.bf16.msra.mxu0 0
      %697 = vmatpush.bf16.msra.mxu0 0
      %698 = vmatpush.bf16.msra.mxu0 0
      %699 = vmatpush.bf16.msra.mxu0 %v690
      %700 = vmatmul.bf16.gmra.mxu0 %v686
      %v701 = vpop.f32.mrf.mxu0
      %v702 = vadd.f32 0.0, %v701
      %v703 = vpop.f32.mrf.mxu0
      %704 = vdwg.mxu0
      %705 = vrot.lane.b32.xlu0 %v561, 64
      %v706 = vpop.permute.xlu0 %705
      %v708 = vsel %vm539, %v680, 0
      %v711 = vsel %vm688, %v706, 0
      %713 = vmatpush.bf16.msra.mxu0 0
      %714 = vmatpush.bf16.msra.mxu0 0
      %715 = vmatpush.bf16.msra.mxu0 0
      %716 = vmatpush.bf16.msra.mxu0 0
      %717 = vmatpush.bf16.msra.mxu0 0
      %718 = vmatpush.bf16.msra.mxu0 0
      %719 = vmatpush.bf16.msra.mxu0 0
      %720 = vmatpush.bf16.msra.mxu0 %v711
      %721 = vmatmul.bf16.gmra.mxu0 %v708
      %v722 = vpop.f32.mrf.mxu0
      %v723 = vadd.f32 0.0, %v722
      %v724 = vpop.f32.mrf.mxu0
      %725 = vdwg.mxu0
      %726 = vrot.lane.b32.xlu0 %v585, 64
      %v727 = vpop.permute.xlu0 %726
      %v729 = vsel %vm539, %v681, 0
      %v732 = vsel %vm688, %v727, 0
      %734 = vmatpush.bf16.msra.mxu0 0
      %735 = vmatpush.bf16.msra.mxu0 0
      %736 = vmatpush.bf16.msra.mxu0 0
      %737 = vmatpush.bf16.msra.mxu0 0
      %738 = vmatpush.bf16.msra.mxu0 0
      %739 = vmatpush.bf16.msra.mxu0 0
      %740 = vmatpush.bf16.msra.mxu0 0
      %741 = vmatpush.bf16.msra.mxu0 %v732
      %742 = vmatmul.bf16.gmra.mxu0 %v729
      %v743 = vpop.f32.mrf.mxu0
      %v744 = vadd.f32 0.0, %v743
      %v745 = vpop.f32.mrf.mxu0
      %746 = vdwg.mxu0
      %747 = vrot.lane.b32.xlu0 %v609, 64
      %v748 = vpop.permute.xlu0 %747
      %v750 = vsel %vm539, %v682, 0
      %v753 = vsel %vm688, %v748, 0
      %755 = vmatpush.bf16.msra.mxu0 0
      %756 = vmatpush.bf16.msra.mxu0 0
      %757 = vmatpush.bf16.msra.mxu0 0
      %758 = vmatpush.bf16.msra.mxu0 0
      %759 = vmatpush.bf16.msra.mxu0 0
      %760 = vmatpush.bf16.msra.mxu0 0
      %761 = vmatpush.bf16.msra.mxu0 0
      %762 = vmatpush.bf16.msra.mxu0 %v753
      %763 = vmatmul.bf16.gmra.mxu0 %v750
      %v764 = vpop.f32.mrf.mxu0
      %v765 = vadd.f32 0.0, %v764
      %v766 = vpop.f32.mrf.mxu0
      %767 = vdwg.mxu0
      %769 = vrot.lane.b32.xlu0 %v723, 8
      %v770 = vpop.permute.xlu0 %769
      %773 = vrot.lane.b32.xlu0 %v744, 16
      %v774 = vpop.permute.xlu0 %773
      %777 = vrot.lane.b32.xlu0 %v765, 24
      %v778 = vpop.permute.xlu0 %777
      %v780 = vsel %vm539, %v702, %v770
      %vm781 = vcmask 130048
      %v782 = vsel %vm781, %v780, %v774
      %vm783 = vcmask 195584
      %v784 = vsel %vm783, %v782, %v778
      %v785 = vld [vmem:[%s3] sm:$0xf]
      %v786 = vld [vmem:[%s3 + $0x4] sm:$0xf]
      %v787 = vld [vmem:[%s3 + $0x8] sm:$0xf]
      %v788 = vld [vmem:[%s3 + $0xc] sm:$0xf]
      %v789 = vpack.c.bf16 %v784, %v784
      %v790 = vld [vmem:[%s4] sm:$0x1]
      %v792 = vperm.slane %v790, 0
      %v798 = vunpack.c.l.b16 %v785
      %v799 = vunpack.c.l.b16 %v786
      %v800 = vunpack.c.l.b16 %v787
      %v801 = vunpack.c.l.b16 %v788
      %v802 = vpack.c.b16 %v799, %v798
      %v803 = vpack.c.b16 %v801, %v800
      %v805 = vsel %vm485, %v789, 0
      %v808 = vsel %vm485, %v802, 0
      %v811 = vsel %vm485, %v803, 0
      %813 = vmatpush.bf16.xpose.msra.mxu0 0
      %814 = vmatpush.bf16.xpose.msra.mxu0 0
      %815 = vmatpush.bf16.xpose.msra.mxu0 0
      %816 = vmatpush.bf16.xpose.msra.mxu0 0
      %817 = vmatpush.bf16.xpose.msra.mxu0 0
      %818 = vmatpush.bf16.xpose.msra.mxu0 0
      %819 = vmatpush.bf16.xpose.msra.mxu0 %v811
      %820 = vmatpush.bf16.xpose.msra.mxu0 %v808
      %821 = vmatmul.bf16.gmra.mxu0 %v805
      %v822 = vpop.f32.mrf.mxu0
      %v823 = vadd.f32 %v792, %v822
      %v824 = vpop.f32.mrf.mxu0
      %825 = vdwg.mxu0
      %v826 = vadd.f32 %v437, %v823
      %v827 = vld [vmem:[%s5] sm:$0xff]
      %v828 = vld [vmem:[%s6] sm:$0xff]
      %v829 = vsel %vm485, %v826, 0.0
      %830 = vadd.xlane.f32.xlu0 %v829
      %v831 = vpop.xlane.xlu0 %830
      %v832 = vrot.slane %v831, 4
      %v833 = vadd.f32 %v831, %v832
      %v834 = vrot.slane %v833, 2
      %v835 = vadd.f32 %v833, %v834
      %v836 = vrot.slane %v835, 1
      %v837 = vadd.f32 %v835, %v836
      %s838 = vtos %v837
      %v839 = vmul.f32 %v826, %v826
      %v840 = vsel %vm485, %v839, 0.0
      %841 = vadd.xlane.f32.xlu0 %v840
      %v842 = vpop.xlane.xlu0 %841
      %v843 = vrot.slane %v842, 4
      %v844 = vadd.f32 %v842, %v843
      %v845 = vrot.slane %v844, 2
      %v846 = vadd.f32 %v844, %v845
      %v847 = vrot.slane %v846, 1
      %v848 = vadd.f32 %v846, %v847
      %s849 = vtos %v848
      %v850 = vrcp.pop 256.0
      %v851 = vmul.f32 256.0, %v850
      %v852 = vsub.f32 1.0, %v851
      %v853 = vmul.f32 %v850, %v852
      %v854 = vadd.f32 %v850, %v853
      %vm855 = vweird.f32 %v850
      %v856 = vsel %vm855, %v850, %v854
      %s857 = vtos %v856
      %s858 = smul.f32 %s838, %s857
      %v859 = vrcp.pop 256.0
      %v860 = vmul.f32 256.0, %v859
      %v861 = vsub.f32 1.0, %v860
      %v862 = vmul.f32 %v859, %v861
      %v863 = vadd.f32 %v859, %v862
      %vm864 = vweird.f32 %v859
      %v865 = vsel %vm864, %v859, %v863
      %s866 = vtos %v865
      %s867 = smul.f32 %s849, %s866
      %s868 = smul.f32 %s858, %s858
      %s869 = ssub.f32 %s867, %s868
      %v870 = vstv %s858
      %v871 = vsub.f32 %v826, %v870
      %s872 = sadd.f32 %s869, 1e-05
      %v873 = vstv %s872
      %v874 = vrsqrt.pop %v873
      %v875 = vmul.f32 %v874, %v873
      %v876 = vmul.f32 %v875, %v874
      %v877 = vmul.f32 0.5, %v876
      %v878 = vsub.f32 1.5, %v877
      %v879 = vmul.f32 %v874, %v878
      %vm880 = vweird.f32 %v873
      %vm881 = vweird.f32 %v874
      %vm882 = vmor %vm880, %vm881
      %v883 = vsel %vm882, %v874, %v879
      %s884 = vtos %v883
      %v885 = vstv %s884
      %v886 = vmul.f32 %v871, %v885
      %v887 = vmul.f32 %v886, %v827
      %v888 = vadd.f32 %v887, %v828
      %v889 = vld [vmem:[%s7] sm:$0xf]
      %v890 = vld [vmem:[%s7 + $0x4] sm:$0xf]
      %v891 = vld [vmem:[%s7 + $0x8] sm:$0xf]
      %v892 = vld [vmem:[%s7 + $0xc] sm:$0xf]
      %v893 = vld [vmem:[%s7 + $0x10] sm:$0xf]
      %v894 = vld [vmem:[%s7 + $0x14] sm:$0xf]
      %v895 = vld [vmem:[%s7 + $0x18] sm:$0xf]
      %v896 = vld [vmem:[%s7 + $0x1c] sm:$0xf]
      %v897 = vld [vmem:[%s7 + $0x20] sm:$0xf]
      %v898 = vld [vmem:[%s7 + $0x24] sm:$0xf]
      %v899 = vld [vmem:[%s7 + $0x28] sm:$0xf]
      %v900 = vld [vmem:[%s7 + $0x2c] sm:$0xf]
      %v901 = vld [vmem:[%s7 + $0x30] sm:$0xf]
      %v902 = vld [vmem:[%s7 + $0x34] sm:$0xf]
      %v903 = vld [vmem:[%s7 + $0x38] sm:$0xf]
      %v904 = vld [vmem:[%s7 + $0x3c] sm:$0xf]
      %v905 = vpack.c.bf16 %v888, %v888
      %v906 = vld [vmem:[%s8] sm:$0x1]
      %v908 = vperm.slane %v906, 0
      %v926 = vunpack.c.l.b16 %v889
      %v927 = vunpack.c.l.b16 %v890
      %v928 = vunpack.c.l.b16 %v891
      %v929 = vunpack.c.l.b16 %v892
      %v930 = vunpack.c.l.b16 %v893
      %v931 = vunpack.c.l.b16 %v894
      %v932 = vunpack.c.l.b16 %v895
      %v933 = vunpack.c.l.b16 %v896
      %v934 = vunpack.c.l.b16 %v897
      %v935 = vunpack.c.l.b16 %v898
      %v936 = vunpack.c.l.b16 %v899
      %v937 = vunpack.c.l.b16 %v900
      %v938 = vunpack.c.l.b16 %v901
      %v939 = vunpack.c.l.b16 %v902
      %v940 = vunpack.c.l.b16 %v903
      %v941 = vunpack.c.l.b16 %v904
      %v942 = vpack.c.b16 %v927, %v926
      %v943 = vpack.c.b16 %v929, %v928
      %v944 = vpack.c.b16 %v931, %v930
      %v945 = vpack.c.b16 %v933, %v932
      %v946 = vpack.c.b16 %v935, %v934
      %v947 = vpack.c.b16 %v937, %v936
      %v948 = vpack.c.b16 %v939, %v938
      %v949 = vpack.c.b16 %v941, %v940
      %v951 = vsel %vm485, %v905, 0
      %v954 = vsel %vm485, %v942, 0
      %v957 = vsel %vm485, %v943, 0
      %v960 = vsel %vm485, %v944, 0
      %v963 = vsel %vm485, %v945, 0
      %v966 = vsel %vm485, %v946, 0
      %v969 = vsel %vm485, %v947, 0
      %v972 = vsel %vm485, %v948, 0
      %v975 = vsel %vm485, %v949, 0
      %977 = vmatpush.bf16.xpose.msra.mxu0 %v975
      %978 = vmatpush.bf16.xpose.msra.mxu0 %v972
      %979 = vmatpush.bf16.xpose.msra.mxu0 %v969
      %980 = vmatpush.bf16.xpose.msra.mxu0 %v966
      %981 = vmatpush.bf16.xpose.msra.mxu0 %v963
      %982 = vmatpush.bf16.xpose.msra.mxu0 %v960
      %983 = vmatpush.bf16.xpose.msra.mxu0 %v957
      %984 = vmatpush.bf16.xpose.msra.mxu0 %v954
      %985 = vmatmul.bf16.gmra.mxu0 %v951
      %v986 = vpop.f32.mrf.mxu0
      %v987 = vadd.f32 %v908, %v986
      %v988 = vpop.f32.mrf.mxu0
      %989 = vdwg.mxu0
      %v990 = vmax.f32 %v987, 0.0
      %v991 = vld [vmem:[%s9] sm:$0xf]
      %v992 = vld [vmem:[%s9 + $0x4] sm:$0xf]
      %v993 = vld [vmem:[%s9 + $0x8] sm:$0xf]
      %v994 = vld [vmem:[%s9 + $0xc] sm:$0xf]
      %v995 = vpack.c.bf16 %v990, %v990
      %v996 = vld [vmem:[%s10] sm:$0x1]
      %v998 = vperm.slane %v996, 0
      %v1004 = vunpack.c.l.b16 %v991
      %v1005 = vunpack.c.l.b16 %v992
      %v1006 = vunpack.c.l.b16 %v993
      %v1007 = vunpack.c.l.b16 %v994
      %v1008 = vpack.c.b16 %v1005, %v1004
      %v1009 = vpack.c.b16 %v1007, %v1006
      %1012 = vmatpush.bf16.xpose.msra.mxu0 0
      %1013 = vmatpush.bf16.xpose.msra.mxu0 0
      %1014 = vmatpush.bf16.xpose.msra.mxu0 0
      %1015 = vmatpush.bf16.xpose.msra.mxu0 0
      %1016 = vmatpush.bf16.xpose.msra.mxu0 0
      %1017 = vmatpush.bf16.xpose.msra.mxu0 0
      %1018 = vmatpush.bf16.xpose.msra.mxu0 %v1009
      %1019 = vmatpush.bf16.xpose.msra.mxu0 %v1008
      %1020 = vmatmul.bf16.gmra.mxu0 %v995
      %v1021 = vpop.f32.mrf.mxu0
      %v1022 = vadd.f32 %v998, %v1021
      %v1023 = vpop.f32.mrf.mxu0
      %1024 = vdwg.mxu0
      %v1025 = vadd.f32 %v888, %v1022
      %v1026 = vld [vmem:[%s11] sm:$0xff]
      %v1027 = vld [vmem:[%s12] sm:$0xff]
      %v1028 = vsel %vm485, %v1025, 0.0
      %1029 = vadd.xlane.f32.xlu0 %v1028
      %v1030 = vpop.xlane.xlu0 %1029
      %v1031 = vrot.slane %v1030, 4
      %v1032 = vadd.f32 %v1030, %v1031
      %v1033 = vrot.slane %v1032, 2
      %v1034 = vadd.f32 %v1032, %v1033
      %v1035 = vrot.slane %v1034, 1
      %v1036 = vadd.f32 %v1034, %v1035
      %s1037 = vtos %v1036
      %v1038 = vmul.f32 %v1025, %v1025
      %v1039 = vsel %vm485, %v1038, 0.0
      %1040 = vadd.xlane.f32.xlu0 %v1039
      %v1041 = vpop.xlane.xlu0 %1040
      %v1042 = vrot.slane %v1041, 4
      %v1043 = vadd.f32 %v1041, %v1042
      %v1044 = vrot.slane %v1043, 2
      %v1045 = vadd.f32 %v1043, %v1044
      %v1046 = vrot.slane %v1045, 1
      %v1047 = vadd.f32 %v1045, %v1046
      %s1048 = vtos %v1047
      %v1049 = vrcp.pop 256.0
      %v1050 = vmul.f32 256.0, %v1049
      %v1051 = vsub.f32 1.0, %v1050
      %v1052 = vmul.f32 %v1049, %v1051
      %v1053 = vadd.f32 %v1049, %v1052
      %vm1054 = vweird.f32 %v1049
      %v1055 = vsel %vm1054, %v1049, %v1053
      %s1056 = vtos %v1055
      %s1057 = smul.f32 %s1037, %s1056
      %v1058 = vrcp.pop 256.0
      %v1059 = vmul.f32 256.0, %v1058
      %v1060 = vsub.f32 1.0, %v1059
      %v1061 = vmul.f32 %v1058, %v1060
      %v1062 = vadd.f32 %v1058, %v1061
      %vm1063 = vweird.f32 %v1058
      %v1064 = vsel %vm1063, %v1058, %v1062
      %s1065 = vtos %v1064
      %s1066 = smul.f32 %s1048, %s1065
      %s1067 = smul.f32 %s1057, %s1057
      %s1068 = ssub.f32 %s1066, %s1067
      %v1069 = vstv %s1057
      %v1070 = vsub.f32 %v1025, %v1069
      %s1071 = sadd.f32 %s1068, 1e-05
      %v1072 = vstv %s1071
      %v1073 = vrsqrt.pop %v1072
      %v1074 = vmul.f32 %v1073, %v1072
      %v1075 = vmul.f32 %v1074, %v1073
      %v1076 = vmul.f32 0.5, %v1075
      %v1077 = vsub.f32 1.5, %v1076
      %v1078 = vmul.f32 %v1073, %v1077
      %vm1079 = vweird.f32 %v1072
      %vm1080 = vweird.f32 %v1073
      %vm1081 = vmor %vm1079, %vm1080
      %v1082 = vsel %vm1081, %v1073, %v1078
      %s1083 = vtos %v1082
      %v1084 = vstv %s1083
      %v1085 = vmul.f32 %v1070, %v1084
      %v1086 = vmul.f32 %v1085, %v1026
      %v1087 = vadd.f32 %v1086, %v1027
      %v1088 = vpack.c.bf16 %v1087, %v1087
      %s1089 = scalar_lea.vmem %s1, 48
      %v1090 = vld [vmem:[%s1089] sm:$0xf]
      %v1091 = vld [vmem:[%s1089 + $0x4] sm:$0xf]
      %v1092 = vld [vmem:[%s1089 + $0x8] sm:$0xf]
      %v1093 = vld [vmem:[%s1089 + $0xc] sm:$0xf]
      %v1094 = vld [vmem:[%s1089 + $0x10] sm:$0xf]
      %v1095 = vld [vmem:[%s1089 + $0x14] sm:$0xf]
      %v1096 = vld [vmem:[%s1089 + $0x18] sm:$0xf]
      %v1097 = vld [vmem:[%s1089 + $0x1c] sm:$0xf]
      %v1098 = vld [vmem:[%s1089 + $0x20] sm:$0xf]
      %v1099 = vld [vmem:[%s1089 + $0x24] sm:$0xf]
      %v1100 = vld [vmem:[%s1089 + $0x28] sm:$0xf]
      %v1101 = vld [vmem:[%s1089 + $0x2c] sm:$0xf]
      %s1102 = scalar_lea.vmem %s2, 1
      %v1103 = vld [vmem:[%s1102] sm:$0x1]
      %v1105 = vperm.slane %v1103, 0
      %v1119 = vunpack.c.l.b16 %v1090
      %v1120 = vunpack.c.l.b16 %v1091
      %v1121 = vunpack.c.l.b16 %v1092
      %v1122 = vunpack.c.l.b16 %v1093
      %v1123 = vunpack.c.l.b16 %v1094
      %v1124 = vunpack.c.l.b16 %v1095
      %v1125 = vunpack.c.l.b16 %v1096
      %v1126 = vunpack.c.l.b16 %v1097
      %v1127 = vunpack.c.l.b16 %v1098
      %v1128 = vunpack.c.l.b16 %v1099
      %v1129 = vunpack.c.l.b16 %v1100
      %v1130 = vunpack.c.l.b16 %v1101
      %v1131 = vpack.c.b16 %v1120, %v1119
      %v1132 = vpack.c.b16 %v1122, %v1121
      %v1133 = vpack.c.b16 %v1124, %v1123
      %v1134 = vpack.c.b16 %v1126, %v1125
      %v1135 = vpack.c.b16 %v1128, %v1127
      %v1136 = vpack.c.b16 %v1130, %v1129
      %v1138 = vsel %vm485, %v1088, 0
      %v1141 = vsel %vm485, %v1131, 0
      %v1144 = vsel %vm485, %v1132, 0
      %v1147 = vsel %vm485, %v1133, 0
      %v1150 = vsel %vm485, %v1134, 0
      %v1153 = vsel %vm485, %v1135, 0
      %v1156 = vsel %vm485, %v1136, 0
      %1158 = vmatpush.bf16.xpose.msra.mxu0 0
      %1159 = vmatpush.bf16.xpose.msra.mxu0 0
      %1160 = vmatpush.bf16.xpose.msra.mxu0 %v1156
      %1161 = vmatpush.bf16.xpose.msra.mxu0 %v1153
      %1162 = vmatpush.bf16.xpose.msra.mxu0 %v1150
      %1163 = vmatpush.bf16.xpose.msra.mxu0 %v1147
      %1164 = vmatpush.bf16.xpose.msra.mxu0 %v1144
      %1165 = vmatpush.bf16.xpose.msra.mxu0 %v1141
      %1166 = vmatmul.bf16.gmra.mxu0 %v1138
      %v1167 = vpop.f32.mrf.mxu0
      %v1168 = vadd.f32 %v1105, %v1167
      %v1169 = vpop.f32.mrf.mxu0
      %1170 = vdwg.mxu0
      %1172 = vrot.lane.b32.xlu0 %v1168, 120
      %v1173 = vpop.permute.xlu0 %1172
      %1175 = vrot.lane.b32.xlu0 %v1168, 112
      %v1176 = vpop.permute.xlu0 %1175
      %1178 = vrot.lane.b32.xlu0 %v1168, 104
      %v1179 = vpop.permute.xlu0 %1178
      %v1181 = vpack.c.bf16 %v1168, %v1168
      %v1182 = vpack.c.bf16 %v1173, %v1173
      %v1183 = vpack.c.bf16 %v1176, %v1176
      %v1184 = vpack.c.bf16 %v1179, %v1179
      %v1186 = vunpack.c.l.b16 %v1181
      %v1187 = vpack.c.b16 %v1186, %v1186
      %1188 = vrot.lane.b32.xlu0 %v1187, 96
      %v1189 = vpop.permute.xlu0 %1188
      %v1191 = vsel %vm539, %v1181, 0
      %v1194 = vsel %vm539, %v1189, 0
      %1196 = vmatpush.bf16.xpose.msra.mxu0 0
      %1197 = vmatpush.bf16.xpose.msra.mxu0 0
      %1198 = vmatpush.bf16.xpose.msra.mxu0 0
      %1199 = vmatpush.bf16.xpose.msra.mxu0 0
      %1200 = vmatpush.bf16.xpose.msra.mxu0 0
      %1201 = vmatpush.bf16.xpose.msra.mxu0 0
      %1202 = vmatpush.bf16.xpose.msra.mxu0 0
      %1203 = vmatpush.bf16.xpose.msra.mxu0 %v1194
      %1204 = vmatmul.bf16.gmra.mxu0 %v1191
      %v1205 = vpop.f32.mrf.mxu0
      %v1206 = vadd.f32 0.0, %v1205
      %v1207 = vpop.f32.mrf.mxu0
      %1208 = vdwg.mxu0
      %v1210 = vunpack.c.l.b16 %v1182
      %v1211 = vpack.c.b16 %v1210, %v1210
      %1212 = vrot.lane.b32.xlu0 %v1211, 96
      %v1213 = vpop.permute.xlu0 %1212
      %v1215 = vsel %vm539, %v1182, 0
      %v1218 = vsel %vm539, %v1213, 0
      %1220 = vmatpush.bf16.xpose.msra.mxu0 0
      %1221 = vmatpush.bf16.xpose.msra.mxu0 0
      %1222 = vmatpush.bf16.xpose.msra.mxu0 0
      %1223 = vmatpush.bf16.xpose.msra.mxu0 0
      %1224 = vmatpush.bf16.xpose.msra.mxu0 0
      %1225 = vmatpush.bf16.xpose.msra.mxu0 0
      %1226 = vmatpush.bf16.xpose.msra.mxu0 0
      %1227 = vmatpush.bf16.xpose.msra.mxu0 %v1218
      %1228 = vmatmul.bf16.gmra.mxu0 %v1215
      %v1229 = vpop.f32.mrf.mxu0
      %v1230 = vadd.f32 0.0, %v1229
      %v1231 = vpop.f32.mrf.mxu0
      %1232 = vdwg.mxu0
      %v1234 = vunpack.c.l.b16 %v1183
      %v1235 = vpack.c.b16 %v1234, %v1234
      %1236 = vrot.lane.b32.xlu0 %v1235, 96
      %v1237 = vpop.permute.xlu0 %1236
      %v1239 = vsel %vm539, %v1183, 0
      %v1242 = vsel %vm539, %v1237, 0
      %1244 = vmatpush.bf16.xpose.msra.mxu0 0
      %1245 = vmatpush.bf16.xpose.msra.mxu0 0
      %1246 = vmatpush.bf16.xpose.msra.mxu0 0
      %1247 = vmatpush.bf16.xpose.msra.mxu0 0
      %1248 = vmatpush.bf16.xpose.msra.mxu0 0
      %1249 = vmatpush.bf16.xpose.msra.mxu0 0
      %1250 = vmatpush.bf16.xpose.msra.mxu0 0
      %1251 = vmatpush.bf16.xpose.msra.mxu0 %v1242
      %1252 = vmatmul.bf16.gmra.mxu0 %v1239
      %v1253 = vpop.f32.mrf.mxu0
      %v1254 = vadd.f32 0.0, %v1253
      %v1255 = vpop.f32.mrf.mxu0
      %1256 = vdwg.mxu0
      %v1258 = vunpack.c.l.b16 %v1184
      %v1259 = vpack.c.b16 %v1258, %v1258
      %1260 = vrot.lane.b32.xlu0 %v1259, 96
      %v1261 = vpop.permute.xlu0 %1260
      %v1263 = vsel %vm539, %v1184, 0
      %v1266 = vsel %vm539, %v1261, 0
      %1268 = vmatpush.bf16.xpose.msra.mxu0 0
      %1269 = vmatpush.bf16.xpose.msra.mxu0 0
      %1270 = vmatpush.bf16.xpose.msra.mxu0 0
      %1271 = vmatpush.bf16.xpose.msra.mxu0 0
      %1272 = vmatpush.bf16.xpose.msra.mxu0 0
      %1273 = vmatpush.bf16.xpose.msra.mxu0 0
      %1274 = vmatpush.bf16.xpose.msra.mxu0 0
      %1275 = vmatpush.bf16.xpose.msra.mxu0 %v1266
      %1276 = vmatmul.bf16.gmra.mxu0 %v1263
      %v1277 = vpop.f32.mrf.mxu0
      %v1278 = vadd.f32 0.0, %v1277
      %v1279 = vpop.f32.mrf.mxu0
      %1280 = vdwg.mxu0
      %v1281 = vmul.f32 %v1206, 0.35355338
      %v1282 = vmul.f32 %v1230, 0.35355338
      %v1283 = vmul.f32 %v1254, 0.35355338
      %v1284 = vmul.f32 %v1278, 0.35355338
      %v1285 = vsel %vm539, %v1281, -inf
      %1286 = vmax.xlane.f32.xlu0 %v1285
      %v1287 = vpop.xlane.xlu0 %1286
      %v1288 = vsel %vm539, %v1282, -inf
      %1289 = vmax.xlane.f32.xlu0 %v1288
      %v1290 = vpop.xlane.xlu0 %1289
      %v1291 = vsel %vm539, %v1283, -inf
      %1292 = vmax.xlane.f32.xlu0 %v1291
      %v1293 = vpop.xlane.xlu0 %1292
      %v1294 = vsel %vm539, %v1284, -inf
      %1295 = vmax.xlane.f32.xlu0 %v1294
      %v1296 = vpop.xlane.xlu0 %1295
      %v1297 = vsub.f32 %v1281, %v1287
      %v1298 = vsub.f32 %v1282, %v1290
      %v1299 = vsub.f32 %v1283, %v1293
      %v1300 = vsub.f32 %v1284, %v1296
      %v1301 = vmul.f32 %v1297, 1.442695
      %v1302 = vpow.pop %v1301
      %v1303 = vmul.f32 %v1298, 1.442695
      %v1304 = vpow.pop %v1303
      %v1305 = vmul.f32 %v1299, 1.442695
      %v1306 = vpow.pop %v1305
      %v1307 = vmul.f32 %v1300, 1.442695
      %v1308 = vpow.pop %v1307
      %v1309 = vsel %vm539, %v1302, 0.0
      %1310 = vadd.xlane.f32.xlu0 %v1309
      %v1311 = vpop.xlane.xlu0 %1310
      %v1312 = vsel %vm539, %v1304, 0.0
      %1313 = vadd.xlane.f32.xlu0 %v1312
      %v1314 = vpop.xlane.xlu0 %1313
      %v1315 = vsel %vm539, %v1306, 0.0
      %1316 = vadd.xlane.f32.xlu0 %v1315
      %v1317 = vpop.xlane.xlu0 %1316
      %v1318 = vsel %vm539, %v1308, 0.0
      %1319 = vadd.xlane.f32.xlu0 %v1318
      %v1320 = vpop.xlane.xlu0 %1319
      %v1321 = vrcp.pop %v1311
      %v1322 = vrcp.pop %v1314
      %v1323 = vrcp.pop %v1317
      %v1324 = vrcp.pop %v1320
      %v1325 = vmul.f32 %v1302, %v1321
      %v1326 = vmul.f32 %v1304, %v1322
      %v1327 = vmul.f32 %v1306, %v1323
      %v1328 = vmul.f32 %v1308, %v1324
      %v1329 = vpack.c.bf16 %v1325, %v1325
      %v1330 = vpack.c.bf16 %v1326, %v1326
      %v1331 = vpack.c.bf16 %v1327, %v1327
      %v1332 = vpack.c.bf16 %v1328, %v1328
      %1333 = vrot.lane.b32.xlu0 %v1187, 64
      %v1334 = vpop.permute.xlu0 %1333
      %v1336 = vsel %vm539, %v1329, 0
      %v1339 = vsel %vm688, %v1334, 0
      %1341 = vmatpush.bf16.msra.mxu0 0
      %1342 = vmatpush.bf16.msra.mxu0 0
      %1343 = vmatpush.bf16.msra.mxu0 0
      %1344 = vmatpush.bf16.msra.mxu0 0
      %1345 = vmatpush.bf16.msra.mxu0 0
      %1346 = vmatpush.bf16.msra.mxu0 0
      %1347 = vmatpush.bf16.msra.mxu0 0
      %1348 = vmatpush.bf16.msra.mxu0 %v1339
      %1349 = vmatmul.bf16.gmra.mxu0 %v1336
      %v1350 = vpop.f32.mrf.mxu0
      %v1351 = vadd.f32 0.0, %v1350
      %v1352 = vpop.f32.mrf.mxu0
      %1353 = vdwg.mxu0
      %1354 = vrot.lane.b32.xlu0 %v1211, 64
      %v1355 = vpop.permute.xlu0 %1354
      %v1357 = vsel %vm539, %v1330, 0
      %v1360 = vsel %vm688, %v1355, 0
      %1362 = vmatpush.bf16.msra.mxu0 0
      %1363 = vmatpush.bf16.msra.mxu0 0
      %1364 = vmatpush.bf16.msra.mxu0 0
      %1365 = vmatpush.bf16.msra.mxu0 0
      %1366 = vmatpush.bf16.msra.mxu0 0
      %1367 = vmatpush.bf16.msra.mxu0 0
      %1368 = vmatpush.bf16.msra.mxu0 0
      %1369 = vmatpush.bf16.msra.mxu0 %v1360
      %1370 = vmatmul.bf16.gmra.mxu0 %v1357
      %v1371 = vpop.f32.mrf.mxu0
      %v1372 = vadd.f32 0.0, %v1371
      %v1373 = vpop.f32.mrf.mxu0
      %1374 = vdwg.mxu0
      %1375 = vrot.lane.b32.xlu0 %v1235, 64
      %v1376 = vpop.permute.xlu0 %1375
      %v1378 = vsel %vm539, %v1331, 0
      %v1381 = vsel %vm688, %v1376, 0
      %1383 = vmatpush.bf16.msra.mxu0 0
      %1384 = vmatpush.bf16.msra.mxu0 0
      %1385 = vmatpush.bf16.msra.mxu0 0
      %1386 = vmatpush.bf16.msra.mxu0 0
      %1387 = vmatpush.bf16.msra.mxu0 0
      %1388 = vmatpush.bf16.msra.mxu0 0
      %1389 = vmatpush.bf16.msra.mxu0 0
      %1390 = vmatpush.bf16.msra.mxu0 %v1381
      %1391 = vmatmul.bf16.gmra.mxu0 %v1378
      %v1392 = vpop.f32.mrf.mxu0
      %v1393 = vadd.f32 0.0, %v1392
      %v1394 = vpop.f32.mrf.mxu0
      %1395 = vdwg.mxu0
      %1396 = vrot.lane.b32.xlu0 %v1259, 64
      %v1397 = vpop.permute.xlu0 %1396
      %v1399 = vsel %vm539, %v1332, 0
      %v1402 = vsel %vm688, %v1397, 0
      %1404 = vmatpush.bf16.msra.mxu0 0
      %1405 = vmatpush.bf16.msra.mxu0 0
      %1406 = vmatpush.bf16.msra.mxu0 0
      %1407 = vmatpush.bf16.msra.mxu0 0
      %1408 = vmatpush.bf16.msra.mxu0 0
      %1409 = vmatpush.bf16.msra.mxu0 0
      %1410 = vmatpush.bf16.msra.mxu0 0
      %1411 = vmatpush.bf16.msra.mxu0 %v1402
      %1412 = vmatmul.bf16.gmra.mxu0 %v1399
      %v1413 = vpop.f32.mrf.mxu0
      %v1414 = vadd.f32 0.0, %v1413
      %v1415 = vpop.f32.mrf.mxu0
      %1416 = vdwg.mxu0
      %1418 = vrot.lane.b32.xlu0 %v1372, 8
      %v1419 = vpop.permute.xlu0 %1418
      %1422 = vrot.lane.b32.xlu0 %v1393, 16
      %v1423 = vpop.permute.xlu0 %1422
      %1426 = vrot.lane.b32.xlu0 %v1414, 24
      %v1427 = vpop.permute.xlu0 %1426
      %v1429 = vsel %vm539, %v1351, %v1419
      %v1430 = vsel %vm781, %v1429, %v1423
      %v1431 = vsel %vm783, %v1430, %v1427
      %s1432 = scalar_lea.vmem %s3, 16
      %v1433 = vld [vmem:[%s1432] sm:$0xf]
      %v1434 = vld [vmem:[%s1432 + $0x4] sm:$0xf]
      %v1435 = vld [vmem:[%s1432 + $0x8] sm:$0xf]
      %v1436 = vld [vmem:[%s1432 + $0xc] sm:$0xf]
      %v1437 = vpack.c.bf16 %v1431, %v1431
      %s1438 = scalar_lea.vmem %s4, 1
      %v1439 = vld [vmem:[%s1438] sm:$0x1]
      %v1441 = vperm.slane %v1439, 0
      %v1447 = vunpack.c.l.b16 %v1433
      %v1448 = vunpack.c.l.b16 %v1434
      %v1449 = vunpack.c.l.b16 %v1435
      %v1450 = vunpack.c.l.b16 %v1436
      %v1451 = vpack.c.b16 %v1448, %v1447
      %v1452 = vpack.c.b16 %v1450, %v1449
      %v1454 = vsel %vm485, %v1437, 0
      %v1457 = vsel %vm485, %v1451, 0
      %v1460 = vsel %vm485, %v1452, 0
      %1462 = vmatpush.bf16.xpose.msra.mxu0 0
      %1463 = vmatpush.bf16.xpose.msra.mxu0 0
      %1464 = vmatpush.bf16.xpose.msra.mxu0 0
      %1465 = vmatpush.bf16.xpose.msra.mxu0 0
      %1466 = vmatpush.bf16.xpose.msra.mxu0 0
      %1467 = vmatpush.bf16.xpose.msra.mxu0 0
      %1468 = vmatpush.bf16.xpose.msra.mxu0 %v1460
      %1469 = vmatpush.bf16.xpose.msra.mxu0 %v1457
      %1470 = vmatmul.bf16.gmra.mxu0 %v1454
      %v1471 = vpop.f32.mrf.mxu0
      %v1472 = vadd.f32 %v1441, %v1471
      %v1473 = vpop.f32.mrf.mxu0
      %1474 = vdwg.mxu0
      %v1475 = vadd.f32 %v1087, %v1472
      %s1476 = scalar_lea.vmem %s5, 8
      %v1477 = vld [vmem:[%s1476] sm:$0xff]
      %s1478 = scalar_lea.vmem %s6, 8
      %v1479 = vld [vmem:[%s1478] sm:$0xff]
      %v1480 = vsel %vm485, %v1475, 0.0
      %1481 = vadd.xlane.f32.xlu0 %v1480
      %v1482 = vpop.xlane.xlu0 %1481
      %v1483 = vrot.slane %v1482, 4
      %v1484 = vadd.f32 %v1482, %v1483
      %v1485 = vrot.slane %v1484, 2
      %v1486 = vadd.f32 %v1484, %v1485
      %v1487 = vrot.slane %v1486, 1
      %v1488 = vadd.f32 %v1486, %v1487
      %s1489 = vtos %v1488
      %v1490 = vmul.f32 %v1475, %v1475
      %v1491 = vsel %vm485, %v1490, 0.0
      %1492 = vadd.xlane.f32.xlu0 %v1491
      %v1493 = vpop.xlane.xlu0 %1492
      %v1494 = vrot.slane %v1493, 4
      %v1495 = vadd.f32 %v1493, %v1494
      %v1496 = vrot.slane %v1495, 2
      %v1497 = vadd.f32 %v1495, %v1496
      %v1498 = vrot.slane %v1497, 1
      %v1499 = vadd.f32 %v1497, %v1498
      %s1500 = vtos %v1499
      %v1501 = vrcp.pop 256.0
      %v1502 = vmul.f32 256.0, %v1501
      %v1503 = vsub.f32 1.0, %v1502
      %v1504 = vmul.f32 %v1501, %v1503
      %v1505 = vadd.f32 %v1501, %v1504
      %vm1506 = vweird.f32 %v1501
      %v1507 = vsel %vm1506, %v1501, %v1505
      %s1508 = vtos %v1507
      %s1509 = smul.f32 %s1489, %s1508
      %v1510 = vrcp.pop 256.0
      %v1511 = vmul.f32 256.0, %v1510
      %v1512 = vsub.f32 1.0, %v1511
      %v1513 = vmul.f32 %v1510, %v1512
      %v1514 = vadd.f32 %v1510, %v1513
      %vm1515 = vweird.f32 %v1510
      %v1516 = vsel %vm1515, %v1510, %v1514
      %s1517 = vtos %v1516
      %s1518 = smul.f32 %s1500, %s1517
      %s1519 = smul.f32 %s1509, %s1509
      %s1520 = ssub.f32 %s1518, %s1519
      %v1521 = vstv %s1509
      %v1522 = vsub.f32 %v1475, %v1521
      %s1523 = sadd.f32 %s1520, 1e-05
      %v1524 = vstv %s1523
      %v1525 = vrsqrt.pop %v1524
      %v1526 = vmul.f32 %v1525, %v1524
      %v1527 = vmul.f32 %v1526, %v1525
      %v1528 = vmul.f32 0.5, %v1527
      %v1529 = vsub.f32 1.5, %v1528
      %v1530 = vmul.f32 %v1525, %v1529
      %vm1531 = vweird.f32 %v1524
      %vm1532 = vweird.f32 %v1525
      %vm1533 = vmor %vm1531, %vm1532
      %v1534 = vsel %vm1533, %v1525, %v1530
      %s1535 = vtos %v1534
      %v1536 = vstv %s1535
      %v1537 = vmul.f32 %v1522, %v1536
      %v1538 = vmul.f32 %v1537, %v1477
      %v1539 = vadd.f32 %v1538, %v1479
      %s1540 = scalar_lea.vmem %s7, 64
      %v1541 = vld [vmem:[%s1540] sm:$0xf]
      %v1542 = vld [vmem:[%s1540 + $0x4] sm:$0xf]
      %v1543 = vld [vmem:[%s1540 + $0x8] sm:$0xf]
      %v1544 = vld [vmem:[%s1540 + $0xc] sm:$0xf]
      %v1545 = vld [vmem:[%s1540 + $0x10] sm:$0xf]
      %v1546 = vld [vmem:[%s1540 + $0x14] sm:$0xf]
      %v1547 = vld [vmem:[%s1540 + $0x18] sm:$0xf]
      %v1548 = vld [vmem:[%s1540 + $0x1c] sm:$0xf]
      %v1549 = vld [vmem:[%s1540 + $0x20] sm:$0xf]
      %v1550 = vld [vmem:[%s1540 + $0x24] sm:$0xf]
      %v1551 = vld [vmem:[%s1540 + $0x28] sm:$0xf]
      %v1552 = vld [vmem:[%s1540 + $0x2c] sm:$0xf]
      %v1553 = vld [vmem:[%s1540 + $0x30] sm:$0xf]
      %v1554 = vld [vmem:[%s1540 + $0x34] sm:$0xf]
      %v1555 = vld [vmem:[%s1540 + $0x38] sm:$0xf]
      %v1556 = vld [vmem:[%s1540 + $0x3c] sm:$0xf]
      %v1557 = vpack.c.bf16 %v1539, %v1539
      %s1558 = scalar_lea.vmem %s8, 1
      %v1559 = vld [vmem:[%s1558] sm:$0x1]
      %v1561 = vperm.slane %v1559, 0
      %v1579 = vunpack.c.l.b16 %v1541
      %v1580 = vunpack.c.l.b16 %v1542
      %v1581 = vunpack.c.l.b16 %v1543
      %v1582 = vunpack.c.l.b16 %v1544
      %v1583 = vunpack.c.l.b16 %v1545
      %v1584 = vunpack.c.l.b16 %v1546
      %v1585 = vunpack.c.l.b16 %v1547
      %v1586 = vunpack.c.l.b16 %v1548
      %v1587 = vunpack.c.l.b16 %v1549
      %v1588 = vunpack.c.l.b16 %v1550
      %v1589 = vunpack.c.l.b16 %v1551
      %v1590 = vunpack.c.l.b16 %v1552
      %v1591 = vunpack.c.l.b16 %v1553
      %v1592 = vunpack.c.l.b16 %v1554
      %v1593 = vunpack.c.l.b16 %v1555
      %v1594 = vunpack.c.l.b16 %v1556
      %v1595 = vpack.c.b16 %v1580, %v1579
      %v1596 = vpack.c.b16 %v1582, %v1581
      %v1597 = vpack.c.b16 %v1584, %v1583
      %v1598 = vpack.c.b16 %v1586, %v1585
      %v1599 = vpack.c.b16 %v1588, %v1587
      %v1600 = vpack.c.b16 %v1590, %v1589
      %v1601 = vpack.c.b16 %v1592, %v1591
      %v1602 = vpack.c.b16 %v1594, %v1593
      %v1604 = vsel %vm485, %v1557, 0
      %v1607 = vsel %vm485, %v1595, 0
      %v1610 = vsel %vm485, %v1596, 0
      %v1613 = vsel %vm485, %v1597, 0
      %v1616 = vsel %vm485, %v1598, 0
      %v1619 = vsel %vm485, %v1599, 0
      %v1622 = vsel %vm485, %v1600, 0
      %v1625 = vsel %vm485, %v1601, 0
      %v1628 = vsel %vm485, %v1602, 0
      %1630 = vmatpush.bf16.xpose.msra.mxu0 %v1628
      %1631 = vmatpush.bf16.xpose.msra.mxu0 %v1625
      %1632 = vmatpush.bf16.xpose.msra.mxu0 %v1622
      %1633 = vmatpush.bf16.xpose.msra.mxu0 %v1619
      %1634 = vmatpush.bf16.xpose.msra.mxu0 %v1616
      %1635 = vmatpush.bf16.xpose.msra.mxu0 %v1613
      %1636 = vmatpush.bf16.xpose.msra.mxu0 %v1610
      %1637 = vmatpush.bf16.xpose.msra.mxu0 %v1607
      %1638 = vmatmul.bf16.gmra.mxu0 %v1604
      %v1639 = vpop.f32.mrf.mxu0
      %v1640 = vadd.f32 %v1561, %v1639
      %v1641 = vpop.f32.mrf.mxu0
      %1642 = vdwg.mxu0
      %v1643 = vmax.f32 %v1640, 0.0
      %s1644 = scalar_lea.vmem %s9, 16
      %v1645 = vld [vmem:[%s1644] sm:$0xf]
      %v1646 = vld [vmem:[%s1644 + $0x4] sm:$0xf]
      %v1647 = vld [vmem:[%s1644 + $0x8] sm:$0xf]
      %v1648 = vld [vmem:[%s1644 + $0xc] sm:$0xf]
      %v1649 = vpack.c.bf16 %v1643, %v1643
      %s1650 = scalar_lea.vmem %s10, 1
      %v1651 = vld [vmem:[%s1650] sm:$0x1]
      %v1653 = vperm.slane %v1651, 0
      %v1659 = vunpack.c.l.b16 %v1645
      %v1660 = vunpack.c.l.b16 %v1646
      %v1661 = vunpack.c.l.b16 %v1647
      %v1662 = vunpack.c.l.b16 %v1648
      %v1663 = vpack.c.b16 %v1660, %v1659
      %v1664 = vpack.c.b16 %v1662, %v1661
      %1667 = vmatpush.bf16.xpose.msra.mxu0 0
      %1668 = vmatpush.bf16.xpose.msra.mxu0 0
      %1669 = vmatpush.bf16.xpose.msra.mxu0 0
      %1670 = vmatpush.bf16.xpose.msra.mxu0 0
      %1671 = vmatpush.bf16.xpose.msra.mxu0 0
      %1672 = vmatpush.bf16.xpose.msra.mxu0 0
      %1673 = vmatpush.bf16.xpose.msra.mxu0 %v1664
      %1674 = vmatpush.bf16.xpose.msra.mxu0 %v1663
      %1675 = vmatmul.bf16.gmra.mxu0 %v1649
      %v1676 = vpop.f32.mrf.mxu0
      %v1677 = vadd.f32 %v1653, %v1676
      %v1678 = vpop.f32.mrf.mxu0
      %1679 = vdwg.mxu0
      %v1680 = vadd.f32 %v1539, %v1677
      %s1681 = scalar_lea.vmem %s11, 8
      %v1682 = vld [vmem:[%s1681] sm:$0xff]
      %s1683 = scalar_lea.vmem %s12, 8
      %v1684 = vld [vmem:[%s1683] sm:$0xff]
      %v1685 = vsel %vm485, %v1680, 0.0
      %1686 = vadd.xlane.f32.xlu0 %v1685
      %v1687 = vpop.xlane.xlu0 %1686
      %v1688 = vrot.slane %v1687, 4
      %v1689 = vadd.f32 %v1687, %v1688
      %v1690 = vrot.slane %v1689, 2
      %v1691 = vadd.f32 %v1689, %v1690
      %v1692 = vrot.slane %v1691, 1
      %v1693 = vadd.f32 %v1691, %v1692
      %s1694 = vtos %v1693
      %v1695 = vmul.f32 %v1680, %v1680
      %v1696 = vsel %vm485, %v1695, 0.0
      %1697 = vadd.xlane.f32.xlu0 %v1696
      %v1698 = vpop.xlane.xlu0 %1697
      %v1699 = vrot.slane %v1698, 4
      %v1700 = vadd.f32 %v1698, %v1699
      %v1701 = vrot.slane %v1700, 2
      %v1702 = vadd.f32 %v1700, %v1701
      %v1703 = vrot.slane %v1702, 1
      %v1704 = vadd.f32 %v1702, %v1703
      %s1705 = vtos %v1704
      %v1706 = vrcp.pop 256.0
      %v1707 = vmul.f32 256.0, %v1706
      %v1708 = vsub.f32 1.0, %v1707
      %v1709 = vmul.f32 %v1706, %v1708
      %v1710 = vadd.f32 %v1706, %v1709
      %vm1711 = vweird.f32 %v1706
      %v1712 = vsel %vm1711, %v1706, %v1710
      %s1713 = vtos %v1712
      %s1714 = smul.f32 %s1694, %s1713
      %v1715 = vrcp.pop 256.0
      %v1716 = vmul.f32 256.0, %v1715
      %v1717 = vsub.f32 1.0, %v1716
      %v1718 = vmul.f32 %v1715, %v1717
      %v1719 = vadd.f32 %v1715, %v1718
      %vm1720 = vweird.f32 %v1715
      %v1721 = vsel %vm1720, %v1715, %v1719
      %s1722 = vtos %v1721
      %s1723 = smul.f32 %s1705, %s1722
      %s1724 = smul.f32 %s1714, %s1714
      %s1725 = ssub.f32 %s1723, %s1724
      %v1726 = vstv %s1714
      %v1727 = vsub.f32 %v1680, %v1726
      %s1728 = sadd.f32 %s1725, 1e-05
      %v1729 = vstv %s1728
      %v1730 = vrsqrt.pop %v1729
      %v1731 = vmul.f32 %v1730, %v1729
      %v1732 = vmul.f32 %v1731, %v1730
      %v1733 = vmul.f32 0.5, %v1732
      %v1734 = vsub.f32 1.5, %v1733
      %v1735 = vmul.f32 %v1730, %v1734
      %vm1736 = vweird.f32 %v1729
      %vm1737 = vweird.f32 %v1730
      %vm1738 = vmor %vm1736, %vm1737
      %v1739 = vsel %vm1738, %v1730, %v1735
      %s1740 = vtos %v1739
      %v1741 = vstv %s1740
      %v1742 = vmul.f32 %v1727, %v1741
      %v1743 = vmul.f32 %v1742, %v1682
      %v1744 = vadd.f32 %v1743, %v1684
      %1745 = vst.msk [vmem:[%s435] sm:$0xff] %vm485, %v1744
      %p1746 = scmp.lt.s32.totalorder %s24, 1
      %s1747 = scalar_select %p1746, %s24, 1
      %s1748 = smul.addr %s1747, 8
      %s1749 = scalar_lea.vmem %s13, %s1748
      // Predicated region
      $region73: #{bert_forward.3} parent=71 // pred_check
        %p1750 = pneg %p320
      $region74: #{bert_forward.3} parent=71 // pred_check_branch
        %1752 = sbr.rel (%p1750) target = $region76
      $region75: #{bert_forward.3} parent=71 // pred_region
        _
      $region76: #{bert_forward.3} parent=71 // pred_fallthru
        _
    $region72: #{bert_forward.3} parent=5 // pred_fallthru
      _
    %p1753 = scmp.le.s32.totalorder 2, %s19
    // Predicated region
    $region77: #{bert_forward.3} parent=5 // pred_check
      %p1754 = pneg %p1753
    $region78: #{bert_forward.3} parent=5 // pred_check_branch
      %1756 = sbr.rel (%p1754) target = $region80
    $region79: #{bert_forward.3} parent=5 // pred_region
      %s1757 = ssub.s32 %s19, 2
      // Predicated region
      $region81: #{bert_forward.3} parent=79 // pred_check
        %p1758 = pneg %p326
      $region82: #{bert_forward.3} parent=79 // pred_check_branch
        %1760 = sbr.rel (%p1758) target = $region84
      $region83: #{bert_forward.3} parent=79 // pred_region
        %p1761 = scmp.lt.s32.totalorder %s25, 1
        %s1762 = scalar_select %p1761, %s25, 1
        %s1763 = smul.addr %s1762, 8
        %s1764 = scalar_lea.vmem %s13, %s1763
      $region84: #{bert_forward.3} parent=79 // pred_fallthru
        _
    $region80: #{bert_forward.3} parent=5 // pred_fallthru
      _
  $region6: #{bert_forward.3} parent=0 // loop_footer
    %s23 = sadd.s32 1, %s19
  $region7: #{bert_forward.3} parent=0 // loop_footer_branch
    %18 = sbr.rel target = $region3
  $region8: #{bert_forward.3} parent=0 // loop_exit
    _

</llo_original>
